<compile_context>
chip_gen: v7x
topology: tpu7x:2x2x1
jax: 0.10.0
libtpu: 0.0.40
codegen_flags: <defaults>
</compile_context>

<pallas_src>
import functools
import math

import numpy as np
import jax
import jax.numpy as jnp
from jax import lax
from jax.experimental import pallas as pl
from jax.experimental.pallas import tpu as pltpu


def _pair(v):
    return (v, v) if isinstance(v, int) else tuple(v)


def _cdiv(a, b):
    return (a + b - 1) // b


def _rup(x, m):
    return ((x + m - 1) // m) * m


def _ds(start, size, stride):
    # plain dynamic slice for stride 1, strided ref read otherwise
    return pl.ds(start, size) if stride == 1 else pl.ds(start, size, stride)


def _conv_kernel(x_ref, w_ref, b_ref, o_ref, *, KH, KW, TOH, OW,
                 sh, sw, dh, dw, Cin, Cout_st, fuse_taps):
    # x_ref : (1, 1, WIN_H, Wp, Cin)   halo'd row window (compute dtype, VMEM)
    # w_ref : (K, Cout_mx)             flattened weight, K = KH*KW*Cin
    # b_ref : (1, Cout_mx)             bias (f32)
    # o_ref : (1, Cout_st, TOH*OW)     channel-major, lane-dense output tile (f32)
    M = TOH * OW

    def tap(kh, kw):
        rows = _ds(kh * dh, TOH, sh)
        cols = _ds(kw * dw, OW, sw)
        # (TOH, OW, Cin) -> collapse the two major dims (layout-friendly reshape)
        return x_ref[0, 0, rows, cols, :].reshape(M, Cin)

    if fuse_taps:
        # Small Cin: gather all taps into one im2col operand and do a single
        # MXU contraction [M, KH*KW*Cin] x [KH*KW*Cin, Cout_mx].
        pieces = [tap(kh, kw) for kh in range(KH) for kw in range(KW)]
        lhs = pieces[0] if len(pieces) == 1 else jnp.concatenate(pieces, axis=1)
        acc = jnp.dot(lhs, w_ref[...], preferred_element_type=jnp.float32)
    else:
        # Large Cin: each tap already fills the MXU K dim; accumulate per-tap
        # dots in f32 instead of materializing a huge concat.
        acc = None
        for kh in range(KH):
            for kw in range(KW):
                k0 = (kh * KW + kw) * Cin
                part = jnp.dot(tap(kh, kw), w_ref[k0:k0 + Cin, :],
                               preferred_element_type=jnp.float32)
                acc = part if acc is None else acc + part

    acc = acc + b_ref[...]                      # (M, Cout_mx) + (1, Cout_mx)
    # Channel-major store: only Cout_st (multiple of 8) channel rows hit HBM;
    # the spatial dim (M, multiple of 128/256) is the lane dim -> unmasked vst.
    o_ref[0] = acc.T[:Cout_st].astype(o_ref.dtype)


def map_conv2d(x_nchw, weight, bias, *, stride=1, padding=0, dilation=1,
               groups=1, compute_dtype=jnp.bfloat16):
    """Pallas conv2d matching torch.nn.functional.conv2d (groups=1).

    x_nchw : (N, Cin, H, W) float32
    weight : (Cout, Cin, KH, KW) float32
    bias   : (Cout,) float32 or None
    returns: (N, Cout, OH, OW) float32
    """
    # TODO(synk): grouped conv (groups > 1) would need per-group Cin/Cout blocking.
    assert groups == 1, "only groups=1 supported"

    sh, sw = _pair(stride)
    ph, pw = _pair(padding)
    dh, dw = _pair(dilation)

    N, Cin, H, W = x_nchw.shape
    Cout, Cin_w, KH, KW = weight.shape
    assert Cin_w == Cin

    OH = (H + 2 * ph - dh * (KH - 1) - 1) // sh + 1
    OW = (W + 2 * pw - dw * (KW - 1) - 1) // sw + 1
    K = KH * KW * Cin
    Wp = W + 2 * pw
    csize = jnp.dtype(compute_dtype).itemsize

    Cout_mx = 128 * _cdiv(Cout, 128)     # MXU lane dim for the matmul
    Cout_st = 8 * _cdiv(Cout, 8)         # channel rows actually written to HBM
    fuse_taps = Cin < 128

    # ---- per-generation VMEM budget -----------------------------------------
    try:
        vmem_cap = int(pltpu.get_tpu_info().vmem_capacity_bytes)
        vmem_limit = int(min(0.8 * vmem_cap, 110 * 1024 * 1024))
        budget = int(0.55 * vmem_limit)
    except Exception:
        vmem_limit = 32 * 1024 * 1024     # safe on v5e/v6e/v7x
        budget = 16 * 1024 * 1024

    def vmem_need(toh):
        win_h = (toh - 1) * sh + (KH - 1) * dh + 1
        m = toh * OW
        # (Wp, Cin) are the last two dims of the input block -> (8,128) tiling pad
        in_blk = win_h * _rup(Wp, 8) * _rup(Cin, 128) * csize
        out_blk = _rup(Cout_st, 8) * m * 4
        w_blk = _rup(K, 8) * Cout_mx * csize
        lhs_tmp = m * (_rup(K, 128) if fuse_taps else _rup(Cin, 128)) * csize
        acc_tmp = 2 * m * Cout_mx * 4            # acc + transposed acc
        return 2 * in_blk + 2 * out_blk + w_blk + lhs_tmp + acc_tmp

    # ---- output row tile: M = TOH*OW a multiple of 256 (MXU), VMEM-bounded ---
    L = 256
    step = L // math.gcd(OW, L)
    if step * OW > 4096:                  # extremely wide rows -> relax to 128
        L = 128
        step = L // math.gcd(OW, L)
    max_toh = _rup(OH, step)
    m_cap = 4096
    toh = step
    for cand in range(max_toh, step - 1, -step):
        if cand * OW <= m_cap and vmem_need(cand) <= budget:
            toh = cand
            break
    n_tiles = _cdiv(OH, toh)
    OH_pad = n_tiles * toh
    M = toh * OW
    WIN_H = (toh - 1) * sh + (KH - 1) * dh + 1

    # ---- plain-JAX glue: NHWC, spatial pad, halo'd row windows ---------------
    x = jnp.transpose(x_nchw, (0, 2, 3, 1))                       # NHWC
    extra_h = max(0, (OH_pad - 1) * sh + (KH - 1) * dh + 1 - (H + 2 * ph))
    x = jnp.pad(x, ((0, 0), (ph, ph + extra_h), (pw, pw), (0, 0)))
    x = x.astype(compute_dtype)
    # per-row-tile windows: (N, n_tiles, WIN_H, Wp, Cin); duplicates only the
    # halo rows in HBM so each grid step DMAs a bounded, prefetchable window.
    starts = np.arange(n_tiles) * (toh * sh)
    row_idx = starts[:, None] + np.arange(WIN_H)[None, :]
    xw = x[:, row_idx]

    # weight (Cout, Cin, KH, KW) -> (KH, KW, Cin, Cout) -> (K, Cout_mx)
    w = jnp.transpose(weight, (2, 3, 1, 0)).reshape(K, Cout)
    w = jnp.pad(w, ((0, 0), (0, Cout_mx - Cout))).astype(compute_dtype)

    b = jnp.zeros((Cout,), jnp.float32) if bias is None else bias.astype(jnp.float32)
    b = jnp.pad(b, (0, Cout_mx - Cout)).reshape(1, Cout_mx)

    kernel = functools.partial(
        _conv_kernel, KH=KH, KW=KW, TOH=toh, OW=OW,
        sh=sh, sw=sw, dh=dh, dw=dw, Cin=Cin,
        Cout_st=Cout_st, fuse_taps=fuse_taps)

    cost = pl.CostEstimate(
        flops=int(2 * N * n_tiles * M * K * Cout_mx),
        transcendentals=0,
        bytes_accessed=int(xw.size * csize + K * Cout_mx * csize
                           + N * Cout_st * OH_pad * OW * 4))

    def build(single_buffer_consts):
        const_kw = dict(pipeline_mode=pl.Buffered(1)) if single_buffer_consts else {}
        grid_spec = pltpu.PrefetchScalarGridSpec(
            num_scalar_prefetch=0,
            grid=(N, n_tiles),
            in_specs=[
                # Halo'd row window for this (batch, row-tile) grid point.
                pl.BlockSpec((1, 1, WIN_H, Wp, Cin),
                             lambda n, r: (n, r, 0, 0, 0)),
                # Grid-invariant weight / bias (single-buffered when supported).
                pl.BlockSpec((K, Cout_mx), lambda n, r: (0, 0), **const_kw),
                pl.BlockSpec((1, Cout_mx), lambda n, r: (0, 0), **const_kw),
            ],
            out_specs=pl.BlockSpec((1, Cout_st, M), lambda n, r: (n, 0, r)),
        )
        return pl.pallas_call(
            kernel,
            out_shape=jax.ShapeDtypeStruct((N, Cout_st, OH_pad * OW), jnp.float32),
            grid_spec=grid_spec,
            compiler_params=pltpu.CompilerParams(
                dimension_semantics=("parallel", "parallel"),
                vmem_limit_bytes=vmem_limit),
            cost_estimate=cost,
        )

    try:
        out = jax.block_until_ready(build(True)(xw, w, b))
    except Exception:
        # Installed JAX may not accept pipeline_mode=pl.Buffered(1); retry
        # with default double-buffered weight/bias blocks.
        out = jax.block_until_ready(build(False)(xw, w, b))

    # Output is already channel-major: just slice padding and reshape (no transpose).
    out = out[:, :Cout, :OH * OW].reshape(N, Cout, OH, OW)
    return out


def _reference_conv(x, w, b, stride, padding, dilation):
    out = lax.conv_general_dilated(
        x, w, window_strides=stride,
        padding=[(padding[0], padding[0]), (padding[1], padding[1])],
        rhs_dilation=dilation,
        dimension_numbers=("NCHW", "OIHW", "NCHW"),
        precision=lax.Precision.HIGHEST)
    if b is not None:
        out = out + b[None, :, None, None]
    return out


if __name__ == "__main__":
    # MAPConv2d(in_channels=4, out_channels=8, kernel_size=3, stride=1, padding=1)
    N, Cin, H, W = 2, 4, 16, 16
    Cout, Kk = 8, 3
    stride, padding, dilation = (1, 1), (1, 1), (1, 1)

    key = jax.random.PRNGKey(0)
    kx, kw_, kb = jax.random.split(key, 3)

    x = jax.random.normal(kx, (N, Cin, H, W), jnp.float32)
    # kaiming_normal (fan_in mode): std = sqrt(2 / fan_in), fan_in = Cin*K*K
    fan_in = Cin * Kk * Kk
    weight = jax.random.normal(kw_, (Cout, Cin, Kk, Kk), jnp.float32) * jnp.sqrt(2.0 / fan_in)
    # bias ~ Normal(0, 0.01)
    bias = jax.random.normal(kb, (Cout,), jnp.float32) * 0.01

    out = map_conv2d(x, weight, bias, stride=stride, padding=padding,
                     dilation=dilation, groups=1)
    out = jax.block_until_ready(out)
    assert out.shape == (N, Cout, H, W)

    # Reference on bf16-rounded operands (the kernel feeds the MXU bf16 inputs
    # with f32 accumulation); products are exact in f32, so tolerance is tight.
    x_r = x.astype(jnp.bfloat16).astype(jnp.float32)
    w_r = weight.astype(jnp.bfloat16).astype(jnp.float32)
    ref = _reference_conv(x_r, w_r, bias, stride, padding, dilation)
    assert jnp.allclose(out, ref, atol=1e-3, rtol=1e-3), \
        float(jnp.max(jnp.abs(out - ref)))

    # Sanity vs the full-f32 reference at bf16-level tolerance.
    ref_f32 = _reference_conv(x, weight, bias, stride, padding, dilation)
    assert jnp.allclose(out, ref_f32, atol=5e-2, rtol=5e-2)

    print("KERNEL_OK")
</pallas_src>

<mosaic_0001>
module attributes {stable_mosaic.version = 11 : i64} {
  func.func @_conv_kernel(%arg0: i32, %arg1: i32, %arg2: memref<1x1x18x18x4xbf16, #tpu.memory_space<vmem>>, %arg3: memref<36x128xbf16, #tpu.memory_space<vmem>>, %arg4: memref<1x128xf32, #tpu.memory_space<vmem>>, %arg5: memref<1x8x256xf32, #tpu.memory_space<vmem>>) attributes {dimension_semantics = [#tpu.dimension_semantics<parallel>, #tpu.dimension_semantics<parallel>], iteration_bounds = array<i64: 2, 1>, scalar_prefetch = 0 : i64, scratch_operands = 0 : i64, tpu.core_type = #tpu.core_type<tc>, window_params = [{transform_indices = @transform_0, window_bounds = array<i64: 1, 1, 18, 18, 4>}, {pipeline_mode = #tpu.pipeline_mode<synchronous>, transform_indices = @transform_1, window_bounds = array<i64: 36, 128>}, {pipeline_mode = #tpu.pipeline_mode<synchronous>, transform_indices = @transform_2, window_bounds = array<i64: 1, 128>}, {transform_indices = @transform_3, window_bounds = array<i64: 1, 8, 256>}]} {
    %c0 = arith.constant 0 : index
    %c0_0 = arith.constant 0 : index
    %c0_1 = arith.constant 0 : index
    %c0_2 = arith.constant 0 : index
    %c0_3 = arith.constant 0 : index
    %0 = vector.load %arg2[%c0, %c0_0, %c0_1, %c0_2, %c0_3] : memref<1x1x18x18x4xbf16, #tpu.memory_space<vmem>>, vector<1x1x16x16x4xbf16>
    %1 = vector.shape_cast %0 : vector<1x1x16x16x4xbf16> to vector<16x16x4xbf16>
    %2 = vector.shape_cast %1 : vector<16x16x4xbf16> to vector<256x4xbf16>
    %c0_4 = arith.constant 0 : index
    %c0_5 = arith.constant 0 : index
    %c0_6 = arith.constant 0 : index
    %c1 = arith.constant 1 : index
    %c0_7 = arith.constant 0 : index
    %3 = vector.load %arg2[%c0_4, %c0_5, %c0_6, %c1, %c0_7] : memref<1x1x18x18x4xbf16, #tpu.memory_space<vmem>>, vector<1x1x16x16x4xbf16>
    %4 = vector.shape_cast %3 : vector<1x1x16x16x4xbf16> to vector<16x16x4xbf16>
    %5 = vector.shape_cast %4 : vector<16x16x4xbf16> to vector<256x4xbf16>
    %c0_8 = arith.constant 0 : index
    %c0_9 = arith.constant 0 : index
    %c0_10 = arith.constant 0 : index
    %c2 = arith.constant 2 : index
    %c0_11 = arith.constant 0 : index
    %6 = vector.load %arg2[%c0_8, %c0_9, %c0_10, %c2, %c0_11] : memref<1x1x18x18x4xbf16, #tpu.memory_space<vmem>>, vector<1x1x16x16x4xbf16>
    %7 = vector.shape_cast %6 : vector<1x1x16x16x4xbf16> to vector<16x16x4xbf16>
    %8 = vector.shape_cast %7 : vector<16x16x4xbf16> to vector<256x4xbf16>
    %c0_12 = arith.constant 0 : index
    %c0_13 = arith.constant 0 : index
    %c1_14 = arith.constant 1 : index
    %c0_15 = arith.constant 0 : index
    %c0_16 = arith.constant 0 : index
    %9 = vector.load %arg2[%c0_12, %c0_13, %c1_14, %c0_15, %c0_16] : memref<1x1x18x18x4xbf16, #tpu.memory_space<vmem>>, vector<1x1x16x16x4xbf16>
    %10 = vector.shape_cast %9 : vector<1x1x16x16x4xbf16> to vector<16x16x4xbf16>
    %11 = vector.shape_cast %10 : vector<16x16x4xbf16> to vector<256x4xbf16>
    %c0_17 = arith.constant 0 : index
    %c0_18 = arith.constant 0 : index
    %c1_19 = arith.constant 1 : index
    %c1_20 = arith.constant 1 : index
    %c0_21 = arith.constant 0 : index
    %12 = vector.load %arg2[%c0_17, %c0_18, %c1_19, %c1_20, %c0_21] : memref<1x1x18x18x4xbf16, #tpu.memory_space<vmem>>, vector<1x1x16x16x4xbf16>
    %13 = vector.shape_cast %12 : vector<1x1x16x16x4xbf16> to vector<16x16x4xbf16>
    %14 = vector.shape_cast %13 : vector<16x16x4xbf16> to vector<256x4xbf16>
    %c0_22 = arith.constant 0 : index
    %c0_23 = arith.constant 0 : index
    %c1_24 = arith.constant 1 : index
    %c2_25 = arith.constant 2 : index
    %c0_26 = arith.constant 0 : index
    %15 = vector.load %arg2[%c0_22, %c0_23, %c1_24, %c2_25, %c0_26] : memref<1x1x18x18x4xbf16, #tpu.memory_space<vmem>>, vector<1x1x16x16x4xbf16>
    %16 = vector.shape_cast %15 : vector<1x1x16x16x4xbf16> to vector<16x16x4xbf16>
    %17 = vector.shape_cast %16 : vector<16x16x4xbf16> to vector<256x4xbf16>
    %c0_27 = arith.constant 0 : index
    %c0_28 = arith.constant 0 : index
    %c2_29 = arith.constant 2 : index
    %c0_30 = arith.constant 0 : index
    %c0_31 = arith.constant 0 : index
    %18 = vector.load %arg2[%c0_27, %c0_28, %c2_29, %c0_30, %c0_31] : memref<1x1x18x18x4xbf16, #tpu.memory_space<vmem>>, vector<1x1x16x16x4xbf16>
    %19 = vector.shape_cast %18 : vector<1x1x16x16x4xbf16> to vector<16x16x4xbf16>
    %20 = vector.shape_cast %19 : vector<16x16x4xbf16> to vector<256x4xbf16>
    %c0_32 = arith.constant 0 : index
    %c0_33 = arith.constant 0 : index
    %c2_34 = arith.constant 2 : index
    %c1_35 = arith.constant 1 : index
    %c0_36 = arith.constant 0 : index
    %21 = vector.load %arg2[%c0_32, %c0_33, %c2_34, %c1_35, %c0_36] : memref<1x1x18x18x4xbf16, #tpu.memory_space<vmem>>, vector<1x1x16x16x4xbf16>
    %22 = vector.shape_cast %21 : vector<1x1x16x16x4xbf16> to vector<16x16x4xbf16>
    %23 = vector.shape_cast %22 : vector<16x16x4xbf16> to vector<256x4xbf16>
    %c0_37 = arith.constant 0 : index
    %c0_38 = arith.constant 0 : index
    %c2_39 = arith.constant 2 : index
    %c2_40 = arith.constant 2 : index
    %c0_41 = arith.constant 0 : index
    %24 = vector.load %arg2[%c0_37, %c0_38, %c2_39, %c2_40, %c0_41] : memref<1x1x18x18x4xbf16, #tpu.memory_space<vmem>>, vector<1x1x16x16x4xbf16>
    %25 = vector.shape_cast %24 : vector<1x1x16x16x4xbf16> to vector<16x16x4xbf16>
    %26 = vector.shape_cast %25 : vector<16x16x4xbf16> to vector<256x4xbf16>
    %27 = tpu.concatenate %2, %5, %8, %11, %14, %17, %20, %23, %26 in 1 : vector<256x4xbf16>, vector<256x4xbf16>, vector<256x4xbf16>, vector<256x4xbf16>, vector<256x4xbf16>, vector<256x4xbf16>, vector<256x4xbf16>, vector<256x4xbf16>, vector<256x4xbf16> -> vector<256x36xbf16>
    %c0_42 = arith.constant 0 : index
    %c0_43 = arith.constant 0 : index
    %28 = vector.load %arg3[%c0_42, %c0_43] : memref<36x128xbf16, #tpu.memory_space<vmem>>, vector<36x128xbf16>
    %cst = arith.constant dense<0.000000e+00> : vector<256x128xf32>
    %29 = tpu.matmul %27, %28, %cst {dimension_numbers = #tpu.dot_dimension_numbers<[1], [0], [0], [1], [0, 0, 1, 1], [], []>} : vector<256x36xbf16>, vector<36x128xbf16>, vector<256x128xf32> -> vector<256x128xf32>
    %c0_44 = arith.constant 0 : index
    %c0_45 = arith.constant 0 : index
    %30 = vector.load %arg4[%c0_44, %c0_45] : memref<1x128xf32, #tpu.memory_space<vmem>>, vector<1x128xf32>
    %31 = vector.broadcast %30 : vector<1x128xf32> to vector<256x128xf32>
    %32 = arith.addf %29, %31 : vector<256x128xf32>
    %33 = tpu.transpose %32, [1, 0] : vector<256x128xf32> -> vector<128x256xf32>
    %34 = vector.extract_strided_slice %33 {offsets = [0, 0], sizes = [8, 256], strides = [1, 1]} : vector<128x256xf32> to vector<8x256xf32>
    %c0_46 = arith.constant 0 : index
    %c0_47 = arith.constant 0 : index
    %c0_48 = arith.constant 0 : index
    %35 = vector.load %arg5[%c0_46, %c0_47, %c0_48] : memref<1x8x256xf32, #tpu.memory_space<vmem>>, vector<1x8x256xf32>
    %36 = vector.shape_cast %35 : vector<1x8x256xf32> to vector<8x256xf32>
    %37 = vector.shape_cast %34 : vector<8x256xf32> to vector<1x8x256xf32>
    tpu.vector_store %arg5[%c0_46, %c0_47, %c0_48], %37 {strides = array<i32>} : memref<1x8x256xf32, #tpu.memory_space<vmem>>, vector<1x8x256xf32>,
    return
  }
  func.func @transform_0(%arg0: i32, %arg1: i32) -> (i32, i32, i32, i32, i32) {
    %c0_i32 = arith.constant 0 : i32
    %c0_i32_0 = arith.constant 0 : i32
    %c0_i32_1 = arith.constant 0 : i32
    %c0_i32_2 = arith.constant 0 : i32
    return %arg0, %arg1, %c0_i32, %c0_i32_0, %c0_i32_1 : i32, i32, i32, i32, i32
  }
  func.func @transform_1(%arg0: i32, %arg1: i32) -> (i32, i32) {
    %c0_i32 = arith.constant 0 : i32
    %c0_i32_0 = arith.constant 0 : i32
    %c0_i32_1 = arith.constant 0 : i32
    return %c0_i32, %c0_i32_0 : i32, i32
  }
  func.func @transform_2(%arg0: i32, %arg1: i32) -> (i32, i32) {
    %c0_i32 = arith.constant 0 : i32
    %c0_i32_0 = arith.constant 0 : i32
    %c0_i32_1 = arith.constant 0 : i32
    return %c0_i32, %c0_i32_0 : i32, i32
  }
  func.func @transform_3(%arg0: i32, %arg1: i32) -> (i32, i32, i32) {
    %c0_i32 = arith.constant 0 : i32
    %c0_i32_0 = arith.constant 0 : i32
    return %arg0, %c0_i32, %arg1 : i32, i32, i32
  }
}

module attributes {stable_mosaic.version = 11 : i64} {
  func.func @_conv_kernel(%arg0: i32, %arg1: i32, %arg2: memref<1x1x18x18x4xbf16, #tpu.memory_space<vmem>>, %arg3: memref<36x128xbf16, #tpu.memory_space<vmem>>, %arg4: memref<1x128xf32, #tpu.memory_space<vmem>>, %arg5: memref<1x8x256xf32, #tpu.memory_space<vmem>>) attributes {dimension_semantics = [#tpu.dimension_semantics<parallel>, #tpu.dimension_semantics<parallel>], iteration_bounds = array<i64: 2, 1>, scalar_prefetch = 0 : i64, scratch_operands = 0 : i64, tpu.core_type = #tpu.core_type<tc>, window_params = [{transform_indices = @transform_0, window_bounds = array<i64: 1, 1, 18, 18, 4>}, {pipeline_mode = #tpu.pipeline_mode<synchronous>, transform_indices = @transform_1, window_bounds = array<i64: 36, 128>}, {pipeline_mode = #tpu.pipeline_mode<synchronous>, transform_indices = @transform_2, window_bounds = array<i64: 1, 128>}, {transform_indices = @transform_3, window_bounds = array<i64: 1, 8, 256>}]} {
    %c0 = arith.constant 0 : index
    %c0_0 = arith.constant 0 : index
    %c0_1 = arith.constant 0 : index
    %c0_2 = arith.constant 0 : index
    %c0_3 = arith.constant 0 : index
    %0 = vector.load %arg2[%c0, %c0_0, %c0_1, %c0_2, %c0_3] : memref<1x1x18x18x4xbf16, #tpu.memory_space<vmem>>, vector<1x1x16x16x4xbf16>
    %1 = vector.shape_cast %0 : vector<1x1x16x16x4xbf16> to vector<16x16x4xbf16>
    %2 = vector.shape_cast %1 : vector<16x16x4xbf16> to vector<256x4xbf16>
    %c0_4 = arith.constant 0 : index
    %c0_5 = arith.constant 0 : index
    %c0_6 = arith.constant 0 : index
    %c1 = arith.constant 1 : index
    %c0_7 = arith.constant 0 : index
    %3 = vector.load %arg2[%c0_4, %c0_5, %c0_6, %c1, %c0_7] : memref<1x1x18x18x4xbf16, #tpu.memory_space<vmem>>, vector<1x1x16x16x4xbf16>
    %4 = vector.shape_cast %3 : vector<1x1x16x16x4xbf16> to vector<16x16x4xbf16>
    %5 = vector.shape_cast %4 : vector<16x16x4xbf16> to vector<256x4xbf16>
    %c0_8 = arith.constant 0 : index
    %c0_9 = arith.constant 0 : index
    %c0_10 = arith.constant 0 : index
    %c2 = arith.constant 2 : index
    %c0_11 = arith.constant 0 : index
    %6 = vector.load %arg2[%c0_8, %c0_9, %c0_10, %c2, %c0_11] : memref<1x1x18x18x4xbf16, #tpu.memory_space<vmem>>, vector<1x1x16x16x4xbf16>
    %7 = vector.shape_cast %6 : vector<1x1x16x16x4xbf16> to vector<16x16x4xbf16>
    %8 = vector.shape_cast %7 : vector<16x16x4xbf16> to vector<256x4xbf16>
    %c0_12 = arith.constant 0 : index
    %c0_13 = arith.constant 0 : index
    %c1_14 = arith.constant 1 : index
    %c0_15 = arith.constant 0 : index
    %c0_16 = arith.constant 0 : index
    %9 = vector.load %arg2[%c0_12, %c0_13, %c1_14, %c0_15, %c0_16] : memref<1x1x18x18x4xbf16, #tpu.memory_space<vmem>>, vector<1x1x16x16x4xbf16>
    %10 = vector.shape_cast %9 : vector<1x1x16x16x4xbf16> to vector<16x16x4xbf16>
    %11 = vector.shape_cast %10 : vector<16x16x4xbf16> to vector<256x4xbf16>
    %c0_17 = arith.constant 0 : index
    %c0_18 = arith.constant 0 : index
    %c1_19 = arith.constant 1 : index
    %c1_20 = arith.constant 1 : index
    %c0_21 = arith.constant 0 : index
    %12 = vector.load %arg2[%c0_17, %c0_18, %c1_19, %c1_20, %c0_21] : memref<1x1x18x18x4xbf16, #tpu.memory_space<vmem>>, vector<1x1x16x16x4xbf16>
    %13 = vector.shape_cast %12 : vector<1x1x16x16x4xbf16> to vector<16x16x4xbf16>
    %14 = vector.shape_cast %13 : vector<16x16x4xbf16> to vector<256x4xbf16>
    %c0_22 = arith.constant 0 : index
    %c0_23 = arith.constant 0 : index
    %c1_24 = arith.constant 1 : index
    %c2_25 = arith.constant 2 : index
    %c0_26 = arith.constant 0 : index
    %15 = vector.load %arg2[%c0_22, %c0_23, %c1_24, %c2_25, %c0_26] : memref<1x1x18x18x4xbf16, #tpu.memory_space<vmem>>, vector<1x1x16x16x4xbf16>
    %16 = vector.shape_cast %15 : vector<1x1x16x16x4xbf16> to vector<16x16x4xbf16>
    %17 = vector.shape_cast %16 : vector<16x16x4xbf16> to vector<256x4xbf16>
    %c0_27 = arith.constant 0 : index
    %c0_28 = arith.constant 0 : index
    %c2_29 = arith.constant 2 : index
    %c0_30 = arith.constant 0 : index
    %c0_31 = arith.constant 0 : index
    %18 = vector.load %arg2[%c0_27, %c0_28, %c2_29, %c0_30, %c0_31] : memref<1x1x18x18x4xbf16, #tpu.memory_space<vmem>>, vector<1x1x16x16x4xbf16>
    %19 = vector.shape_cast %18 : vector<1x1x16x16x4xbf16> to vector<16x16x4xbf16>
    %20 = vector.shape_cast %19 : vector<16x16x4xbf16> to vector<256x4xbf16>
    %c0_32 = arith.constant 0 : index
    %c0_33 = arith.constant 0 : index
    %c2_34 = arith.constant 2 : index
    %c1_35 = arith.constant 1 : index
    %c0_36 = arith.constant 0 : index
    %21 = vector.load %arg2[%c0_32, %c0_33, %c2_34, %c1_35, %c0_36] : memref<1x1x18x18x4xbf16, #tpu.memory_space<vmem>>, vector<1x1x16x16x4xbf16>
    %22 = vector.shape_cast %21 : vector<1x1x16x16x4xbf16> to vector<16x16x4xbf16>
    %23 = vector.shape_cast %22 : vector<16x16x4xbf16> to vector<256x4xbf16>
    %c0_37 = arith.constant 0 : index
    %c0_38 = arith.constant 0 : index
    %c2_39 = arith.constant 2 : index
    %c2_40 = arith.constant 2 : index
    %c0_41 = arith.constant 0 : index
    %24 = vector.load %arg2[%c0_37, %c0_38, %c2_39, %c2_40, %c0_41] : memref<1x1x18x18x4xbf16, #tpu.memory_space<vmem>>, vector<1x1x16x16x4xbf16>
    %25 = vector.shape_cast %24 : vector<1x1x16x16x4xbf16> to vector<16x16x4xbf16>
    %26 = vector.shape_cast %25 : vector<16x16x4xbf16> to vector<256x4xbf16>
    %27 = tpu.concatenate %2, %5, %8, %11, %14, %17, %20, %23, %26 in 1 : vector<256x4xbf16>, vector<256x4xbf16>, vector<256x4xbf16>, vector<256x4xbf16>, vector<256x4xbf16>, vector<256x4xbf16>, vector<256x4xbf16>, vector<256x4xbf16>, vector<256x4xbf16> -> vector<256x36xbf16>
    %c0_42 = arith.constant 0 : index
    %c0_43 = arith.constant 0 : index
    %28 = vector.load %arg3[%c0_42, %c0_43] : memref<36x128xbf16, #tpu.memory_space<vmem>>, vector<36x128xbf16>
    %cst = arith.constant dense<0.000000e+00> : vector<256x128xf32>
    %29 = tpu.matmul %27, %28, %cst {dimension_numbers = #tpu.dot_dimension_numbers<[1], [0], [0], [1], [0, 0, 1, 1], [], []>} : vector<256x36xbf16>, vector<36x128xbf16>, vector<256x128xf32> -> vector<256x128xf32>
    %c0_44 = arith.constant 0 : index
    %c0_45 = arith.constant 0 : index
    %30 = vector.load %arg4[%c0_44, %c0_45] : memref<1x128xf32, #tpu.memory_space<vmem>>, vector<1x128xf32>
    %31 = vector.broadcast %30 : vector<1x128xf32> to vector<256x128xf32>
    %32 = arith.addf %29, %31 : vector<256x128xf32>
    %33 = tpu.transpose %32, [1, 0] : vector<256x128xf32> -> vector<128x256xf32>
    %34 = vector.extract_strided_slice %33 {offsets = [0, 0], sizes = [8, 256], strides = [1, 1]} : vector<128x256xf32> to vector<8x256xf32>
    %c0_46 = arith.constant 0 : index
    %c0_47 = arith.constant 0 : index
    %c0_48 = arith.constant 0 : index
    %35 = vector.load %arg5[%c0_46, %c0_47, %c0_48] : memref<1x8x256xf32, #tpu.memory_space<vmem>>, vector<1x8x256xf32>
    %36 = vector.shape_cast %35 : vector<1x8x256xf32> to vector<8x256xf32>
    %37 = vector.shape_cast %34 : vector<8x256xf32> to vector<1x8x256xf32>
    tpu.vector_store %arg5[%c0_46, %c0_47, %c0_48], %37 {strides = array<i32>} : memref<1x8x256xf32, #tpu.memory_space<vmem>>, vector<1x8x256xf32>,
    return
  }
  func.func @transform_0(%arg0: i32, %arg1: i32) -> (i32, i32, i32, i32, i32) {
    %c0_i32 = arith.constant 0 : i32
    %c0_i32_0 = arith.constant 0 : i32
    %c0_i32_1 = arith.constant 0 : i32
    %c0_i32_2 = arith.constant 0 : i32
    return %arg0, %arg1, %c0_i32, %c0_i32_0, %c0_i32_1 : i32, i32, i32, i32, i32
  }
  func.func @transform_1(%arg0: i32, %arg1: i32) -> (i32, i32) {
    %c0_i32 = arith.constant 0 : i32
    %c0_i32_0 = arith.constant 0 : i32
    %c0_i32_1 = arith.constant 0 : i32
    return %c0_i32, %c0_i32_0 : i32, i32
  }
  func.func @transform_2(%arg0: i32, %arg1: i32) -> (i32, i32) {
    %c0_i32 = arith.constant 0 : i32
    %c0_i32_0 = arith.constant 0 : i32
    %c0_i32_1 = arith.constant 0 : i32
    return %c0_i32, %c0_i32_0 : i32, i32
  }
  func.func @transform_3(%arg0: i32, %arg1: i32) -> (i32, i32, i32) {
    %c0_i32 = arith.constant 0 : i32
    %c0_i32_0 = arith.constant 0 : i32
    return %arg0, %c0_i32, %arg1 : i32, i32, i32
  }
}

</mosaic_0001>

<llo_original>
// kernel: tpu_custom_call.1
$region0: #{tpu_custom_call.1}
  #allocation0 [shape = 'u32[]', space=smem, size = 0x4, offset = 0x4, fixed_abs, tag = 'smem constant byte address 0x4 - core index']
  #allocation1 [shape = 'u32[144,128]{1,0:T(1,128)}', space=vmem, size = 0x12000, scoped, tag = 'internal scratch']
  %s0 = inlined_call_operand.vmem [shape: bf16[2,1,18,18,4], index: 0, kind: input, shape index: {}]
  %s1 = inlined_call_operand.vmem [shape: bf16[36,128], index: 1, kind: input, shape index: {}]
  %s2 = inlined_call_operand.vmem [shape: f32[1,128], index: 2, kind: input, shape index: {}]
  %s3 = inlined_call_operand.hbm [shape: f32[2,8,256], index: 3, kind: output, shape index: {}]
  %s4 = sld [smem:[#allocation0]]
  $region45: #{tpu_custom_call.1} parent=0
    _
  %s6 = ssub.s32 1, %s4
  %s7 = scalar_select 0, %s6, %s4
  $region1: #{tpu_custom_call.1} parent=0
    #allocation2 [shape = 'u8[16384]{0}', space=vmem, size = 0x4000, scoped, tag = 'output window, operand 0']
    #allocation3 [shape = 's32[2]{0}', space=sflag, size = 0x8, scoped, tag = 'scoped memory for tpu_custom_call.1']
    %8 = vsyncpa [#allocation3], 0
    %s9 = scalar_lea.sflag [#allocation3], 1
    %10 = vsyncpa %s9, 0
    loop: start=0, step=1, limit=4
    $region2: #{tpu_custom_call.1} parent=1 // loop_pre_header
      _
    $region3: #{tpu_custom_call.1} parent=1 // loop_header
      %s12 = sphi 0, %s16
      %p13 = scmp.ge.s32.totalorder %s12, 4
      %s19 = sphi 0, %s31
      %s20 = sphi 0, %s27
      %s21 = sphi 0, %s19
      %s22 = sphi 0, %s20
      %s23 = sphi 0, %s21
      %s24 = sphi 0, %s22
      %s36 = sphi 0, %s38
      %s39 = sphi 0, %s36
      %s40 = sphi 0, %s39
      %s56 = sphi 0, %s40
      %s60 = sphi 0, %s60
      %s62 = sphi 0, %s60
      %s63 = sphi 0, %s62
      %s77 = sphi 0, %s63
      %s81 = sphi 0, %s81
      %s83 = sphi 0, %s81
      %s84 = sphi 0, %s83
      %s98 = sphi 0, %s84
      %s106 = sphi 0, %s108
      %s109 = sphi 0, %s106
      %s110 = sphi 0, %s109
      %s126 = sphi 0, %s110
    $region4: #{tpu_custom_call.1} parent=1 // loop_header_branch
      %15 = sbr.rel (%p13) target = $region8
    $region5: #{tpu_custom_call.1} parent=1 // loop_body
      %s17 = ssub.s32 %s12, 1
      %s18 = ssub.s32 %s12, 2
      %s25 = sadd.s32 1, %s20
      %p26 = scmp.ge.s32.totalorder %s25, 1
      %s27 = scalar_select %p26, 0, %s25
      %s28 = sadd.s32 1, %s19
      %s29 = scalar_select %p26, %s28, %s19
      %p30 = scmp.ge.s32.totalorder %s29, 2
      %s31 = scalar_select %p30, 0, %s29
      %s32 = ssub.s32 %s19, %s31
      %s33 = ssub.s32 %s20, %s27
      %s34 = sor.u32 %s32, %s33
      %p35 = scmp.eq.s32.totalorder %s34, 0
      %s37 = sadd.s32 %s36, 1
      %s38 = scalar_select %p35, %s36, %s37
      %p41 = pneg %p35
      %p42 = scmp.eq.s32.totalorder %s12, 1
      %p43 = por %p41, %p42
      %p44 = scmp.ne.s32.totalorder %s36, %s39
      %p45 = scmp.eq.s32.totalorder %s12, 0
      %p46 = por %p44, %p45
      %p47 = scmp.ne.s32.totalorder %s36, %s39
      %p48 = scmp.eq.s32.totalorder %s17, 1
      %p49 = por %p47, %p48
      %p50 = scmp.ne.s32.totalorder %s39, %s40
      %p51 = scmp.eq.s32.totalorder %s17, 0
      %p52 = por %p50, %p51
      %p53 = scmp.ne.s32.totalorder %s39, %s40
      %p54 = scmp.eq.s32.totalorder %s18, 1
      %p55 = por %p53, %p54
      %p57 = scmp.ne.s32.totalorder %s40, %s56
      %p58 = scmp.eq.s32.totalorder %s18, 0
      %p59 = por %p57, %p58
      %s61 = sadd.s32 %s60, 1
      %p64 = scmp.eq.s32.totalorder %s12, 1
      %p65 = scmp.ne.s32.totalorder %s60, %s62
      %p66 = scmp.eq.s32.totalorder %s12, 0
      %p67 = por %p65, %p66
      %p68 = scmp.ne.s32.totalorder %s60, %s62
      %p69 = scmp.eq.s32.totalorder %s17, 1
      %p70 = por %p68, %p69
      %p71 = scmp.ne.s32.totalorder %s62, %s63
      %p72 = scmp.eq.s32.totalorder %s17, 0
      %p73 = por %p71, %p72
      %p74 = scmp.ne.s32.totalorder %s62, %s63
      %p75 = scmp.eq.s32.totalorder %s18, 1
      %p76 = por %p74, %p75
      %p78 = scmp.ne.s32.totalorder %s63, %s77
      %p79 = scmp.eq.s32.totalorder %s18, 0
      %p80 = por %p78, %p79
      %s82 = sadd.s32 %s81, 1
      %p85 = scmp.eq.s32.totalorder %s12, 1
      %p86 = scmp.ne.s32.totalorder %s81, %s83
      %p87 = scmp.eq.s32.totalorder %s12, 0
      %p88 = por %p86, %p87
      %p89 = scmp.ne.s32.totalorder %s81, %s83
      %p90 = scmp.eq.s32.totalorder %s17, 1
      %p91 = por %p89, %p90
      %p92 = scmp.ne.s32.totalorder %s83, %s84
      %p93 = scmp.eq.s32.totalorder %s17, 0
      %p94 = por %p92, %p93
      %p95 = scmp.ne.s32.totalorder %s83, %s84
      %p96 = scmp.eq.s32.totalorder %s18, 1
      %p97 = por %p95, %p96
      %p99 = scmp.ne.s32.totalorder %s84, %s98
      %p100 = scmp.eq.s32.totalorder %s18, 0
      %p101 = por %p99, %p100
      %s102 = ssub.s32 %s19, %s31
      %s103 = ssub.s32 %s20, %s27
      %s104 = sor.u32 %s102, %s103
      %p105 = scmp.eq.s32.totalorder %s104, 0
      %s107 = sadd.s32 %s106, 1
      %s108 = scalar_select %p105, %s106, %s107
      %p111 = pneg %p105
      %p112 = scmp.eq.s32.totalorder %s12, 1
      %p113 = por %p111, %p112
      %p114 = scmp.ne.s32.totalorder %s106, %s109
      %p115 = scmp.eq.s32.totalorder %s12, 0
      %p116 = por %p114, %p115
      %p117 = scmp.ne.s32.totalorder %s106, %s109
      %p118 = scmp.eq.s32.totalorder %s17, 1
      %p119 = por %p117, %p118
      %p120 = scmp.ne.s32.totalorder %s109, %s110
      %p121 = scmp.eq.s32.totalorder %s17, 0
      %p122 = por %p120, %p121
      %p123 = scmp.ne.s32.totalorder %s109, %s110
      %p124 = scmp.eq.s32.totalorder %s18, 1
      %p125 = por %p123, %p124
      %p127 = scmp.ne.s32.totalorder %s110, %s126
      %p128 = scmp.eq.s32.totalorder %s18, 0
      %p129 = por %p127, %p128
      %p130 = scmp.le.s32.totalorder 1, %s12
      %p131 = scmp.lt.s32.totalorder %s12, 3
      %p132 = pnand %p130, %p131
      %p133 = pneg %p132
      // Predicated region
      $region9: #{tpu_custom_call.1} parent=5 // pred_check
        _
      $region10: #{tpu_custom_call.1} parent=5 // pred_check_branch
        %135 = sbr.rel (%p132) target = $region12
      $region11: #{tpu_custom_call.1} parent=5 // pred_region
        %s136 = ssub.s32 %s12, 1
        // Predicated region
        $region13: #{tpu_custom_call.1} parent=11 // pred_check
          %p137 = pneg %p73
        $region14: #{tpu_custom_call.1} parent=11 // pred_check_branch
          %139 = sbr.rel (%p137) target = $region16
        $region15: #{tpu_custom_call.1} parent=11 // pred_region
          _
        $region16: #{tpu_custom_call.1} parent=11 // pred_fallthru
          _
        // Predicated region
        $region17: #{tpu_custom_call.1} parent=11 // pred_check
          %p140 = pneg %p94
        $region18: #{tpu_custom_call.1} parent=11 // pred_check_branch
          %142 = sbr.rel (%p140) target = $region20
        $region19: #{tpu_custom_call.1} parent=11 // pred_region
          _
        $region20: #{tpu_custom_call.1} parent=11 // pred_fallthru
          _
      $region12: #{tpu_custom_call.1} parent=5 // pred_fallthru
        _
      %p143 = scmp.lt.s32.totalorder %s12, 2
      // Predicated region
      $region21: #{tpu_custom_call.1} parent=5 // pred_check
        %p144 = pneg %p143
      $region22: #{tpu_custom_call.1} parent=5 // pred_check_branch
        %146 = sbr.rel (%p144) target = $region24
      $region23: #{tpu_custom_call.1} parent=5 // pred_region
        // Predicated region
        $region25: #{tpu_custom_call.1} parent=23 // pred_check
          %p147 = pneg %p46
        $region26: #{tpu_custom_call.1} parent=23 // pred_check_branch
          %149 = sbr.rel (%p147) target = $region28
        $region27: #{tpu_custom_call.1} parent=23 // pred_region
          %p150 = scmp.lt.s32.totalorder %s19, 1
          %s151 = scalar_select %p150, %s19, 1
          %p152 = scmp.lt.s32.totalorder %s20, 0
          %s153 = scalar_select %p152, %s20, 0
          %s154 = smul.addr %s153, 54
          %s155 = smul.addr %s151, 54
          %s156 = sadd.s32 %s154, %s155
          %s157 = smul.addr %s156, 4
          %s158 = scalar_lea.vmem %s0, %s157
        $region28: #{tpu_custom_call.1} parent=23 // pred_fallthru
          _
      $region24: #{tpu_custom_call.1} parent=5 // pred_fallthru
        _
      %p159 = scmp.le.s32.totalorder 1, %s12
      %p160 = scmp.lt.s32.totalorder %s12, 3
      %p161 = pnand %p159, %p160
      %p162 = pneg %p161
      // Predicated region
      $region29: #{tpu_custom_call.1} parent=5 // pred_check
        _
      $region30: #{tpu_custom_call.1} parent=5 // pred_check_branch
        %164 = sbr.rel (%p161) target = $region32
      $region31: #{tpu_custom_call.1} parent=5 // pred_region
        %s165 = ssub.s32 %s12, 1
        %p166 = scmp.lt.s32.totalorder %s21, 1
        %s167 = scalar_select %p166, %s21, 1
        %p168 = scmp.lt.s32.totalorder %s22, 0
        %s169 = scalar_select %p168, %s22, 0
        %s170 = smul.addr %s169, 54
        %s171 = smul.addr %s167, 54
        %s172 = sadd.s32 %s170, %s171
        %s173 = smul.addr %s172, 4
        %s174 = scalar_lea.vmem %s0, %s173
        %p175 = pneg %p52
        %p176 = pneg %p49
        %p177 = pneg %p73
        %p178 = pneg %p70
        %p179 = pneg %p94
        %p180 = pneg %p91
        %p181 = pneg %p122
        %p182 = pneg %p119
        %s183 = sand.u32 %s109, 1
        %s184 = scalar_lea.sflag [#allocation3], %s183
        %s185 = sand.u32 %s109, 1
        %s186 = smul.addr %s185, 16
        %s187 = scalar_lea.vmem [#allocation2], %s186
        %p188 = scmp.lt.s32.totalorder %s21, 1
        %s189 = scalar_select %p188, %s21, 1
        %p190 = scmp.lt.s32.totalorder %s22, 0
        %s191 = scalar_select %p190, %s22, 0
        %s192 = smul.addr %s191, 54
        %s193 = smul.addr %s189, 54
        %s194 = sadd.s32 %s192, %s193
        %s195 = smul.addr %s194, 4
        %s196 = scalar_lea.vmem %s0, %s195
        %s197 = smul.u32 2, %s22
        %v199 = vld [vmem:[%s196] sm:$0xf]
        %v200 = vld [vmem:[%s196 + $0x4] sm:$0xf]
        %v201 = vld [vmem:[%s196 + $0xc] sm:$0xf]
        %v202 = vld [vmem:[%s196 + $0x10] sm:$0xf]
        %v203 = vld [vmem:[%s196 + $0x18] sm:$0xf]
        %v204 = vld [vmem:[%s196 + $0x1c] sm:$0xf]
        %v205 = vld [vmem:[%s196 + $0x24] sm:$0xf]
        %v206 = vld [vmem:[%s196 + $0x28] sm:$0xf]
        %v207 = vld [vmem:[%s196 + $0x30] sm:$0xf]
        %v208 = vld [vmem:[%s196 + $0x34] sm:$0xf]
        %v209 = vld [vmem:[%s196 + $0x3c] sm:$0xf]
        %v210 = vld [vmem:[%s196 + $0x40] sm:$0xf]
        %v211 = vld [vmem:[%s196 + $0x48] sm:$0xf]
        %v212 = vld [vmem:[%s196 + $0x4c] sm:$0xf]
        %v213 = vld [vmem:[%s196 + $0x54] sm:$0xf]
        %v214 = vld [vmem:[%s196 + $0x58] sm:$0xf]
        %v215 = vld [vmem:[%s196 + $0x60] sm:$0xf]
        %v216 = vld [vmem:[%s196 + $0x64] sm:$0xf]
        %v217 = vld [vmem:[%s196 + $0x6c] sm:$0xf]
        %v218 = vld [vmem:[%s196 + $0x70] sm:$0xf]
        %v219 = vld [vmem:[%s196 + $0x78] sm:$0xf]
        %v220 = vld [vmem:[%s196 + $0x7c] sm:$0xf]
        %v221 = vld [vmem:[%s196 + $0x84] sm:$0xf]
        %v222 = vld [vmem:[%s196 + $0x88] sm:$0xf]
        %v223 = vld [vmem:[%s196 + $0x90] sm:$0xf]
        %v224 = vld [vmem:[%s196 + $0x94] sm:$0xf]
        %v225 = vld [vmem:[%s196 + $0x9c] sm:$0xf]
        %v226 = vld [vmem:[%s196 + $0xa0] sm:$0xf]
        %v227 = vld [vmem:[%s196 + $0xa8] sm:$0xf]
        %v228 = vld [vmem:[%s196 + $0xac] sm:$0xf]
        %v229 = vld [vmem:[%s196 + $0xb4] sm:$0xf]
        %v230 = vld [vmem:[%s196 + $0xb8] sm:$0xf]
        %v231 = vld [vmem:[%s196 + $0x8] sm:$0x1]
        %v232 = vld [vmem:[%s196 + $0x14] sm:$0x1]
        %v233 = vld [vmem:[%s196 + $0x20] sm:$0x1]
        %v234 = vld [vmem:[%s196 + $0x2c] sm:$0x1]
        %v235 = vld [vmem:[%s196 + $0x38] sm:$0x1]
        %v236 = vld [vmem:[%s196 + $0x44] sm:$0x1]
        %v237 = vld [vmem:[%s196 + $0x50] sm:$0x1]
        %v238 = vld [vmem:[%s196 + $0x5c] sm:$0x1]
        %v239 = vld [vmem:[%s196 + $0x68] sm:$0x1]
        %v240 = vld [vmem:[%s196 + $0x74] sm:$0x1]
        %v241 = vld [vmem:[%s196 + $0x80] sm:$0x1]
        %v242 = vld [vmem:[%s196 + $0x8c] sm:$0x1]
        %v243 = vld [vmem:[%s196 + $0x98] sm:$0x1]
        %v244 = vld [vmem:[%s196 + $0xa4] sm:$0x1]
        %v245 = vld [vmem:[%s196 + $0xb0] sm:$0x1]
        %v246 = vld [vmem:[%s196 + $0xbc] sm:$0x1]
        %vm247 = vsmask.f32 3328
        %vm248 = vsmask.f32 7440
        %vm249 = vmor %vm247, %vm248
        %v251 = vshrl.u32 %v199, 16
        %v253 = vrot.slane %v251, 4
        %v254 = vshll.u32 %v199, 16
        %v256 = vrot.slane %v254, 5
        %v257 = vor.u32 %v253, %v256
        %v258 = vrot.slane %v257, 4
        %v260 = vshll.u32 %v200, 16
        %v262 = vrot.slane %v260, 5
        %v263 = vsel %vm249, %v258, %v262
        %v264 = vshrl.u32 %v200, 16
        %v266 = vrot.slane %v264, 4
        %v267 = vor.u32 %v266, %v262
        %v268 = vrot.slane %v267, 4
        %v270 = vshll.u32 %v231, 16
        %v272 = vrot.slane %v270, 5
        %v273 = vsel %vm249, %v268, %v272
        %v275 = vshrl.u32 %v201, 16
        %v277 = vrot.slane %v275, 4
        %v278 = vshll.u32 %v201, 16
        %v280 = vrot.slane %v278, 5
        %v281 = vor.u32 %v277, %v280
        %v282 = vrot.slane %v281, 4
        %v284 = vshll.u32 %v202, 16
        %v286 = vrot.slane %v284, 5
        %v287 = vsel %vm249, %v282, %v286
        %v288 = vshrl.u32 %v202, 16
        %v290 = vrot.slane %v288, 4
        %v291 = vor.u32 %v290, %v286
        %v292 = vrot.slane %v291, 4
        %v294 = vshll.u32 %v232, 16
        %v296 = vrot.slane %v294, 5
        %v297 = vsel %vm249, %v292, %v296
        %v299 = vshrl.u32 %v203, 16
        %v301 = vrot.slane %v299, 4
        %v302 = vshll.u32 %v203, 16
        %v304 = vrot.slane %v302, 5
        %v305 = vor.u32 %v301, %v304
        %v306 = vrot.slane %v305, 4
        %v308 = vshll.u32 %v204, 16
        %v310 = vrot.slane %v308, 5
        %v311 = vsel %vm249, %v306, %v310
        %v312 = vshrl.u32 %v204, 16
        %v314 = vrot.slane %v312, 4
        %v315 = vor.u32 %v314, %v310
        %v316 = vrot.slane %v315, 4
        %v318 = vshll.u32 %v233, 16
        %v320 = vrot.slane %v318, 5
        %v321 = vsel %vm249, %v316, %v320
        %v323 = vshrl.u32 %v205, 16
        %v325 = vrot.slane %v323, 4
        %v326 = vshll.u32 %v205, 16
        %v328 = vrot.slane %v326, 5
        %v329 = vor.u32 %v325, %v328
        %v330 = vrot.slane %v329, 4
        %v332 = vshll.u32 %v206, 16
        %v334 = vrot.slane %v332, 5
        %v335 = vsel %vm249, %v330, %v334
        %v336 = vshrl.u32 %v206, 16
        %v338 = vrot.slane %v336, 4
        %v339 = vor.u32 %v338, %v334
        %v340 = vrot.slane %v339, 4
        %v342 = vshll.u32 %v234, 16
        %v344 = vrot.slane %v342, 5
        %v345 = vsel %vm249, %v340, %v344
        %v347 = vshrl.u32 %v207, 16
        %v349 = vrot.slane %v347, 4
        %v350 = vshll.u32 %v207, 16
        %v352 = vrot.slane %v350, 5
        %v353 = vor.u32 %v349, %v352
        %v354 = vrot.slane %v353, 4
        %v356 = vshll.u32 %v208, 16
        %v358 = vrot.slane %v356, 5
        %v359 = vsel %vm249, %v354, %v358
        %v360 = vshrl.u32 %v208, 16
        %v362 = vrot.slane %v360, 4
        %v363 = vor.u32 %v362, %v358
        %v364 = vrot.slane %v363, 4
        %v366 = vshll.u32 %v235, 16
        %v368 = vrot.slane %v366, 5
        %v369 = vsel %vm249, %v364, %v368
        %v371 = vshrl.u32 %v209, 16
        %v373 = vrot.slane %v371, 4
        %v374 = vshll.u32 %v209, 16
        %v376 = vrot.slane %v374, 5
        %v377 = vor.u32 %v373, %v376
        %v378 = vrot.slane %v377, 4
        %v380 = vshll.u32 %v210, 16
        %v382 = vrot.slane %v380, 5
        %v383 = vsel %vm249, %v378, %v382
        %v384 = vshrl.u32 %v210, 16
        %v386 = vrot.slane %v384, 4
        %v387 = vor.u32 %v386, %v382
        %v388 = vrot.slane %v387, 4
        %v390 = vshll.u32 %v236, 16
        %v392 = vrot.slane %v390, 5
        %v393 = vsel %vm249, %v388, %v392
        %v395 = vshrl.u32 %v211, 16
        %v397 = vrot.slane %v395, 4
        %v398 = vshll.u32 %v211, 16
        %v400 = vrot.slane %v398, 5
        %v401 = vor.u32 %v397, %v400
        %v402 = vrot.slane %v401, 4
        %v404 = vshll.u32 %v212, 16
        %v406 = vrot.slane %v404, 5
        %v407 = vsel %vm249, %v402, %v406
        %v408 = vshrl.u32 %v212, 16
        %v410 = vrot.slane %v408, 4
        %v411 = vor.u32 %v410, %v406
        %v412 = vrot.slane %v411, 4
        %v414 = vshll.u32 %v237, 16
        %v416 = vrot.slane %v414, 5
        %v417 = vsel %vm249, %v412, %v416
        %v419 = vshrl.u32 %v213, 16
        %v421 = vrot.slane %v419, 4
        %v422 = vshll.u32 %v213, 16
        %v424 = vrot.slane %v422, 5
        %v425 = vor.u32 %v421, %v424
        %v426 = vrot.slane %v425, 4
        %v428 = vshll.u32 %v214, 16
        %v430 = vrot.slane %v428, 5
        %v431 = vsel %vm249, %v426, %v430
        %v432 = vshrl.u32 %v214, 16
        %v434 = vrot.slane %v432, 4
        %v435 = vor.u32 %v434, %v430
        %v436 = vrot.slane %v435, 4
        %v438 = vshll.u32 %v238, 16
        %v440 = vrot.slane %v438, 5
        %v441 = vsel %vm249, %v436, %v440
        %v443 = vshrl.u32 %v215, 16
        %v445 = vrot.slane %v443, 4
        %v446 = vshll.u32 %v215, 16
        %v448 = vrot.slane %v446, 5
        %v449 = vor.u32 %v445, %v448
        %v450 = vrot.slane %v449, 4
        %v452 = vshll.u32 %v216, 16
        %v454 = vrot.slane %v452, 5
        %v455 = vsel %vm249, %v450, %v454
        %v456 = vshrl.u32 %v216, 16
        %v458 = vrot.slane %v456, 4
        %v459 = vor.u32 %v458, %v454
        %v460 = vrot.slane %v459, 4
        %v462 = vshll.u32 %v239, 16
        %v464 = vrot.slane %v462, 5
        %v465 = vsel %vm249, %v460, %v464
        %v467 = vshrl.u32 %v217, 16
        %v469 = vrot.slane %v467, 4
        %v470 = vshll.u32 %v217, 16
        %v472 = vrot.slane %v470, 5
        %v473 = vor.u32 %v469, %v472
        %v474 = vrot.slane %v473, 4
        %v476 = vshll.u32 %v218, 16
        %v478 = vrot.slane %v476, 5
        %v479 = vsel %vm249, %v474, %v478
        %v480 = vshrl.u32 %v218, 16
        %v482 = vrot.slane %v480, 4
        %v483 = vor.u32 %v482, %v478
        %v484 = vrot.slane %v483, 4
        %v486 = vshll.u32 %v240, 16
        %v488 = vrot.slane %v486, 5
        %v489 = vsel %vm249, %v484, %v488
        %v491 = vshrl.u32 %v219, 16
        %v493 = vrot.slane %v491, 4
        %v494 = vshll.u32 %v219, 16
        %v496 = vrot.slane %v494, 5
        %v497 = vor.u32 %v493, %v496
        %v498 = vrot.slane %v497, 4
        %v500 = vshll.u32 %v220, 16
        %v502 = vrot.slane %v500, 5
        %v503 = vsel %vm249, %v498, %v502
        %v504 = vshrl.u32 %v220, 16
        %v506 = vrot.slane %v504, 4
        %v507 = vor.u32 %v506, %v502
        %v508 = vrot.slane %v507, 4
        %v510 = vshll.u32 %v241, 16
        %v512 = vrot.slane %v510, 5
        %v513 = vsel %vm249, %v508, %v512
        %v515 = vshrl.u32 %v221, 16
        %v517 = vrot.slane %v515, 4
        %v518 = vshll.u32 %v221, 16
        %v520 = vrot.slane %v518, 5
        %v521 = vor.u32 %v517, %v520
        %v522 = vrot.slane %v521, 4
        %v524 = vshll.u32 %v222, 16
        %v526 = vrot.slane %v524, 5
        %v527 = vsel %vm249, %v522, %v526
        %v528 = vshrl.u32 %v222, 16
        %v530 = vrot.slane %v528, 4
        %v531 = vor.u32 %v530, %v526
        %v532 = vrot.slane %v531, 4
        %v534 = vshll.u32 %v242, 16
        %v536 = vrot.slane %v534, 5
        %v537 = vsel %vm249, %v532, %v536
        %v539 = vshrl.u32 %v223, 16
        %v541 = vrot.slane %v539, 4
        %v542 = vshll.u32 %v223, 16
        %v544 = vrot.slane %v542, 5
        %v545 = vor.u32 %v541, %v544
        %v546 = vrot.slane %v545, 4
        %v548 = vshll.u32 %v224, 16
        %v550 = vrot.slane %v548, 5
        %v551 = vsel %vm249, %v546, %v550
        %v552 = vshrl.u32 %v224, 16
        %v554 = vrot.slane %v552, 4
        %v555 = vor.u32 %v554, %v550
        %v556 = vrot.slane %v555, 4
        %v558 = vshll.u32 %v243, 16
        %v560 = vrot.slane %v558, 5
        %v561 = vsel %vm249, %v556, %v560
        %v563 = vshrl.u32 %v225, 16
        %v565 = vrot.slane %v563, 4
        %v566 = vshll.u32 %v225, 16
        %v568 = vrot.slane %v566, 5
        %v569 = vor.u32 %v565, %v568
        %v570 = vrot.slane %v569, 4
        %v572 = vshll.u32 %v226, 16
        %v574 = vrot.slane %v572, 5
        %v575 = vsel %vm249, %v570, %v574
        %v576 = vshrl.u32 %v226, 16
        %v578 = vrot.slane %v576, 4
        %v579 = vor.u32 %v578, %v574
        %v580 = vrot.slane %v579, 4
        %v582 = vshll.u32 %v244, 16
        %v584 = vrot.slane %v582, 5
        %v585 = vsel %vm249, %v580, %v584
        %v587 = vshrl.u32 %v227, 16
        %v589 = vrot.slane %v587, 4
        %v590 = vshll.u32 %v227, 16
        %v592 = vrot.slane %v590, 5
        %v593 = vor.u32 %v589, %v592
        %v594 = vrot.slane %v593, 4
        %v596 = vshll.u32 %v228, 16
        %v598 = vrot.slane %v596, 5
        %v599 = vsel %vm249, %v594, %v598
        %v600 = vshrl.u32 %v228, 16
        %v602 = vrot.slane %v600, 4
        %v603 = vor.u32 %v602, %v598
        %v604 = vrot.slane %v603, 4
        %v606 = vshll.u32 %v245, 16
        %v608 = vrot.slane %v606, 5
        %v609 = vsel %vm249, %v604, %v608
        %v611 = vshrl.u32 %v229, 16
        %v613 = vrot.slane %v611, 4
        %v614 = vshll.u32 %v229, 16
        %v616 = vrot.slane %v614, 5
        %v617 = vor.u32 %v613, %v616
        %v618 = vrot.slane %v617, 4
        %v620 = vshll.u32 %v230, 16
        %v622 = vrot.slane %v620, 5
        %v623 = vsel %vm249, %v618, %v622
        %v624 = vshrl.u32 %v230, 16
        %v626 = vrot.slane %v624, 4
        %v627 = vor.u32 %v626, %v622
        %v628 = vrot.slane %v627, 4
        %v630 = vshll.u32 %v246, 16
        %v632 = vrot.slane %v630, 5
        %v633 = vsel %vm249, %v628, %v632
        %v634 = vld [vmem:[%s196] sm:$0xe]
        %v635 = vld [vmem:[%s196 + $0xc] sm:$0xe]
        %v636 = vld [vmem:[%s196 + $0x18] sm:$0xe]
        %v637 = vld [vmem:[%s196 + $0x24] sm:$0xe]
        %v638 = vld [vmem:[%s196 + $0x30] sm:$0xe]
        %v639 = vld [vmem:[%s196 + $0x3c] sm:$0xe]
        %v640 = vld [vmem:[%s196 + $0x48] sm:$0xe]
        %v641 = vld [vmem:[%s196 + $0x54] sm:$0xe]
        %v642 = vld [vmem:[%s196 + $0x60] sm:$0xe]
        %v643 = vld [vmem:[%s196 + $0x6c] sm:$0xe]
        %v644 = vld [vmem:[%s196 + $0x78] sm:$0xe]
        %v645 = vld [vmem:[%s196 + $0x84] sm:$0xe]
        %v646 = vld [vmem:[%s196 + $0x90] sm:$0xe]
        %v647 = vld [vmem:[%s196 + $0x9c] sm:$0xe]
        %v648 = vld [vmem:[%s196 + $0xa8] sm:$0xe]
        %v649 = vld [vmem:[%s196 + $0xb4] sm:$0xe]
        %vm698 = vcmask 1042432
        %vm699 = vcmask 1046532
        %vm700 = vmor %vm698, %vm699
        %v701 = vrot.slane %v634, 5
        %v702 = vrot.slane %v701, 4
        %v703 = vrot.slane %v200, 5
        %v704 = vsel %vm700, %v702, %v703
        %v705 = vrot.slane %v703, 4
        %v706 = vrot.slane %v231, 5
        %v707 = vsel %vm700, %v705, %v706
        %v708 = vrot.slane %v635, 5
        %v709 = vrot.slane %v708, 4
        %v710 = vrot.slane %v202, 5
        %v711 = vsel %vm700, %v709, %v710
        %v712 = vrot.slane %v710, 4
        %v713 = vrot.slane %v232, 5
        %v714 = vsel %vm700, %v712, %v713
        %v715 = vrot.slane %v636, 5
        %v716 = vrot.slane %v715, 4
        %v717 = vrot.slane %v204, 5
        %v718 = vsel %vm700, %v716, %v717
        %v719 = vrot.slane %v717, 4
        %v720 = vrot.slane %v233, 5
        %v721 = vsel %vm700, %v719, %v720
        %v722 = vrot.slane %v637, 5
        %v723 = vrot.slane %v722, 4
        %v724 = vrot.slane %v206, 5
        %v725 = vsel %vm700, %v723, %v724
        %v726 = vrot.slane %v724, 4
        %v727 = vrot.slane %v234, 5
        %v728 = vsel %vm700, %v726, %v727
        %v729 = vrot.slane %v638, 5
        %v730 = vrot.slane %v729, 4
        %v731 = vrot.slane %v208, 5
        %v732 = vsel %vm700, %v730, %v731
        %v733 = vrot.slane %v731, 4
        %v734 = vrot.slane %v235, 5
        %v735 = vsel %vm700, %v733, %v734
        %v736 = vrot.slane %v639, 5
        %v737 = vrot.slane %v736, 4
        %v738 = vrot.slane %v210, 5
        %v739 = vsel %vm700, %v737, %v738
        %v740 = vrot.slane %v738, 4
        %v741 = vrot.slane %v236, 5
        %v742 = vsel %vm700, %v740, %v741
        %v743 = vrot.slane %v640, 5
        %v744 = vrot.slane %v743, 4
        %v745 = vrot.slane %v212, 5
        %v746 = vsel %vm700, %v744, %v745
        %v747 = vrot.slane %v745, 4
        %v748 = vrot.slane %v237, 5
        %v749 = vsel %vm700, %v747, %v748
        %v750 = vrot.slane %v641, 5
        %v751 = vrot.slane %v750, 4
        %v752 = vrot.slane %v214, 5
        %v753 = vsel %vm700, %v751, %v752
        %v754 = vrot.slane %v752, 4
        %v755 = vrot.slane %v238, 5
        %v756 = vsel %vm700, %v754, %v755
        %v757 = vrot.slane %v642, 5
        %v758 = vrot.slane %v757, 4
        %v759 = vrot.slane %v216, 5
        %v760 = vsel %vm700, %v758, %v759
        %v761 = vrot.slane %v759, 4
        %v762 = vrot.slane %v239, 5
        %v763 = vsel %vm700, %v761, %v762
        %v764 = vrot.slane %v643, 5
        %v765 = vrot.slane %v764, 4
        %v766 = vrot.slane %v218, 5
        %v767 = vsel %vm700, %v765, %v766
        %v768 = vrot.slane %v766, 4
        %v769 = vrot.slane %v240, 5
        %v770 = vsel %vm700, %v768, %v769
        %v771 = vrot.slane %v644, 5
        %v772 = vrot.slane %v771, 4
        %v773 = vrot.slane %v220, 5
        %v774 = vsel %vm700, %v772, %v773
        %v775 = vrot.slane %v773, 4
        %v776 = vrot.slane %v241, 5
        %v777 = vsel %vm700, %v775, %v776
        %v778 = vrot.slane %v645, 5
        %v779 = vrot.slane %v778, 4
        %v780 = vrot.slane %v222, 5
        %v781 = vsel %vm700, %v779, %v780
        %v782 = vrot.slane %v780, 4
        %v783 = vrot.slane %v242, 5
        %v784 = vsel %vm700, %v782, %v783
        %v785 = vrot.slane %v646, 5
        %v786 = vrot.slane %v785, 4
        %v787 = vrot.slane %v224, 5
        %v788 = vsel %vm700, %v786, %v787
        %v789 = vrot.slane %v787, 4
        %v790 = vrot.slane %v243, 5
        %v791 = vsel %vm700, %v789, %v790
        %v792 = vrot.slane %v647, 5
        %v793 = vrot.slane %v792, 4
        %v794 = vrot.slane %v226, 5
        %v795 = vsel %vm700, %v793, %v794
        %v796 = vrot.slane %v794, 4
        %v797 = vrot.slane %v244, 5
        %v798 = vsel %vm700, %v796, %v797
        %v799 = vrot.slane %v648, 5
        %v800 = vrot.slane %v799, 4
        %v801 = vrot.slane %v228, 5
        %v802 = vsel %vm700, %v800, %v801
        %v803 = vrot.slane %v801, 4
        %v804 = vrot.slane %v245, 5
        %v805 = vsel %vm700, %v803, %v804
        %v806 = vrot.slane %v649, 5
        %v807 = vrot.slane %v806, 4
        %v808 = vrot.slane %v230, 5
        %v809 = vsel %vm700, %v807, %v808
        %v810 = vrot.slane %v808, 4
        %v811 = vrot.slane %v246, 5
        %v812 = vsel %vm700, %v810, %v811
        %s813 = scalar_lea.vmem %s196, 12
        %v814 = vld [vmem:[%s813] sm:$0xf]
        %v815 = vld [vmem:[%s813 + $0x4] sm:$0xf]
        %v816 = vld [vmem:[%s813 + $0xc] sm:$0xf]
        %v817 = vld [vmem:[%s813 + $0x10] sm:$0xf]
        %v818 = vld [vmem:[%s813 + $0x18] sm:$0xf]
        %v819 = vld [vmem:[%s813 + $0x1c] sm:$0xf]
        %v820 = vld [vmem:[%s813 + $0x24] sm:$0xf]
        %v821 = vld [vmem:[%s813 + $0x28] sm:$0xf]
        %v822 = vld [vmem:[%s813 + $0x30] sm:$0xf]
        %v823 = vld [vmem:[%s813 + $0x34] sm:$0xf]
        %v824 = vld [vmem:[%s813 + $0x3c] sm:$0xf]
        %v825 = vld [vmem:[%s813 + $0x40] sm:$0xf]
        %v826 = vld [vmem:[%s813 + $0x48] sm:$0xf]
        %v827 = vld [vmem:[%s813 + $0x4c] sm:$0xf]
        %v828 = vld [vmem:[%s813 + $0x54] sm:$0xf]
        %v829 = vld [vmem:[%s813 + $0x58] sm:$0xf]
        %v830 = vld [vmem:[%s813 + $0x60] sm:$0xf]
        %v831 = vld [vmem:[%s813 + $0x64] sm:$0xf]
        %v832 = vld [vmem:[%s813 + $0x6c] sm:$0xf]
        %v833 = vld [vmem:[%s813 + $0x70] sm:$0xf]
        %v834 = vld [vmem:[%s813 + $0x78] sm:$0xf]
        %v835 = vld [vmem:[%s813 + $0x7c] sm:$0xf]
        %v836 = vld [vmem:[%s813 + $0x84] sm:$0xf]
        %v837 = vld [vmem:[%s813 + $0x88] sm:$0xf]
        %v838 = vld [vmem:[%s813 + $0x90] sm:$0xf]
        %v839 = vld [vmem:[%s813 + $0x94] sm:$0xf]
        %v840 = vld [vmem:[%s813 + $0x9c] sm:$0xf]
        %v841 = vld [vmem:[%s813 + $0xa0] sm:$0xf]
        %v842 = vld [vmem:[%s813 + $0xa8] sm:$0xf]
        %v843 = vld [vmem:[%s813 + $0xac] sm:$0xf]
        %v844 = vld [vmem:[%s813 + $0xb4] sm:$0xf]
        %v845 = vld [vmem:[%s813 + $0xb8] sm:$0xf]
        %v846 = vld [vmem:[%s813 + $0x8] sm:$0x1]
        %v847 = vld [vmem:[%s813 + $0x14] sm:$0x1]
        %v848 = vld [vmem:[%s813 + $0x20] sm:$0x1]
        %v849 = vld [vmem:[%s813 + $0x2c] sm:$0x1]
        %v850 = vld [vmem:[%s813 + $0x38] sm:$0x1]
        %v851 = vld [vmem:[%s813 + $0x44] sm:$0x1]
        %v852 = vld [vmem:[%s813 + $0x50] sm:$0x1]
        %v853 = vld [vmem:[%s813 + $0x5c] sm:$0x1]
        %v854 = vld [vmem:[%s813 + $0x68] sm:$0x1]
        %v855 = vld [vmem:[%s813 + $0x74] sm:$0x1]
        %v856 = vld [vmem:[%s813 + $0x80] sm:$0x1]
        %v857 = vld [vmem:[%s813 + $0x8c] sm:$0x1]
        %v858 = vld [vmem:[%s813 + $0x98] sm:$0x1]
        %v859 = vld [vmem:[%s813 + $0xa4] sm:$0x1]
        %v860 = vld [vmem:[%s813 + $0xb0] sm:$0x1]
        %v861 = vld [vmem:[%s813 + $0xbc] sm:$0x1]
        %v863 = vshrl.u32 %v814, 16
        %v865 = vrot.slane %v863, 4
        %v866 = vshll.u32 %v814, 16
        %v868 = vrot.slane %v866, 5
        %v869 = vor.u32 %v865, %v868
        %v870 = vrot.slane %v869, 4
        %v872 = vshll.u32 %v815, 16
        %v874 = vrot.slane %v872, 5
        %v875 = vsel %vm249, %v870, %v874
        %v876 = vshrl.u32 %v815, 16
        %v878 = vrot.slane %v876, 4
        %v879 = vor.u32 %v878, %v874
        %v880 = vrot.slane %v879, 4
        %v882 = vshll.u32 %v846, 16
        %v884 = vrot.slane %v882, 5
        %v885 = vsel %vm249, %v880, %v884
        %v887 = vshrl.u32 %v816, 16
        %v889 = vrot.slane %v887, 4
        %v890 = vshll.u32 %v816, 16
        %v892 = vrot.slane %v890, 5
        %v893 = vor.u32 %v889, %v892
        %v894 = vrot.slane %v893, 4
        %v896 = vshll.u32 %v817, 16
        %v898 = vrot.slane %v896, 5
        %v899 = vsel %vm249, %v894, %v898
        %v900 = vshrl.u32 %v817, 16
        %v902 = vrot.slane %v900, 4
        %v903 = vor.u32 %v902, %v898
        %v904 = vrot.slane %v903, 4
        %v906 = vshll.u32 %v847, 16
        %v908 = vrot.slane %v906, 5
        %v909 = vsel %vm249, %v904, %v908
        %v911 = vshrl.u32 %v818, 16
        %v913 = vrot.slane %v911, 4
        %v914 = vshll.u32 %v818, 16
        %v916 = vrot.slane %v914, 5
        %v917 = vor.u32 %v913, %v916
        %v918 = vrot.slane %v917, 4
        %v920 = vshll.u32 %v819, 16
        %v922 = vrot.slane %v920, 5
        %v923 = vsel %vm249, %v918, %v922
        %v924 = vshrl.u32 %v819, 16
        %v926 = vrot.slane %v924, 4
        %v927 = vor.u32 %v926, %v922
        %v928 = vrot.slane %v927, 4
        %v930 = vshll.u32 %v848, 16
        %v932 = vrot.slane %v930, 5
        %v933 = vsel %vm249, %v928, %v932
        %v935 = vshrl.u32 %v820, 16
        %v937 = vrot.slane %v935, 4
        %v938 = vshll.u32 %v820, 16
        %v940 = vrot.slane %v938, 5
        %v941 = vor.u32 %v937, %v940
        %v942 = vrot.slane %v941, 4
        %v944 = vshll.u32 %v821, 16
        %v946 = vrot.slane %v944, 5
        %v947 = vsel %vm249, %v942, %v946
        %v948 = vshrl.u32 %v821, 16
        %v950 = vrot.slane %v948, 4
        %v951 = vor.u32 %v950, %v946
        %v952 = vrot.slane %v951, 4
        %v954 = vshll.u32 %v849, 16
        %v956 = vrot.slane %v954, 5
        %v957 = vsel %vm249, %v952, %v956
        %v959 = vshrl.u32 %v822, 16
        %v961 = vrot.slane %v959, 4
        %v962 = vshll.u32 %v822, 16
        %v964 = vrot.slane %v962, 5
        %v965 = vor.u32 %v961, %v964
        %v966 = vrot.slane %v965, 4
        %v968 = vshll.u32 %v823, 16
        %v970 = vrot.slane %v968, 5
        %v971 = vsel %vm249, %v966, %v970
        %v972 = vshrl.u32 %v823, 16
        %v974 = vrot.slane %v972, 4
        %v975 = vor.u32 %v974, %v970
        %v976 = vrot.slane %v975, 4
        %v978 = vshll.u32 %v850, 16
        %v980 = vrot.slane %v978, 5
        %v981 = vsel %vm249, %v976, %v980
        %v983 = vshrl.u32 %v824, 16
        %v985 = vrot.slane %v983, 4
        %v986 = vshll.u32 %v824, 16
        %v988 = vrot.slane %v986, 5
        %v989 = vor.u32 %v985, %v988
        %v990 = vrot.slane %v989, 4
        %v992 = vshll.u32 %v825, 16
        %v994 = vrot.slane %v992, 5
        %v995 = vsel %vm249, %v990, %v994
        %v996 = vshrl.u32 %v825, 16
        %v998 = vrot.slane %v996, 4
        %v999 = vor.u32 %v998, %v994
        %v1000 = vrot.slane %v999, 4
        %v1002 = vshll.u32 %v851, 16
        %v1004 = vrot.slane %v1002, 5
        %v1005 = vsel %vm249, %v1000, %v1004
        %v1007 = vshrl.u32 %v826, 16
        %v1009 = vrot.slane %v1007, 4
        %v1010 = vshll.u32 %v826, 16
        %v1012 = vrot.slane %v1010, 5
        %v1013 = vor.u32 %v1009, %v1012
        %v1014 = vrot.slane %v1013, 4
        %v1016 = vshll.u32 %v827, 16
        %v1018 = vrot.slane %v1016, 5
        %v1019 = vsel %vm249, %v1014, %v1018
        %v1020 = vshrl.u32 %v827, 16
        %v1022 = vrot.slane %v1020, 4
        %v1023 = vor.u32 %v1022, %v1018
        %v1024 = vrot.slane %v1023, 4
        %v1026 = vshll.u32 %v852, 16
        %v1028 = vrot.slane %v1026, 5
        %v1029 = vsel %vm249, %v1024, %v1028
        %v1031 = vshrl.u32 %v828, 16
        %v1033 = vrot.slane %v1031, 4
        %v1034 = vshll.u32 %v828, 16
        %v1036 = vrot.slane %v1034, 5
        %v1037 = vor.u32 %v1033, %v1036
        %v1038 = vrot.slane %v1037, 4
        %v1040 = vshll.u32 %v829, 16
        %v1042 = vrot.slane %v1040, 5
        %v1043 = vsel %vm249, %v1038, %v1042
        %v1044 = vshrl.u32 %v829, 16
        %v1046 = vrot.slane %v1044, 4
        %v1047 = vor.u32 %v1046, %v1042
        %v1048 = vrot.slane %v1047, 4
        %v1050 = vshll.u32 %v853, 16
        %v1052 = vrot.slane %v1050, 5
        %v1053 = vsel %vm249, %v1048, %v1052
        %v1055 = vshrl.u32 %v830, 16
        %v1057 = vrot.slane %v1055, 4
        %v1058 = vshll.u32 %v830, 16
        %v1060 = vrot.slane %v1058, 5
        %v1061 = vor.u32 %v1057, %v1060
        %v1062 = vrot.slane %v1061, 4
        %v1064 = vshll.u32 %v831, 16
        %v1066 = vrot.slane %v1064, 5
        %v1067 = vsel %vm249, %v1062, %v1066
        %v1068 = vshrl.u32 %v831, 16
        %v1070 = vrot.slane %v1068, 4
        %v1071 = vor.u32 %v1070, %v1066
        %v1072 = vrot.slane %v1071, 4
        %v1074 = vshll.u32 %v854, 16
        %v1076 = vrot.slane %v1074, 5
        %v1077 = vsel %vm249, %v1072, %v1076
        %v1079 = vshrl.u32 %v832, 16
        %v1081 = vrot.slane %v1079, 4
        %v1082 = vshll.u32 %v832, 16
        %v1084 = vrot.slane %v1082, 5
        %v1085 = vor.u32 %v1081, %v1084
        %v1086 = vrot.slane %v1085, 4
        %v1088 = vshll.u32 %v833, 16
        %v1090 = vrot.slane %v1088, 5
        %v1091 = vsel %vm249, %v1086, %v1090
        %v1092 = vshrl.u32 %v833, 16
        %v1094 = vrot.slane %v1092, 4
        %v1095 = vor.u32 %v1094, %v1090
        %v1096 = vrot.slane %v1095, 4
        %v1098 = vshll.u32 %v855, 16
        %v1100 = vrot.slane %v1098, 5
        %v1101 = vsel %vm249, %v1096, %v1100
        %v1103 = vshrl.u32 %v834, 16
        %v1105 = vrot.slane %v1103, 4
        %v1106 = vshll.u32 %v834, 16
        %v1108 = vrot.slane %v1106, 5
        %v1109 = vor.u32 %v1105, %v1108
        %v1110 = vrot.slane %v1109, 4
        %v1112 = vshll.u32 %v835, 16
        %v1114 = vrot.slane %v1112, 5
        %v1115 = vsel %vm249, %v1110, %v1114
        %v1116 = vshrl.u32 %v835, 16
        %v1118 = vrot.slane %v1116, 4
        %v1119 = vor.u32 %v1118, %v1114
        %v1120 = vrot.slane %v1119, 4
        %v1122 = vshll.u32 %v856, 16
        %v1124 = vrot.slane %v1122, 5
        %v1125 = vsel %vm249, %v1120, %v1124
        %v1127 = vshrl.u32 %v836, 16
        %v1129 = vrot.slane %v1127, 4
        %v1130 = vshll.u32 %v836, 16
        %v1132 = vrot.slane %v1130, 5
        %v1133 = vor.u32 %v1129, %v1132
        %v1134 = vrot.slane %v1133, 4
        %v1136 = vshll.u32 %v837, 16
        %v1138 = vrot.slane %v1136, 5
        %v1139 = vsel %vm249, %v1134, %v1138
        %v1140 = vshrl.u32 %v837, 16
        %v1142 = vrot.slane %v1140, 4
        %v1143 = vor.u32 %v1142, %v1138
        %v1144 = vrot.slane %v1143, 4
        %v1146 = vshll.u32 %v857, 16
        %v1148 = vrot.slane %v1146, 5
        %v1149 = vsel %vm249, %v1144, %v1148
        %v1151 = vshrl.u32 %v838, 16
        %v1153 = vrot.slane %v1151, 4
        %v1154 = vshll.u32 %v838, 16
        %v1156 = vrot.slane %v1154, 5
        %v1157 = vor.u32 %v1153, %v1156
        %v1158 = vrot.slane %v1157, 4
        %v1160 = vshll.u32 %v839, 16
        %v1162 = vrot.slane %v1160, 5
        %v1163 = vsel %vm249, %v1158, %v1162
        %v1164 = vshrl.u32 %v839, 16
        %v1166 = vrot.slane %v1164, 4
        %v1167 = vor.u32 %v1166, %v1162
        %v1168 = vrot.slane %v1167, 4
        %v1170 = vshll.u32 %v858, 16
        %v1172 = vrot.slane %v1170, 5
        %v1173 = vsel %vm249, %v1168, %v1172
        %v1175 = vshrl.u32 %v840, 16
        %v1177 = vrot.slane %v1175, 4
        %v1178 = vshll.u32 %v840, 16
        %v1180 = vrot.slane %v1178, 5
        %v1181 = vor.u32 %v1177, %v1180
        %v1182 = vrot.slane %v1181, 4
        %v1184 = vshll.u32 %v841, 16
        %v1186 = vrot.slane %v1184, 5
        %v1187 = vsel %vm249, %v1182, %v1186
        %v1188 = vshrl.u32 %v841, 16
        %v1190 = vrot.slane %v1188, 4
        %v1191 = vor.u32 %v1190, %v1186
        %v1192 = vrot.slane %v1191, 4
        %v1194 = vshll.u32 %v859, 16
        %v1196 = vrot.slane %v1194, 5
        %v1197 = vsel %vm249, %v1192, %v1196
        %v1199 = vshrl.u32 %v842, 16
        %v1201 = vrot.slane %v1199, 4
        %v1202 = vshll.u32 %v842, 16
        %v1204 = vrot.slane %v1202, 5
        %v1205 = vor.u32 %v1201, %v1204
        %v1206 = vrot.slane %v1205, 4
        %v1208 = vshll.u32 %v843, 16
        %v1210 = vrot.slane %v1208, 5
        %v1211 = vsel %vm249, %v1206, %v1210
        %v1212 = vshrl.u32 %v843, 16
        %v1214 = vrot.slane %v1212, 4
        %v1215 = vor.u32 %v1214, %v1210
        %v1216 = vrot.slane %v1215, 4
        %v1218 = vshll.u32 %v860, 16
        %v1220 = vrot.slane %v1218, 5
        %v1221 = vsel %vm249, %v1216, %v1220
        %v1223 = vshrl.u32 %v844, 16
        %v1225 = vrot.slane %v1223, 4
        %v1226 = vshll.u32 %v844, 16
        %v1228 = vrot.slane %v1226, 5
        %v1229 = vor.u32 %v1225, %v1228
        %v1230 = vrot.slane %v1229, 4
        %v1232 = vshll.u32 %v845, 16
        %v1234 = vrot.slane %v1232, 5
        %v1235 = vsel %vm249, %v1230, %v1234
        %v1236 = vshrl.u32 %v845, 16
        %v1238 = vrot.slane %v1236, 4
        %v1239 = vor.u32 %v1238, %v1234
        %v1240 = vrot.slane %v1239, 4
        %v1242 = vshll.u32 %v861, 16
        %v1244 = vrot.slane %v1242, 5
        %v1245 = vsel %vm249, %v1240, %v1244
        %v1246 = vld [vmem:[%s813] sm:$0xe]
        %v1247 = vld [vmem:[%s813 + $0xc] sm:$0xe]
        %v1248 = vld [vmem:[%s813 + $0x18] sm:$0xe]
        %v1249 = vld [vmem:[%s813 + $0x24] sm:$0xe]
        %v1250 = vld [vmem:[%s813 + $0x30] sm:$0xe]
        %v1251 = vld [vmem:[%s813 + $0x3c] sm:$0xe]
        %v1252 = vld [vmem:[%s813 + $0x48] sm:$0xe]
        %v1253 = vld [vmem:[%s813 + $0x54] sm:$0xe]
        %v1254 = vld [vmem:[%s813 + $0x60] sm:$0xe]
        %v1255 = vld [vmem:[%s813 + $0x6c] sm:$0xe]
        %v1256 = vld [vmem:[%s813 + $0x78] sm:$0xe]
        %v1257 = vld [vmem:[%s813 + $0x84] sm:$0xe]
        %v1258 = vld [vmem:[%s813 + $0x90] sm:$0xe]
        %v1259 = vld [vmem:[%s813 + $0x9c] sm:$0xe]
        %v1260 = vld [vmem:[%s813 + $0xa8] sm:$0xe]
        %v1261 = vld [vmem:[%s813 + $0xb4] sm:$0xe]
        %v1310 = vrot.slane %v1246, 5
        %v1311 = vrot.slane %v1310, 4
        %v1312 = vrot.slane %v815, 5
        %v1313 = vsel %vm700, %v1311, %v1312
        %v1314 = vrot.slane %v1312, 4
        %v1315 = vrot.slane %v846, 5
        %v1316 = vsel %vm700, %v1314, %v1315
        %v1317 = vrot.slane %v1247, 5
        %v1318 = vrot.slane %v1317, 4
        %v1319 = vrot.slane %v817, 5
        %v1320 = vsel %vm700, %v1318, %v1319
        %v1321 = vrot.slane %v1319, 4
        %v1322 = vrot.slane %v847, 5
        %v1323 = vsel %vm700, %v1321, %v1322
        %v1324 = vrot.slane %v1248, 5
        %v1325 = vrot.slane %v1324, 4
        %v1326 = vrot.slane %v819, 5
        %v1327 = vsel %vm700, %v1325, %v1326
        %v1328 = vrot.slane %v1326, 4
        %v1329 = vrot.slane %v848, 5
        %v1330 = vsel %vm700, %v1328, %v1329
        %v1331 = vrot.slane %v1249, 5
        %v1332 = vrot.slane %v1331, 4
        %v1333 = vrot.slane %v821, 5
        %v1334 = vsel %vm700, %v1332, %v1333
        %v1335 = vrot.slane %v1333, 4
        %v1336 = vrot.slane %v849, 5
        %v1337 = vsel %vm700, %v1335, %v1336
        %v1338 = vrot.slane %v1250, 5
        %v1339 = vrot.slane %v1338, 4
        %v1340 = vrot.slane %v823, 5
        %v1341 = vsel %vm700, %v1339, %v1340
        %v1342 = vrot.slane %v1340, 4
        %v1343 = vrot.slane %v850, 5
        %v1344 = vsel %vm700, %v1342, %v1343
        %v1345 = vrot.slane %v1251, 5
        %v1346 = vrot.slane %v1345, 4
        %v1347 = vrot.slane %v825, 5
        %v1348 = vsel %vm700, %v1346, %v1347
        %v1349 = vrot.slane %v1347, 4
        %v1350 = vrot.slane %v851, 5
        %v1351 = vsel %vm700, %v1349, %v1350
        %v1352 = vrot.slane %v1252, 5
        %v1353 = vrot.slane %v1352, 4
        %v1354 = vrot.slane %v827, 5
        %v1355 = vsel %vm700, %v1353, %v1354
        %v1356 = vrot.slane %v1354, 4
        %v1357 = vrot.slane %v852, 5
        %v1358 = vsel %vm700, %v1356, %v1357
        %v1359 = vrot.slane %v1253, 5
        %v1360 = vrot.slane %v1359, 4
        %v1361 = vrot.slane %v829, 5
        %v1362 = vsel %vm700, %v1360, %v1361
        %v1363 = vrot.slane %v1361, 4
        %v1364 = vrot.slane %v853, 5
        %v1365 = vsel %vm700, %v1363, %v1364
        %v1366 = vrot.slane %v1254, 5
        %v1367 = vrot.slane %v1366, 4
        %v1368 = vrot.slane %v831, 5
        %v1369 = vsel %vm700, %v1367, %v1368
        %v1370 = vrot.slane %v1368, 4
        %v1371 = vrot.slane %v854, 5
        %v1372 = vsel %vm700, %v1370, %v1371
        %v1373 = vrot.slane %v1255, 5
        %v1374 = vrot.slane %v1373, 4
        %v1375 = vrot.slane %v833, 5
        %v1376 = vsel %vm700, %v1374, %v1375
        %v1377 = vrot.slane %v1375, 4
        %v1378 = vrot.slane %v855, 5
        %v1379 = vsel %vm700, %v1377, %v1378
        %v1380 = vrot.slane %v1256, 5
        %v1381 = vrot.slane %v1380, 4
        %v1382 = vrot.slane %v835, 5
        %v1383 = vsel %vm700, %v1381, %v1382
        %v1384 = vrot.slane %v1382, 4
        %v1385 = vrot.slane %v856, 5
        %v1386 = vsel %vm700, %v1384, %v1385
        %v1387 = vrot.slane %v1257, 5
        %v1388 = vrot.slane %v1387, 4
        %v1389 = vrot.slane %v837, 5
        %v1390 = vsel %vm700, %v1388, %v1389
        %v1391 = vrot.slane %v1389, 4
        %v1392 = vrot.slane %v857, 5
        %v1393 = vsel %vm700, %v1391, %v1392
        %v1394 = vrot.slane %v1258, 5
        %v1395 = vrot.slane %v1394, 4
        %v1396 = vrot.slane %v839, 5
        %v1397 = vsel %vm700, %v1395, %v1396
        %v1398 = vrot.slane %v1396, 4
        %v1399 = vrot.slane %v858, 5
        %v1400 = vsel %vm700, %v1398, %v1399
        %v1401 = vrot.slane %v1259, 5
        %v1402 = vrot.slane %v1401, 4
        %v1403 = vrot.slane %v841, 5
        %v1404 = vsel %vm700, %v1402, %v1403
        %v1405 = vrot.slane %v1403, 4
        %v1406 = vrot.slane %v859, 5
        %v1407 = vsel %vm700, %v1405, %v1406
        %v1408 = vrot.slane %v1260, 5
        %v1409 = vrot.slane %v1408, 4
        %v1410 = vrot.slane %v843, 5
        %v1411 = vsel %vm700, %v1409, %v1410
        %v1412 = vrot.slane %v1410, 4
        %v1413 = vrot.slane %v860, 5
        %v1414 = vsel %vm700, %v1412, %v1413
        %v1415 = vrot.slane %v1261, 5
        %v1416 = vrot.slane %v1415, 4
        %v1417 = vrot.slane %v845, 5
        %v1418 = vsel %vm700, %v1416, %v1417
        %v1419 = vrot.slane %v1417, 4
        %v1420 = vrot.slane %v861, 5
        %v1421 = vsel %vm700, %v1419, %v1420
        %s1422 = scalar_lea.vmem %s196, 24
        %v1423 = vld [vmem:[%s1422] sm:$0xf]
        %v1424 = vld [vmem:[%s1422 + $0x4] sm:$0xf]
        %v1425 = vld [vmem:[%s1422 + $0xc] sm:$0xf]
        %v1426 = vld [vmem:[%s1422 + $0x10] sm:$0xf]
        %v1427 = vld [vmem:[%s1422 + $0x18] sm:$0xf]
        %v1428 = vld [vmem:[%s1422 + $0x1c] sm:$0xf]
        %v1429 = vld [vmem:[%s1422 + $0x24] sm:$0xf]
        %v1430 = vld [vmem:[%s1422 + $0x28] sm:$0xf]
        %v1431 = vld [vmem:[%s1422 + $0x30] sm:$0xf]
        %v1432 = vld [vmem:[%s1422 + $0x34] sm:$0xf]
        %v1433 = vld [vmem:[%s1422 + $0x3c] sm:$0xf]
        %v1434 = vld [vmem:[%s1422 + $0x40] sm:$0xf]
        %v1435 = vld [vmem:[%s1422 + $0x48] sm:$0xf]
        %v1436 = vld [vmem:[%s1422 + $0x4c] sm:$0xf]
        %v1437 = vld [vmem:[%s1422 + $0x54] sm:$0xf]
        %v1438 = vld [vmem:[%s1422 + $0x58] sm:$0xf]
        %v1439 = vld [vmem:[%s1422 + $0x60] sm:$0xf]
        %v1440 = vld [vmem:[%s1422 + $0x64] sm:$0xf]
        %v1441 = vld [vmem:[%s1422 + $0x6c] sm:$0xf]
        %v1442 = vld [vmem:[%s1422 + $0x70] sm:$0xf]
        %v1443 = vld [vmem:[%s1422 + $0x78] sm:$0xf]
        %v1444 = vld [vmem:[%s1422 + $0x7c] sm:$0xf]
        %v1445 = vld [vmem:[%s1422 + $0x84] sm:$0xf]
        %v1446 = vld [vmem:[%s1422 + $0x88] sm:$0xf]
        %v1447 = vld [vmem:[%s1422 + $0x90] sm:$0xf]
        %v1448 = vld [vmem:[%s1422 + $0x94] sm:$0xf]
        %v1449 = vld [vmem:[%s1422 + $0x9c] sm:$0xf]
        %v1450 = vld [vmem:[%s1422 + $0xa0] sm:$0xf]
        %v1451 = vld [vmem:[%s1422 + $0xa8] sm:$0xf]
        %v1452 = vld [vmem:[%s1422 + $0xac] sm:$0xf]
        %v1453 = vld [vmem:[%s1422 + $0xb4] sm:$0xf]
        %v1454 = vld [vmem:[%s1422 + $0xb8] sm:$0xf]
        %v1455 = vld [vmem:[%s1422 + $0x8] sm:$0x1]
        %v1456 = vld [vmem:[%s1422 + $0x14] sm:$0x1]
        %v1457 = vld [vmem:[%s1422 + $0x20] sm:$0x1]
        %v1458 = vld [vmem:[%s1422 + $0x2c] sm:$0x1]
        %v1459 = vld [vmem:[%s1422 + $0x38] sm:$0x1]
        %v1460 = vld [vmem:[%s1422 + $0x44] sm:$0x1]
        %v1461 = vld [vmem:[%s1422 + $0x50] sm:$0x1]
        %v1462 = vld [vmem:[%s1422 + $0x5c] sm:$0x1]
        %v1463 = vld [vmem:[%s1422 + $0x68] sm:$0x1]
        %v1464 = vld [vmem:[%s1422 + $0x74] sm:$0x1]
        %v1465 = vld [vmem:[%s1422 + $0x80] sm:$0x1]
        %v1466 = vld [vmem:[%s1422 + $0x8c] sm:$0x1]
        %v1467 = vld [vmem:[%s1422 + $0x98] sm:$0x1]
        %v1468 = vld [vmem:[%s1422 + $0xa4] sm:$0x1]
        %v1469 = vld [vmem:[%s1422 + $0xb0] sm:$0x1]
        %v1470 = vld [vmem:[%s1422 + $0xbc] sm:$0x1]
        %v1472 = vshrl.u32 %v1423, 16
        %v1474 = vrot.slane %v1472, 4
        %v1475 = vshll.u32 %v1423, 16
        %v1477 = vrot.slane %v1475, 5
        %v1478 = vor.u32 %v1474, %v1477
        %v1479 = vrot.slane %v1478, 4
        %v1481 = vshll.u32 %v1424, 16
        %v1483 = vrot.slane %v1481, 5
        %v1484 = vsel %vm249, %v1479, %v1483
        %v1485 = vshrl.u32 %v1424, 16
        %v1487 = vrot.slane %v1485, 4
        %v1488 = vor.u32 %v1487, %v1483
        %v1489 = vrot.slane %v1488, 4
        %v1491 = vshll.u32 %v1455, 16
        %v1493 = vrot.slane %v1491, 5
        %v1494 = vsel %vm249, %v1489, %v1493
        %v1496 = vshrl.u32 %v1425, 16
        %v1498 = vrot.slane %v1496, 4
        %v1499 = vshll.u32 %v1425, 16
        %v1501 = vrot.slane %v1499, 5
        %v1502 = vor.u32 %v1498, %v1501
        %v1503 = vrot.slane %v1502, 4
        %v1505 = vshll.u32 %v1426, 16
        %v1507 = vrot.slane %v1505, 5
        %v1508 = vsel %vm249, %v1503, %v1507
        %v1509 = vshrl.u32 %v1426, 16
        %v1511 = vrot.slane %v1509, 4
        %v1512 = vor.u32 %v1511, %v1507
        %v1513 = vrot.slane %v1512, 4
        %v1515 = vshll.u32 %v1456, 16
        %v1517 = vrot.slane %v1515, 5
        %v1518 = vsel %vm249, %v1513, %v1517
        %v1520 = vshrl.u32 %v1427, 16
        %v1522 = vrot.slane %v1520, 4
        %v1523 = vshll.u32 %v1427, 16
        %v1525 = vrot.slane %v1523, 5
        %v1526 = vor.u32 %v1522, %v1525
        %v1527 = vrot.slane %v1526, 4
        %v1529 = vshll.u32 %v1428, 16
        %v1531 = vrot.slane %v1529, 5
        %v1532 = vsel %vm249, %v1527, %v1531
        %v1533 = vshrl.u32 %v1428, 16
        %v1535 = vrot.slane %v1533, 4
        %v1536 = vor.u32 %v1535, %v1531
        %v1537 = vrot.slane %v1536, 4
        %v1539 = vshll.u32 %v1457, 16
        %v1541 = vrot.slane %v1539, 5
        %v1542 = vsel %vm249, %v1537, %v1541
        %v1544 = vshrl.u32 %v1429, 16
        %v1546 = vrot.slane %v1544, 4
        %v1547 = vshll.u32 %v1429, 16
        %v1549 = vrot.slane %v1547, 5
        %v1550 = vor.u32 %v1546, %v1549
        %v1551 = vrot.slane %v1550, 4
        %v1553 = vshll.u32 %v1430, 16
        %v1555 = vrot.slane %v1553, 5
        %v1556 = vsel %vm249, %v1551, %v1555
        %v1557 = vshrl.u32 %v1430, 16
        %v1559 = vrot.slane %v1557, 4
        %v1560 = vor.u32 %v1559, %v1555
        %v1561 = vrot.slane %v1560, 4
        %v1563 = vshll.u32 %v1458, 16
        %v1565 = vrot.slane %v1563, 5
        %v1566 = vsel %vm249, %v1561, %v1565
        %v1568 = vshrl.u32 %v1431, 16
        %v1570 = vrot.slane %v1568, 4
        %v1571 = vshll.u32 %v1431, 16
        %v1573 = vrot.slane %v1571, 5
        %v1574 = vor.u32 %v1570, %v1573
        %v1575 = vrot.slane %v1574, 4
        %v1577 = vshll.u32 %v1432, 16
        %v1579 = vrot.slane %v1577, 5
        %v1580 = vsel %vm249, %v1575, %v1579
        %v1581 = vshrl.u32 %v1432, 16
        %v1583 = vrot.slane %v1581, 4
        %v1584 = vor.u32 %v1583, %v1579
        %v1585 = vrot.slane %v1584, 4
        %v1587 = vshll.u32 %v1459, 16
        %v1589 = vrot.slane %v1587, 5
        %v1590 = vsel %vm249, %v1585, %v1589
        %v1592 = vshrl.u32 %v1433, 16
        %v1594 = vrot.slane %v1592, 4
        %v1595 = vshll.u32 %v1433, 16
        %v1597 = vrot.slane %v1595, 5
        %v1598 = vor.u32 %v1594, %v1597
        %v1599 = vrot.slane %v1598, 4
        %v1601 = vshll.u32 %v1434, 16
        %v1603 = vrot.slane %v1601, 5
        %v1604 = vsel %vm249, %v1599, %v1603
        %v1605 = vshrl.u32 %v1434, 16
        %v1607 = vrot.slane %v1605, 4
        %v1608 = vor.u32 %v1607, %v1603
        %v1609 = vrot.slane %v1608, 4
        %v1611 = vshll.u32 %v1460, 16
        %v1613 = vrot.slane %v1611, 5
        %v1614 = vsel %vm249, %v1609, %v1613
        %v1616 = vshrl.u32 %v1435, 16
        %v1618 = vrot.slane %v1616, 4
        %v1619 = vshll.u32 %v1435, 16
        %v1621 = vrot.slane %v1619, 5
        %v1622 = vor.u32 %v1618, %v1621
        %v1623 = vrot.slane %v1622, 4
        %v1625 = vshll.u32 %v1436, 16
        %v1627 = vrot.slane %v1625, 5
        %v1628 = vsel %vm249, %v1623, %v1627
        %v1629 = vshrl.u32 %v1436, 16
        %v1631 = vrot.slane %v1629, 4
        %v1632 = vor.u32 %v1631, %v1627
        %v1633 = vrot.slane %v1632, 4
        %v1635 = vshll.u32 %v1461, 16
        %v1637 = vrot.slane %v1635, 5
        %v1638 = vsel %vm249, %v1633, %v1637
        %v1640 = vshrl.u32 %v1437, 16
        %v1642 = vrot.slane %v1640, 4
        %v1643 = vshll.u32 %v1437, 16
        %v1645 = vrot.slane %v1643, 5
        %v1646 = vor.u32 %v1642, %v1645
        %v1647 = vrot.slane %v1646, 4
        %v1649 = vshll.u32 %v1438, 16
        %v1651 = vrot.slane %v1649, 5
        %v1652 = vsel %vm249, %v1647, %v1651
        %v1653 = vshrl.u32 %v1438, 16
        %v1655 = vrot.slane %v1653, 4
        %v1656 = vor.u32 %v1655, %v1651
        %v1657 = vrot.slane %v1656, 4
        %v1659 = vshll.u32 %v1462, 16
        %v1661 = vrot.slane %v1659, 5
        %v1662 = vsel %vm249, %v1657, %v1661
        %v1664 = vshrl.u32 %v1439, 16
        %v1666 = vrot.slane %v1664, 4
        %v1667 = vshll.u32 %v1439, 16
        %v1669 = vrot.slane %v1667, 5
        %v1670 = vor.u32 %v1666, %v1669
        %v1671 = vrot.slane %v1670, 4
        %v1673 = vshll.u32 %v1440, 16
        %v1675 = vrot.slane %v1673, 5
        %v1676 = vsel %vm249, %v1671, %v1675
        %v1677 = vshrl.u32 %v1440, 16
        %v1679 = vrot.slane %v1677, 4
        %v1680 = vor.u32 %v1679, %v1675
        %v1681 = vrot.slane %v1680, 4
        %v1683 = vshll.u32 %v1463, 16
        %v1685 = vrot.slane %v1683, 5
        %v1686 = vsel %vm249, %v1681, %v1685
        %v1688 = vshrl.u32 %v1441, 16
        %v1690 = vrot.slane %v1688, 4
        %v1691 = vshll.u32 %v1441, 16
        %v1693 = vrot.slane %v1691, 5
        %v1694 = vor.u32 %v1690, %v1693
        %v1695 = vrot.slane %v1694, 4
        %v1697 = vshll.u32 %v1442, 16
        %v1699 = vrot.slane %v1697, 5
        %v1700 = vsel %vm249, %v1695, %v1699
        %v1701 = vshrl.u32 %v1442, 16
        %v1703 = vrot.slane %v1701, 4
        %v1704 = vor.u32 %v1703, %v1699
        %v1705 = vrot.slane %v1704, 4
        %v1707 = vshll.u32 %v1464, 16
        %v1709 = vrot.slane %v1707, 5
        %v1710 = vsel %vm249, %v1705, %v1709
        %v1712 = vshrl.u32 %v1443, 16
        %v1714 = vrot.slane %v1712, 4
        %v1715 = vshll.u32 %v1443, 16
        %v1717 = vrot.slane %v1715, 5
        %v1718 = vor.u32 %v1714, %v1717
        %v1719 = vrot.slane %v1718, 4
        %v1721 = vshll.u32 %v1444, 16
        %v1723 = vrot.slane %v1721, 5
        %v1724 = vsel %vm249, %v1719, %v1723
        %v1725 = vshrl.u32 %v1444, 16
        %v1727 = vrot.slane %v1725, 4
        %v1728 = vor.u32 %v1727, %v1723
        %v1729 = vrot.slane %v1728, 4
        %v1731 = vshll.u32 %v1465, 16
        %v1733 = vrot.slane %v1731, 5
        %v1734 = vsel %vm249, %v1729, %v1733
        %v1736 = vshrl.u32 %v1445, 16
        %v1738 = vrot.slane %v1736, 4
        %v1739 = vshll.u32 %v1445, 16
        %v1741 = vrot.slane %v1739, 5
        %v1742 = vor.u32 %v1738, %v1741
        %v1743 = vrot.slane %v1742, 4
        %v1745 = vshll.u32 %v1446, 16
        %v1747 = vrot.slane %v1745, 5
        %v1748 = vsel %vm249, %v1743, %v1747
        %v1749 = vshrl.u32 %v1446, 16
        %v1751 = vrot.slane %v1749, 4
        %v1752 = vor.u32 %v1751, %v1747
        %v1753 = vrot.slane %v1752, 4
        %v1755 = vshll.u32 %v1466, 16
        %v1757 = vrot.slane %v1755, 5
        %v1758 = vsel %vm249, %v1753, %v1757
        %v1760 = vshrl.u32 %v1447, 16
        %v1762 = vrot.slane %v1760, 4
        %v1763 = vshll.u32 %v1447, 16
        %v1765 = vrot.slane %v1763, 5
        %v1766 = vor.u32 %v1762, %v1765
        %v1767 = vrot.slane %v1766, 4
        %v1769 = vshll.u32 %v1448, 16
        %v1771 = vrot.slane %v1769, 5
        %v1772 = vsel %vm249, %v1767, %v1771
        %v1773 = vshrl.u32 %v1448, 16
        %v1775 = vrot.slane %v1773, 4
        %v1776 = vor.u32 %v1775, %v1771
        %v1777 = vrot.slane %v1776, 4
        %v1779 = vshll.u32 %v1467, 16
        %v1781 = vrot.slane %v1779, 5
        %v1782 = vsel %vm249, %v1777, %v1781
        %v1784 = vshrl.u32 %v1449, 16
        %v1786 = vrot.slane %v1784, 4
        %v1787 = vshll.u32 %v1449, 16
        %v1789 = vrot.slane %v1787, 5
        %v1790 = vor.u32 %v1786, %v1789
        %v1791 = vrot.slane %v1790, 4
        %v1793 = vshll.u32 %v1450, 16
        %v1795 = vrot.slane %v1793, 5
        %v1796 = vsel %vm249, %v1791, %v1795
        %v1797 = vshrl.u32 %v1450, 16
        %v1799 = vrot.slane %v1797, 4
        %v1800 = vor.u32 %v1799, %v1795
        %v1801 = vrot.slane %v1800, 4
        %v1803 = vshll.u32 %v1468, 16
        %v1805 = vrot.slane %v1803, 5
        %v1806 = vsel %vm249, %v1801, %v1805
        %v1808 = vshrl.u32 %v1451, 16
        %v1810 = vrot.slane %v1808, 4
        %v1811 = vshll.u32 %v1451, 16
        %v1813 = vrot.slane %v1811, 5
        %v1814 = vor.u32 %v1810, %v1813
        %v1815 = vrot.slane %v1814, 4
        %v1817 = vshll.u32 %v1452, 16
        %v1819 = vrot.slane %v1817, 5
        %v1820 = vsel %vm249, %v1815, %v1819
        %v1821 = vshrl.u32 %v1452, 16
        %v1823 = vrot.slane %v1821, 4
        %v1824 = vor.u32 %v1823, %v1819
        %v1825 = vrot.slane %v1824, 4
        %v1827 = vshll.u32 %v1469, 16
        %v1829 = vrot.slane %v1827, 5
        %v1830 = vsel %vm249, %v1825, %v1829
        %v1832 = vshrl.u32 %v1453, 16
        %v1834 = vrot.slane %v1832, 4
        %v1835 = vshll.u32 %v1453, 16
        %v1837 = vrot.slane %v1835, 5
        %v1838 = vor.u32 %v1834, %v1837
        %v1839 = vrot.slane %v1838, 4
        %v1841 = vshll.u32 %v1454, 16
        %v1843 = vrot.slane %v1841, 5
        %v1844 = vsel %vm249, %v1839, %v1843
        %v1845 = vshrl.u32 %v1454, 16
        %v1847 = vrot.slane %v1845, 4
        %v1848 = vor.u32 %v1847, %v1843
        %v1849 = vrot.slane %v1848, 4
        %v1851 = vshll.u32 %v1470, 16
        %v1853 = vrot.slane %v1851, 5
        %v1854 = vsel %vm249, %v1849, %v1853
        %v1855 = vld [vmem:[%s1422] sm:$0xe]
        %v1856 = vld [vmem:[%s1422 + $0xc] sm:$0xe]
        %v1857 = vld [vmem:[%s1422 + $0x18] sm:$0xe]
        %v1858 = vld [vmem:[%s1422 + $0x24] sm:$0xe]
        %v1859 = vld [vmem:[%s1422 + $0x30] sm:$0xe]
        %v1860 = vld [vmem:[%s1422 + $0x3c] sm:$0xe]
        %v1861 = vld [vmem:[%s1422 + $0x48] sm:$0xe]
        %v1862 = vld [vmem:[%s1422 + $0x54] sm:$0xe]
        %v1863 = vld [vmem:[%s1422 + $0x60] sm:$0xe]
        %v1864 = vld [vmem:[%s1422 + $0x6c] sm:$0xe]
        %v1865 = vld [vmem:[%s1422 + $0x78] sm:$0xe]
        %v1866 = vld [vmem:[%s1422 + $0x84] sm:$0xe]
        %v1867 = vld [vmem:[%s1422 + $0x90] sm:$0xe]
        %v1868 = vld [vmem:[%s1422 + $0x9c] sm:$0xe]
        %v1869 = vld [vmem:[%s1422 + $0xa8] sm:$0xe]
        %v1870 = vld [vmem:[%s1422 + $0xb4] sm:$0xe]
        %v1919 = vrot.slane %v1855, 5
        %v1920 = vrot.slane %v1919, 4
        %v1921 = vrot.slane %v1424, 5
        %v1922 = vsel %vm700, %v1920, %v1921
        %v1923 = vrot.slane %v1921, 4
        %v1924 = vrot.slane %v1455, 5
        %v1925 = vsel %vm700, %v1923, %v1924
        %v1926 = vrot.slane %v1856, 5
        %v1927 = vrot.slane %v1926, 4
        %v1928 = vrot.slane %v1426, 5
        %v1929 = vsel %vm700, %v1927, %v1928
        %v1930 = vrot.slane %v1928, 4
        %v1931 = vrot.slane %v1456, 5
        %v1932 = vsel %vm700, %v1930, %v1931
        %v1933 = vrot.slane %v1857, 5
        %v1934 = vrot.slane %v1933, 4
        %v1935 = vrot.slane %v1428, 5
        %v1936 = vsel %vm700, %v1934, %v1935
        %v1937 = vrot.slane %v1935, 4
        %v1938 = vrot.slane %v1457, 5
        %v1939 = vsel %vm700, %v1937, %v1938
        %v1940 = vrot.slane %v1858, 5
        %v1941 = vrot.slane %v1940, 4
        %v1942 = vrot.slane %v1430, 5
        %v1943 = vsel %vm700, %v1941, %v1942
        %v1944 = vrot.slane %v1942, 4
        %v1945 = vrot.slane %v1458, 5
        %v1946 = vsel %vm700, %v1944, %v1945
        %v1947 = vrot.slane %v1859, 5
        %v1948 = vrot.slane %v1947, 4
        %v1949 = vrot.slane %v1432, 5
        %v1950 = vsel %vm700, %v1948, %v1949
        %v1951 = vrot.slane %v1949, 4
        %v1952 = vrot.slane %v1459, 5
        %v1953 = vsel %vm700, %v1951, %v1952
        %v1954 = vrot.slane %v1860, 5
        %v1955 = vrot.slane %v1954, 4
        %v1956 = vrot.slane %v1434, 5
        %v1957 = vsel %vm700, %v1955, %v1956
        %v1958 = vrot.slane %v1956, 4
        %v1959 = vrot.slane %v1460, 5
        %v1960 = vsel %vm700, %v1958, %v1959
        %v1961 = vrot.slane %v1861, 5
        %v1962 = vrot.slane %v1961, 4
        %v1963 = vrot.slane %v1436, 5
        %v1964 = vsel %vm700, %v1962, %v1963
        %v1965 = vrot.slane %v1963, 4
        %v1966 = vrot.slane %v1461, 5
        %v1967 = vsel %vm700, %v1965, %v1966
        %v1968 = vrot.slane %v1862, 5
        %v1969 = vrot.slane %v1968, 4
        %v1970 = vrot.slane %v1438, 5
        %v1971 = vsel %vm700, %v1969, %v1970
        %v1972 = vrot.slane %v1970, 4
        %v1973 = vrot.slane %v1462, 5
        %v1974 = vsel %vm700, %v1972, %v1973
        %v1975 = vrot.slane %v1863, 5
        %v1976 = vrot.slane %v1975, 4
        %v1977 = vrot.slane %v1440, 5
        %v1978 = vsel %vm700, %v1976, %v1977
        %v1979 = vrot.slane %v1977, 4
        %v1980 = vrot.slane %v1463, 5
        %v1981 = vsel %vm700, %v1979, %v1980
        %v1982 = vrot.slane %v1864, 5
        %v1983 = vrot.slane %v1982, 4
        %v1984 = vrot.slane %v1442, 5
        %v1985 = vsel %vm700, %v1983, %v1984
        %v1986 = vrot.slane %v1984, 4
        %v1987 = vrot.slane %v1464, 5
        %v1988 = vsel %vm700, %v1986, %v1987
        %v1989 = vrot.slane %v1865, 5
        %v1990 = vrot.slane %v1989, 4
        %v1991 = vrot.slane %v1444, 5
        %v1992 = vsel %vm700, %v1990, %v1991
        %v1993 = vrot.slane %v1991, 4
        %v1994 = vrot.slane %v1465, 5
        %v1995 = vsel %vm700, %v1993, %v1994
        %v1996 = vrot.slane %v1866, 5
        %v1997 = vrot.slane %v1996, 4
        %v1998 = vrot.slane %v1446, 5
        %v1999 = vsel %vm700, %v1997, %v1998
        %v2000 = vrot.slane %v1998, 4
        %v2001 = vrot.slane %v1466, 5
        %v2002 = vsel %vm700, %v2000, %v2001
        %v2003 = vrot.slane %v1867, 5
        %v2004 = vrot.slane %v2003, 4
        %v2005 = vrot.slane %v1448, 5
        %v2006 = vsel %vm700, %v2004, %v2005
        %v2007 = vrot.slane %v2005, 4
        %v2008 = vrot.slane %v1467, 5
        %v2009 = vsel %vm700, %v2007, %v2008
        %v2010 = vrot.slane %v1868, 5
        %v2011 = vrot.slane %v2010, 4
        %v2012 = vrot.slane %v1450, 5
        %v2013 = vsel %vm700, %v2011, %v2012
        %v2014 = vrot.slane %v2012, 4
        %v2015 = vrot.slane %v1468, 5
        %v2016 = vsel %vm700, %v2014, %v2015
        %v2017 = vrot.slane %v1869, 5
        %v2018 = vrot.slane %v2017, 4
        %v2019 = vrot.slane %v1452, 5
        %v2020 = vsel %vm700, %v2018, %v2019
        %v2021 = vrot.slane %v2019, 4
        %v2022 = vrot.slane %v1469, 5
        %v2023 = vsel %vm700, %v2021, %v2022
        %v2024 = vrot.slane %v1870, 5
        %v2025 = vrot.slane %v2024, 4
        %v2026 = vrot.slane %v1454, 5
        %v2027 = vsel %vm700, %v2025, %v2026
        %v2028 = vrot.slane %v2026, 4
        %v2029 = vrot.slane %v1470, 5
        %v2030 = vsel %vm700, %v2028, %v2029
        %v2047 = vunpack.c.l.b16 %v199
        %v2048 = vunpack.c.l.b16 %v200
        %v2049 = vunpack.c.l.b16 %v201
        %v2050 = vunpack.c.l.b16 %v202
        %v2051 = vunpack.c.l.b16 %v203
        %v2052 = vunpack.c.l.b16 %v204
        %v2053 = vunpack.c.l.b16 %v205
        %v2054 = vunpack.c.l.b16 %v206
        %v2055 = vunpack.c.l.b16 %v207
        %v2056 = vunpack.c.l.b16 %v208
        %v2057 = vunpack.c.l.b16 %v209
        %v2058 = vunpack.c.l.b16 %v210
        %v2059 = vunpack.c.l.b16 %v211
        %v2060 = vunpack.c.l.b16 %v212
        %v2061 = vunpack.c.l.b16 %v213
        %v2062 = vunpack.c.l.b16 %v214
        %v2063 = vunpack.c.l.b16 %v215
        %v2064 = vunpack.c.l.b16 %v216
        %v2065 = vunpack.c.l.b16 %v217
        %v2066 = vunpack.c.l.b16 %v218
        %v2067 = vunpack.c.l.b16 %v219
        %v2068 = vunpack.c.l.b16 %v220
        %v2069 = vunpack.c.l.b16 %v221
        %v2070 = vunpack.c.l.b16 %v222
        %v2071 = vunpack.c.l.b16 %v223
        %v2072 = vunpack.c.l.b16 %v224
        %v2073 = vunpack.c.l.b16 %v225
        %v2074 = vunpack.c.l.b16 %v226
        %v2075 = vunpack.c.l.b16 %v227
        %v2076 = vunpack.c.l.b16 %v228
        %v2077 = vunpack.c.l.b16 %v229
        %v2078 = vunpack.c.l.b16 %v230
        %v2079 = vpack.c.b16 %v2048, %v2047
        %v2080 = vpack.c.b16 %v2050, %v2049
        %v2081 = vpack.c.b16 %v2052, %v2051
        %v2082 = vpack.c.b16 %v2054, %v2053
        %v2083 = vpack.c.b16 %v2056, %v2055
        %v2084 = vpack.c.b16 %v2058, %v2057
        %v2085 = vpack.c.b16 %v2060, %v2059
        %v2086 = vpack.c.b16 %v2062, %v2061
        %v2087 = vpack.c.b16 %v2064, %v2063
        %v2088 = vpack.c.b16 %v2066, %v2065
        %v2089 = vpack.c.b16 %v2068, %v2067
        %v2090 = vpack.c.b16 %v2070, %v2069
        %v2091 = vpack.c.b16 %v2072, %v2071
        %v2092 = vpack.c.b16 %v2074, %v2073
        %v2093 = vpack.c.b16 %v2076, %v2075
        %v2094 = vpack.c.b16 %v2078, %v2077
        %v2095 = vunpack.c.l.b16 %v263
        %v2096 = vunpack.c.l.b16 %v273
        %v2097 = vunpack.c.l.b16 %v287
        %v2098 = vunpack.c.l.b16 %v297
        %v2099 = vunpack.c.l.b16 %v311
        %v2100 = vunpack.c.l.b16 %v321
        %v2101 = vunpack.c.l.b16 %v335
        %v2102 = vunpack.c.l.b16 %v345
        %v2103 = vunpack.c.l.b16 %v359
        %v2104 = vunpack.c.l.b16 %v369
        %v2105 = vunpack.c.l.b16 %v383
        %v2106 = vunpack.c.l.b16 %v393
        %v2107 = vunpack.c.l.b16 %v407
        %v2108 = vunpack.c.l.b16 %v417
        %v2109 = vunpack.c.l.b16 %v431
        %v2110 = vunpack.c.l.b16 %v441
        %v2111 = vunpack.c.l.b16 %v455
        %v2112 = vunpack.c.l.b16 %v465
        %v2113 = vunpack.c.l.b16 %v479
        %v2114 = vunpack.c.l.b16 %v489
        %v2115 = vunpack.c.l.b16 %v503
        %v2116 = vunpack.c.l.b16 %v513
        %v2117 = vunpack.c.l.b16 %v527
        %v2118 = vunpack.c.l.b16 %v537
        %v2119 = vunpack.c.l.b16 %v551
        %v2120 = vunpack.c.l.b16 %v561
        %v2121 = vunpack.c.l.b16 %v575
        %v2122 = vunpack.c.l.b16 %v585
        %v2123 = vunpack.c.l.b16 %v599
        %v2124 = vunpack.c.l.b16 %v609
        %v2125 = vunpack.c.l.b16 %v623
        %v2126 = vunpack.c.l.b16 %v633
        %v2127 = vpack.c.b16 %v2096, %v2095
        %v2128 = vpack.c.b16 %v2098, %v2097
        %v2129 = vpack.c.b16 %v2100, %v2099
        %v2130 = vpack.c.b16 %v2102, %v2101
        %v2131 = vpack.c.b16 %v2104, %v2103
        %v2132 = vpack.c.b16 %v2106, %v2105
        %v2133 = vpack.c.b16 %v2108, %v2107
        %v2134 = vpack.c.b16 %v2110, %v2109
        %v2135 = vpack.c.b16 %v2112, %v2111
        %v2136 = vpack.c.b16 %v2114, %v2113
        %v2137 = vpack.c.b16 %v2116, %v2115
        %v2138 = vpack.c.b16 %v2118, %v2117
        %v2139 = vpack.c.b16 %v2120, %v2119
        %v2140 = vpack.c.b16 %v2122, %v2121
        %v2141 = vpack.c.b16 %v2124, %v2123
        %v2142 = vpack.c.b16 %v2126, %v2125
        %2143 = vrot.lane.b32.xlu0 %v2127, 4
        %v2144 = vpop.permute.xlu0 %2143
        %2145 = vrot.lane.b32.xlu0 %v2128, 4
        %v2146 = vpop.permute.xlu0 %2145
        %2147 = vrot.lane.b32.xlu0 %v2129, 4
        %v2148 = vpop.permute.xlu0 %2147
        %2149 = vrot.lane.b32.xlu0 %v2130, 4
        %v2150 = vpop.permute.xlu0 %2149
        %2151 = vrot.lane.b32.xlu0 %v2131, 4
        %v2152 = vpop.permute.xlu0 %2151
        %2153 = vrot.lane.b32.xlu0 %v2132, 4
        %v2154 = vpop.permute.xlu0 %2153
        %2155 = vrot.lane.b32.xlu0 %v2133, 4
        %v2156 = vpop.permute.xlu0 %2155
        %2157 = vrot.lane.b32.xlu0 %v2134, 4
        %v2158 = vpop.permute.xlu0 %2157
        %2159 = vrot.lane.b32.xlu0 %v2135, 4
        %v2160 = vpop.permute.xlu0 %2159
        %2161 = vrot.lane.b32.xlu0 %v2136, 4
        %v2162 = vpop.permute.xlu0 %2161
        %2163 = vrot.lane.b32.xlu0 %v2137, 4
        %v2164 = vpop.permute.xlu0 %2163
        %2165 = vrot.lane.b32.xlu0 %v2138, 4
        %v2166 = vpop.permute.xlu0 %2165
        %2167 = vrot.lane.b32.xlu0 %v2139, 4
        %v2168 = vpop.permute.xlu0 %2167
        %2169 = vrot.lane.b32.xlu0 %v2140, 4
        %v2170 = vpop.permute.xlu0 %2169
        %2171 = vrot.lane.b32.xlu0 %v2141, 4
        %v2172 = vpop.permute.xlu0 %2171
        %2173 = vrot.lane.b32.xlu0 %v2142, 4
        %v2174 = vpop.permute.xlu0 %2173
        %v2175 = vunpack.c.l.b16 %v704
        %v2176 = vunpack.c.l.b16 %v707
        %v2177 = vunpack.c.l.b16 %v711
        %v2178 = vunpack.c.l.b16 %v714
        %v2179 = vunpack.c.l.b16 %v718
        %v2180 = vunpack.c.l.b16 %v721
        %v2181 = vunpack.c.l.b16 %v725
        %v2182 = vunpack.c.l.b16 %v728
        %v2183 = vunpack.c.l.b16 %v732
        %v2184 = vunpack.c.l.b16 %v735
        %v2185 = vunpack.c.l.b16 %v739
        %v2186 = vunpack.c.l.b16 %v742
        %v2187 = vunpack.c.l.b16 %v746
        %v2188 = vunpack.c.l.b16 %v749
        %v2189 = vunpack.c.l.b16 %v753
        %v2190 = vunpack.c.l.b16 %v756
        %v2191 = vunpack.c.l.b16 %v760
        %v2192 = vunpack.c.l.b16 %v763
        %v2193 = vunpack.c.l.b16 %v767
        %v2194 = vunpack.c.l.b16 %v770
        %v2195 = vunpack.c.l.b16 %v774
        %v2196 = vunpack.c.l.b16 %v777
        %v2197 = vunpack.c.l.b16 %v781
        %v2198 = vunpack.c.l.b16 %v784
        %v2199 = vunpack.c.l.b16 %v788
        %v2200 = vunpack.c.l.b16 %v791
        %v2201 = vunpack.c.l.b16 %v795
        %v2202 = vunpack.c.l.b16 %v798
        %v2203 = vunpack.c.l.b16 %v802
        %v2204 = vunpack.c.l.b16 %v805
        %v2205 = vunpack.c.l.b16 %v809
        %v2206 = vunpack.c.l.b16 %v812
        %v2207 = vpack.c.b16 %v2176, %v2175
        %v2208 = vpack.c.b16 %v2178, %v2177
        %v2209 = vpack.c.b16 %v2180, %v2179
        %v2210 = vpack.c.b16 %v2182, %v2181
        %v2211 = vpack.c.b16 %v2184, %v2183
        %v2212 = vpack.c.b16 %v2186, %v2185
        %v2213 = vpack.c.b16 %v2188, %v2187
        %v2214 = vpack.c.b16 %v2190, %v2189
        %v2215 = vpack.c.b16 %v2192, %v2191
        %v2216 = vpack.c.b16 %v2194, %v2193
        %v2217 = vpack.c.b16 %v2196, %v2195
        %v2218 = vpack.c.b16 %v2198, %v2197
        %v2219 = vpack.c.b16 %v2200, %v2199
        %v2220 = vpack.c.b16 %v2202, %v2201
        %v2221 = vpack.c.b16 %v2204, %v2203
        %v2222 = vpack.c.b16 %v2206, %v2205
        %2223 = vrot.lane.b32.xlu0 %v2207, 8
        %v2224 = vpop.permute.xlu0 %2223
        %2225 = vrot.lane.b32.xlu0 %v2208, 8
        %v2226 = vpop.permute.xlu0 %2225
        %2227 = vrot.lane.b32.xlu0 %v2209, 8
        %v2228 = vpop.permute.xlu0 %2227
        %2229 = vrot.lane.b32.xlu0 %v2210, 8
        %v2230 = vpop.permute.xlu0 %2229
        %2231 = vrot.lane.b32.xlu0 %v2211, 8
        %v2232 = vpop.permute.xlu0 %2231
        %2233 = vrot.lane.b32.xlu0 %v2212, 8
        %v2234 = vpop.permute.xlu0 %2233
        %2235 = vrot.lane.b32.xlu0 %v2213, 8
        %v2236 = vpop.permute.xlu0 %2235
        %2237 = vrot.lane.b32.xlu0 %v2214, 8
        %v2238 = vpop.permute.xlu0 %2237
        %2239 = vrot.lane.b32.xlu0 %v2215, 8
        %v2240 = vpop.permute.xlu0 %2239
        %2241 = vrot.lane.b32.xlu0 %v2216, 8
        %v2242 = vpop.permute.xlu0 %2241
        %2243 = vrot.lane.b32.xlu0 %v2217, 8
        %v2244 = vpop.permute.xlu0 %2243
        %2245 = vrot.lane.b32.xlu0 %v2218, 8
        %v2246 = vpop.permute.xlu0 %2245
        %2247 = vrot.lane.b32.xlu0 %v2219, 8
        %v2248 = vpop.permute.xlu0 %2247
        %2249 = vrot.lane.b32.xlu0 %v2220, 8
        %v2250 = vpop.permute.xlu0 %2249
        %2251 = vrot.lane.b32.xlu0 %v2221, 8
        %v2252 = vpop.permute.xlu0 %2251
        %2253 = vrot.lane.b32.xlu0 %v2222, 8
        %v2254 = vpop.permute.xlu0 %2253
        %v2271 = vunpack.c.l.b16 %v814
        %v2272 = vunpack.c.l.b16 %v815
        %v2273 = vunpack.c.l.b16 %v816
        %v2274 = vunpack.c.l.b16 %v817
        %v2275 = vunpack.c.l.b16 %v818
        %v2276 = vunpack.c.l.b16 %v819
        %v2277 = vunpack.c.l.b16 %v820
        %v2278 = vunpack.c.l.b16 %v821
        %v2279 = vunpack.c.l.b16 %v822
        %v2280 = vunpack.c.l.b16 %v823
        %v2281 = vunpack.c.l.b16 %v824
        %v2282 = vunpack.c.l.b16 %v825
        %v2283 = vunpack.c.l.b16 %v826
        %v2284 = vunpack.c.l.b16 %v827
        %v2285 = vunpack.c.l.b16 %v828
        %v2286 = vunpack.c.l.b16 %v829
        %v2287 = vunpack.c.l.b16 %v830
        %v2288 = vunpack.c.l.b16 %v831
        %v2289 = vunpack.c.l.b16 %v832
        %v2290 = vunpack.c.l.b16 %v833
        %v2291 = vunpack.c.l.b16 %v834
        %v2292 = vunpack.c.l.b16 %v835
        %v2293 = vunpack.c.l.b16 %v836
        %v2294 = vunpack.c.l.b16 %v837
        %v2295 = vunpack.c.l.b16 %v838
        %v2296 = vunpack.c.l.b16 %v839
        %v2297 = vunpack.c.l.b16 %v840
        %v2298 = vunpack.c.l.b16 %v841
        %v2299 = vunpack.c.l.b16 %v842
        %v2300 = vunpack.c.l.b16 %v843
        %v2301 = vunpack.c.l.b16 %v844
        %v2302 = vunpack.c.l.b16 %v845
        %v2303 = vpack.c.b16 %v2272, %v2271
        %v2304 = vpack.c.b16 %v2274, %v2273
        %v2305 = vpack.c.b16 %v2276, %v2275
        %v2306 = vpack.c.b16 %v2278, %v2277
        %v2307 = vpack.c.b16 %v2280, %v2279
        %v2308 = vpack.c.b16 %v2282, %v2281
        %v2309 = vpack.c.b16 %v2284, %v2283
        %v2310 = vpack.c.b16 %v2286, %v2285
        %v2311 = vpack.c.b16 %v2288, %v2287
        %v2312 = vpack.c.b16 %v2290, %v2289
        %v2313 = vpack.c.b16 %v2292, %v2291
        %v2314 = vpack.c.b16 %v2294, %v2293
        %v2315 = vpack.c.b16 %v2296, %v2295
        %v2316 = vpack.c.b16 %v2298, %v2297
        %v2317 = vpack.c.b16 %v2300, %v2299
        %v2318 = vpack.c.b16 %v2302, %v2301
        %2319 = vrot.lane.b32.xlu0 %v2303, 12
        %v2320 = vpop.permute.xlu0 %2319
        %2321 = vrot.lane.b32.xlu0 %v2304, 12
        %v2322 = vpop.permute.xlu0 %2321
        %2323 = vrot.lane.b32.xlu0 %v2305, 12
        %v2324 = vpop.permute.xlu0 %2323
        %2325 = vrot.lane.b32.xlu0 %v2306, 12
        %v2326 = vpop.permute.xlu0 %2325
        %2327 = vrot.lane.b32.xlu0 %v2307, 12
        %v2328 = vpop.permute.xlu0 %2327
        %2329 = vrot.lane.b32.xlu0 %v2308, 12
        %v2330 = vpop.permute.xlu0 %2329
        %2331 = vrot.lane.b32.xlu0 %v2309, 12
        %v2332 = vpop.permute.xlu0 %2331
        %2333 = vrot.lane.b32.xlu0 %v2310, 12
        %v2334 = vpop.permute.xlu0 %2333
        %2335 = vrot.lane.b32.xlu0 %v2311, 12
        %v2336 = vpop.permute.xlu0 %2335
        %2337 = vrot.lane.b32.xlu0 %v2312, 12
        %v2338 = vpop.permute.xlu0 %2337
        %2339 = vrot.lane.b32.xlu0 %v2313, 12
        %v2340 = vpop.permute.xlu0 %2339
        %2341 = vrot.lane.b32.xlu0 %v2314, 12
        %v2342 = vpop.permute.xlu0 %2341
        %2343 = vrot.lane.b32.xlu0 %v2315, 12
        %v2344 = vpop.permute.xlu0 %2343
        %2345 = vrot.lane.b32.xlu0 %v2316, 12
        %v2346 = vpop.permute.xlu0 %2345
        %2347 = vrot.lane.b32.xlu0 %v2317, 12
        %v2348 = vpop.permute.xlu0 %2347
        %2349 = vrot.lane.b32.xlu0 %v2318, 12
        %v2350 = vpop.permute.xlu0 %2349
        %v2351 = vunpack.c.l.b16 %v875
        %v2352 = vunpack.c.l.b16 %v885
        %v2353 = vunpack.c.l.b16 %v899
        %v2354 = vunpack.c.l.b16 %v909
        %v2355 = vunpack.c.l.b16 %v923
        %v2356 = vunpack.c.l.b16 %v933
        %v2357 = vunpack.c.l.b16 %v947
        %v2358 = vunpack.c.l.b16 %v957
        %v2359 = vunpack.c.l.b16 %v971
        %v2360 = vunpack.c.l.b16 %v981
        %v2361 = vunpack.c.l.b16 %v995
        %v2362 = vunpack.c.l.b16 %v1005
        %v2363 = vunpack.c.l.b16 %v1019
        %v2364 = vunpack.c.l.b16 %v1029
        %v2365 = vunpack.c.l.b16 %v1043
        %v2366 = vunpack.c.l.b16 %v1053
        %v2367 = vunpack.c.l.b16 %v1067
        %v2368 = vunpack.c.l.b16 %v1077
        %v2369 = vunpack.c.l.b16 %v1091
        %v2370 = vunpack.c.l.b16 %v1101
        %v2371 = vunpack.c.l.b16 %v1115
        %v2372 = vunpack.c.l.b16 %v1125
        %v2373 = vunpack.c.l.b16 %v1139
        %v2374 = vunpack.c.l.b16 %v1149
        %v2375 = vunpack.c.l.b16 %v1163
        %v2376 = vunpack.c.l.b16 %v1173
        %v2377 = vunpack.c.l.b16 %v1187
        %v2378 = vunpack.c.l.b16 %v1197
        %v2379 = vunpack.c.l.b16 %v1211
        %v2380 = vunpack.c.l.b16 %v1221
        %v2381 = vunpack.c.l.b16 %v1235
        %v2382 = vunpack.c.l.b16 %v1245
        %v2383 = vpack.c.b16 %v2352, %v2351
        %v2384 = vpack.c.b16 %v2354, %v2353
        %v2385 = vpack.c.b16 %v2356, %v2355
        %v2386 = vpack.c.b16 %v2358, %v2357
        %v2387 = vpack.c.b16 %v2360, %v2359
        %v2388 = vpack.c.b16 %v2362, %v2361
        %v2389 = vpack.c.b16 %v2364, %v2363
        %v2390 = vpack.c.b16 %v2366, %v2365
        %v2391 = vpack.c.b16 %v2368, %v2367
        %v2392 = vpack.c.b16 %v2370, %v2369
        %v2393 = vpack.c.b16 %v2372, %v2371
        %v2394 = vpack.c.b16 %v2374, %v2373
        %v2395 = vpack.c.b16 %v2376, %v2375
        %v2396 = vpack.c.b16 %v2378, %v2377
        %v2397 = vpack.c.b16 %v2380, %v2379
        %v2398 = vpack.c.b16 %v2382, %v2381
        %2399 = vrot.lane.b32.xlu0 %v2383, 16
        %v2400 = vpop.permute.xlu0 %2399
        %2401 = vrot.lane.b32.xlu0 %v2384, 16
        %v2402 = vpop.permute.xlu0 %2401
        %2403 = vrot.lane.b32.xlu0 %v2385, 16
        %v2404 = vpop.permute.xlu0 %2403
        %2405 = vrot.lane.b32.xlu0 %v2386, 16
        %v2406 = vpop.permute.xlu0 %2405
        %2407 = vrot.lane.b32.xlu0 %v2387, 16
        %v2408 = vpop.permute.xlu0 %2407
        %2409 = vrot.lane.b32.xlu0 %v2388, 16
        %v2410 = vpop.permute.xlu0 %2409
        %2411 = vrot.lane.b32.xlu0 %v2389, 16
        %v2412 = vpop.permute.xlu0 %2411
        %2413 = vrot.lane.b32.xlu0 %v2390, 16
        %v2414 = vpop.permute.xlu0 %2413
        %2415 = vrot.lane.b32.xlu0 %v2391, 16
        %v2416 = vpop.permute.xlu0 %2415
        %2417 = vrot.lane.b32.xlu0 %v2392, 16
        %v2418 = vpop.permute.xlu0 %2417
        %2419 = vrot.lane.b32.xlu0 %v2393, 16
        %v2420 = vpop.permute.xlu0 %2419
        %2421 = vrot.lane.b32.xlu0 %v2394, 16
        %v2422 = vpop.permute.xlu0 %2421
        %2423 = vrot.lane.b32.xlu0 %v2395, 16
        %v2424 = vpop.permute.xlu0 %2423
        %2425 = vrot.lane.b32.xlu0 %v2396, 16
        %v2426 = vpop.permute.xlu0 %2425
        %2427 = vrot.lane.b32.xlu0 %v2397, 16
        %v2428 = vpop.permute.xlu0 %2427
        %2429 = vrot.lane.b32.xlu0 %v2398, 16
        %v2430 = vpop.permute.xlu0 %2429
        %v2431 = vunpack.c.l.b16 %v1313
        %v2432 = vunpack.c.l.b16 %v1316
        %v2433 = vunpack.c.l.b16 %v1320
        %v2434 = vunpack.c.l.b16 %v1323
        %v2435 = vunpack.c.l.b16 %v1327
        %v2436 = vunpack.c.l.b16 %v1330
        %v2437 = vunpack.c.l.b16 %v1334
        %v2438 = vunpack.c.l.b16 %v1337
        %v2439 = vunpack.c.l.b16 %v1341
        %v2440 = vunpack.c.l.b16 %v1344
        %v2441 = vunpack.c.l.b16 %v1348
        %v2442 = vunpack.c.l.b16 %v1351
        %v2443 = vunpack.c.l.b16 %v1355
        %v2444 = vunpack.c.l.b16 %v1358
        %v2445 = vunpack.c.l.b16 %v1362
        %v2446 = vunpack.c.l.b16 %v1365
        %v2447 = vunpack.c.l.b16 %v1369
        %v2448 = vunpack.c.l.b16 %v1372
        %v2449 = vunpack.c.l.b16 %v1376
        %v2450 = vunpack.c.l.b16 %v1379
        %v2451 = vunpack.c.l.b16 %v1383
        %v2452 = vunpack.c.l.b16 %v1386
        %v2453 = vunpack.c.l.b16 %v1390
        %v2454 = vunpack.c.l.b16 %v1393
        %v2455 = vunpack.c.l.b16 %v1397
        %v2456 = vunpack.c.l.b16 %v1400
        %v2457 = vunpack.c.l.b16 %v1404
        %v2458 = vunpack.c.l.b16 %v1407
        %v2459 = vunpack.c.l.b16 %v1411
        %v2460 = vunpack.c.l.b16 %v1414
        %v2461 = vunpack.c.l.b16 %v1418
        %v2462 = vunpack.c.l.b16 %v1421
        %v2463 = vpack.c.b16 %v2432, %v2431
        %v2464 = vpack.c.b16 %v2434, %v2433
        %v2465 = vpack.c.b16 %v2436, %v2435
        %v2466 = vpack.c.b16 %v2438, %v2437
        %v2467 = vpack.c.b16 %v2440, %v2439
        %v2468 = vpack.c.b16 %v2442, %v2441
        %v2469 = vpack.c.b16 %v2444, %v2443
        %v2470 = vpack.c.b16 %v2446, %v2445
        %v2471 = vpack.c.b16 %v2448, %v2447
        %v2472 = vpack.c.b16 %v2450, %v2449
        %v2473 = vpack.c.b16 %v2452, %v2451
        %v2474 = vpack.c.b16 %v2454, %v2453
        %v2475 = vpack.c.b16 %v2456, %v2455
        %v2476 = vpack.c.b16 %v2458, %v2457
        %v2477 = vpack.c.b16 %v2460, %v2459
        %v2478 = vpack.c.b16 %v2462, %v2461
        %2479 = vrot.lane.b32.xlu0 %v2463, 20
        %v2480 = vpop.permute.xlu0 %2479
        %2481 = vrot.lane.b32.xlu0 %v2464, 20
        %v2482 = vpop.permute.xlu0 %2481
        %2483 = vrot.lane.b32.xlu0 %v2465, 20
        %v2484 = vpop.permute.xlu0 %2483
        %2485 = vrot.lane.b32.xlu0 %v2466, 20
        %v2486 = vpop.permute.xlu0 %2485
        %2487 = vrot.lane.b32.xlu0 %v2467, 20
        %v2488 = vpop.permute.xlu0 %2487
        %2489 = vrot.lane.b32.xlu0 %v2468, 20
        %v2490 = vpop.permute.xlu0 %2489
        %2491 = vrot.lane.b32.xlu0 %v2469, 20
        %v2492 = vpop.permute.xlu0 %2491
        %2493 = vrot.lane.b32.xlu0 %v2470, 20
        %v2494 = vpop.permute.xlu0 %2493
        %2495 = vrot.lane.b32.xlu0 %v2471, 20
        %v2496 = vpop.permute.xlu0 %2495
        %2497 = vrot.lane.b32.xlu0 %v2472, 20
        %v2498 = vpop.permute.xlu0 %2497
        %2499 = vrot.lane.b32.xlu0 %v2473, 20
        %v2500 = vpop.permute.xlu0 %2499
        %2501 = vrot.lane.b32.xlu0 %v2474, 20
        %v2502 = vpop.permute.xlu0 %2501
        %2503 = vrot.lane.b32.xlu0 %v2475, 20
        %v2504 = vpop.permute.xlu0 %2503
        %2505 = vrot.lane.b32.xlu0 %v2476, 20
        %v2506 = vpop.permute.xlu0 %2505
        %2507 = vrot.lane.b32.xlu0 %v2477, 20
        %v2508 = vpop.permute.xlu0 %2507
        %2509 = vrot.lane.b32.xlu0 %v2478, 20
        %v2510 = vpop.permute.xlu0 %2509
        %v2527 = vunpack.c.l.b16 %v1423
        %v2528 = vunpack.c.l.b16 %v1424
        %v2529 = vunpack.c.l.b16 %v1425
        %v2530 = vunpack.c.l.b16 %v1426
        %v2531 = vunpack.c.l.b16 %v1427
        %v2532 = vunpack.c.l.b16 %v1428
        %v2533 = vunpack.c.l.b16 %v1429
        %v2534 = vunpack.c.l.b16 %v1430
        %v2535 = vunpack.c.l.b16 %v1431
        %v2536 = vunpack.c.l.b16 %v1432
        %v2537 = vunpack.c.l.b16 %v1433
        %v2538 = vunpack.c.l.b16 %v1434
        %v2539 = vunpack.c.l.b16 %v1435
        %v2540 = vunpack.c.l.b16 %v1436
        %v2541 = vunpack.c.l.b16 %v1437
        %v2542 = vunpack.c.l.b16 %v1438
        %v2543 = vunpack.c.l.b16 %v1439
        %v2544 = vunpack.c.l.b16 %v1440
        %v2545 = vunpack.c.l.b16 %v1441
        %v2546 = vunpack.c.l.b16 %v1442
        %v2547 = vunpack.c.l.b16 %v1443
        %v2548 = vunpack.c.l.b16 %v1444
        %v2549 = vunpack.c.l.b16 %v1445
        %v2550 = vunpack.c.l.b16 %v1446
        %v2551 = vunpack.c.l.b16 %v1447
        %v2552 = vunpack.c.l.b16 %v1448
        %v2553 = vunpack.c.l.b16 %v1449
        %v2554 = vunpack.c.l.b16 %v1450
        %v2555 = vunpack.c.l.b16 %v1451
        %v2556 = vunpack.c.l.b16 %v1452
        %v2557 = vunpack.c.l.b16 %v1453
        %v2558 = vunpack.c.l.b16 %v1454
        %v2559 = vpack.c.b16 %v2528, %v2527
        %v2560 = vpack.c.b16 %v2530, %v2529
        %v2561 = vpack.c.b16 %v2532, %v2531
        %v2562 = vpack.c.b16 %v2534, %v2533
        %v2563 = vpack.c.b16 %v2536, %v2535
        %v2564 = vpack.c.b16 %v2538, %v2537
        %v2565 = vpack.c.b16 %v2540, %v2539
        %v2566 = vpack.c.b16 %v2542, %v2541
        %v2567 = vpack.c.b16 %v2544, %v2543
        %v2568 = vpack.c.b16 %v2546, %v2545
        %v2569 = vpack.c.b16 %v2548, %v2547
        %v2570 = vpack.c.b16 %v2550, %v2549
        %v2571 = vpack.c.b16 %v2552, %v2551
        %v2572 = vpack.c.b16 %v2554, %v2553
        %v2573 = vpack.c.b16 %v2556, %v2555
        %v2574 = vpack.c.b16 %v2558, %v2557
        %2575 = vrot.lane.b32.xlu0 %v2559, 24
        %v2576 = vpop.permute.xlu0 %2575
        %2577 = vrot.lane.b32.xlu0 %v2560, 24
        %v2578 = vpop.permute.xlu0 %2577
        %2579 = vrot.lane.b32.xlu0 %v2561, 24
        %v2580 = vpop.permute.xlu0 %2579
        %2581 = vrot.lane.b32.xlu0 %v2562, 24
        %v2582 = vpop.permute.xlu0 %2581
        %2583 = vrot.lane.b32.xlu0 %v2563, 24
        %v2584 = vpop.permute.xlu0 %2583
        %2585 = vrot.lane.b32.xlu0 %v2564, 24
        %v2586 = vpop.permute.xlu0 %2585
        %2587 = vrot.lane.b32.xlu0 %v2565, 24
        %v2588 = vpop.permute.xlu0 %2587
        %2589 = vrot.lane.b32.xlu0 %v2566, 24
        %v2590 = vpop.permute.xlu0 %2589
        %2591 = vrot.lane.b32.xlu0 %v2567, 24
        %v2592 = vpop.permute.xlu0 %2591
        %2593 = vrot.lane.b32.xlu0 %v2568, 24
        %v2594 = vpop.permute.xlu0 %2593
        %2595 = vrot.lane.b32.xlu0 %v2569, 24
        %v2596 = vpop.permute.xlu0 %2595
        %2597 = vrot.lane.b32.xlu0 %v2570, 24
        %v2598 = vpop.permute.xlu0 %2597
        %2599 = vrot.lane.b32.xlu0 %v2571, 24
        %v2600 = vpop.permute.xlu0 %2599
        %2601 = vrot.lane.b32.xlu0 %v2572, 24
        %v2602 = vpop.permute.xlu0 %2601
        %2603 = vrot.lane.b32.xlu0 %v2573, 24
        %v2604 = vpop.permute.xlu0 %2603
        %2605 = vrot.lane.b32.xlu0 %v2574, 24
        %v2606 = vpop.permute.xlu0 %2605
        %v2607 = vunpack.c.l.b16 %v1484
        %v2608 = vunpack.c.l.b16 %v1494
        %v2609 = vunpack.c.l.b16 %v1508
        %v2610 = vunpack.c.l.b16 %v1518
        %v2611 = vunpack.c.l.b16 %v1532
        %v2612 = vunpack.c.l.b16 %v1542
        %v2613 = vunpack.c.l.b16 %v1556
        %v2614 = vunpack.c.l.b16 %v1566
        %v2615 = vunpack.c.l.b16 %v1580
        %v2616 = vunpack.c.l.b16 %v1590
        %v2617 = vunpack.c.l.b16 %v1604
        %v2618 = vunpack.c.l.b16 %v1614
        %v2619 = vunpack.c.l.b16 %v1628
        %v2620 = vunpack.c.l.b16 %v1638
        %v2621 = vunpack.c.l.b16 %v1652
        %v2622 = vunpack.c.l.b16 %v1662
        %v2623 = vunpack.c.l.b16 %v1676
        %v2624 = vunpack.c.l.b16 %v1686
        %v2625 = vunpack.c.l.b16 %v1700
        %v2626 = vunpack.c.l.b16 %v1710
        %v2627 = vunpack.c.l.b16 %v1724
        %v2628 = vunpack.c.l.b16 %v1734
        %v2629 = vunpack.c.l.b16 %v1748
        %v2630 = vunpack.c.l.b16 %v1758
        %v2631 = vunpack.c.l.b16 %v1772
        %v2632 = vunpack.c.l.b16 %v1782
        %v2633 = vunpack.c.l.b16 %v1796
        %v2634 = vunpack.c.l.b16 %v1806
        %v2635 = vunpack.c.l.b16 %v1820
        %v2636 = vunpack.c.l.b16 %v1830
        %v2637 = vunpack.c.l.b16 %v1844
        %v2638 = vunpack.c.l.b16 %v1854
        %v2639 = vpack.c.b16 %v2608, %v2607
        %v2640 = vpack.c.b16 %v2610, %v2609
        %v2641 = vpack.c.b16 %v2612, %v2611
        %v2642 = vpack.c.b16 %v2614, %v2613
        %v2643 = vpack.c.b16 %v2616, %v2615
        %v2644 = vpack.c.b16 %v2618, %v2617
        %v2645 = vpack.c.b16 %v2620, %v2619
        %v2646 = vpack.c.b16 %v2622, %v2621
        %v2647 = vpack.c.b16 %v2624, %v2623
        %v2648 = vpack.c.b16 %v2626, %v2625
        %v2649 = vpack.c.b16 %v2628, %v2627
        %v2650 = vpack.c.b16 %v2630, %v2629
        %v2651 = vpack.c.b16 %v2632, %v2631
        %v2652 = vpack.c.b16 %v2634, %v2633
        %v2653 = vpack.c.b16 %v2636, %v2635
        %v2654 = vpack.c.b16 %v2638, %v2637
        %2655 = vrot.lane.b32.xlu0 %v2639, 28
        %v2656 = vpop.permute.xlu0 %2655
        %2657 = vrot.lane.b32.xlu0 %v2640, 28
        %v2658 = vpop.permute.xlu0 %2657
        %2659 = vrot.lane.b32.xlu0 %v2641, 28
        %v2660 = vpop.permute.xlu0 %2659
        %2661 = vrot.lane.b32.xlu0 %v2642, 28
        %v2662 = vpop.permute.xlu0 %2661
        %2663 = vrot.lane.b32.xlu0 %v2643, 28
        %v2664 = vpop.permute.xlu0 %2663
        %2665 = vrot.lane.b32.xlu0 %v2644, 28
        %v2666 = vpop.permute.xlu0 %2665
        %2667 = vrot.lane.b32.xlu0 %v2645, 28
        %v2668 = vpop.permute.xlu0 %2667
        %2669 = vrot.lane.b32.xlu0 %v2646, 28
        %v2670 = vpop.permute.xlu0 %2669
        %2671 = vrot.lane.b32.xlu0 %v2647, 28
        %v2672 = vpop.permute.xlu0 %2671
        %2673 = vrot.lane.b32.xlu0 %v2648, 28
        %v2674 = vpop.permute.xlu0 %2673
        %2675 = vrot.lane.b32.xlu0 %v2649, 28
        %v2676 = vpop.permute.xlu0 %2675
        %2677 = vrot.lane.b32.xlu0 %v2650, 28
        %v2678 = vpop.permute.xlu0 %2677
        %2679 = vrot.lane.b32.xlu0 %v2651, 28
        %v2680 = vpop.permute.xlu0 %2679
        %2681 = vrot.lane.b32.xlu0 %v2652, 28
        %v2682 = vpop.permute.xlu0 %2681
        %2683 = vrot.lane.b32.xlu0 %v2653, 28
        %v2684 = vpop.permute.xlu0 %2683
        %2685 = vrot.lane.b32.xlu0 %v2654, 28
        %v2686 = vpop.permute.xlu0 %2685
        %v2687 = vunpack.c.l.b16 %v1922
        %v2688 = vunpack.c.l.b16 %v1925
        %v2689 = vunpack.c.l.b16 %v1929
        %v2690 = vunpack.c.l.b16 %v1932
        %v2691 = vunpack.c.l.b16 %v1936
        %v2692 = vunpack.c.l.b16 %v1939
        %v2693 = vunpack.c.l.b16 %v1943
        %v2694 = vunpack.c.l.b16 %v1946
        %v2695 = vunpack.c.l.b16 %v1950
        %v2696 = vunpack.c.l.b16 %v1953
        %v2697 = vunpack.c.l.b16 %v1957
        %v2698 = vunpack.c.l.b16 %v1960
        %v2699 = vunpack.c.l.b16 %v1964
        %v2700 = vunpack.c.l.b16 %v1967
        %v2701 = vunpack.c.l.b16 %v1971
        %v2702 = vunpack.c.l.b16 %v1974
        %v2703 = vunpack.c.l.b16 %v1978
        %v2704 = vunpack.c.l.b16 %v1981
        %v2705 = vunpack.c.l.b16 %v1985
        %v2706 = vunpack.c.l.b16 %v1988
        %v2707 = vunpack.c.l.b16 %v1992
        %v2708 = vunpack.c.l.b16 %v1995
        %v2709 = vunpack.c.l.b16 %v1999
        %v2710 = vunpack.c.l.b16 %v2002
        %v2711 = vunpack.c.l.b16 %v2006
        %v2712 = vunpack.c.l.b16 %v2009
        %v2713 = vunpack.c.l.b16 %v2013
        %v2714 = vunpack.c.l.b16 %v2016
        %v2715 = vunpack.c.l.b16 %v2020
        %v2716 = vunpack.c.l.b16 %v2023
        %v2717 = vunpack.c.l.b16 %v2027
        %v2718 = vunpack.c.l.b16 %v2030
        %v2719 = vpack.c.b16 %v2688, %v2687
        %v2720 = vpack.c.b16 %v2690, %v2689
        %v2721 = vpack.c.b16 %v2692, %v2691
        %v2722 = vpack.c.b16 %v2694, %v2693
        %v2723 = vpack.c.b16 %v2696, %v2695
        %v2724 = vpack.c.b16 %v2698, %v2697
        %v2725 = vpack.c.b16 %v2700, %v2699
        %v2726 = vpack.c.b16 %v2702, %v2701
        %v2727 = vpack.c.b16 %v2704, %v2703
        %v2728 = vpack.c.b16 %v2706, %v2705
        %v2729 = vpack.c.b16 %v2708, %v2707
        %v2730 = vpack.c.b16 %v2710, %v2709
        %v2731 = vpack.c.b16 %v2712, %v2711
        %v2732 = vpack.c.b16 %v2714, %v2713
        %v2733 = vpack.c.b16 %v2716, %v2715
        %v2734 = vpack.c.b16 %v2718, %v2717
        %2735 = vrot.lane.b32.xlu0 %v2719, 32
        %v2736 = vpop.permute.xlu0 %2735
        %2737 = vrot.lane.b32.xlu0 %v2720, 32
        %v2738 = vpop.permute.xlu0 %2737
        %2739 = vrot.lane.b32.xlu0 %v2721, 32
        %v2740 = vpop.permute.xlu0 %2739
        %2741 = vrot.lane.b32.xlu0 %v2722, 32
        %v2742 = vpop.permute.xlu0 %2741
        %2743 = vrot.lane.b32.xlu0 %v2723, 32
        %v2744 = vpop.permute.xlu0 %2743
        %2745 = vrot.lane.b32.xlu0 %v2724, 32
        %v2746 = vpop.permute.xlu0 %2745
        %2747 = vrot.lane.b32.xlu0 %v2725, 32
        %v2748 = vpop.permute.xlu0 %2747
        %2749 = vrot.lane.b32.xlu0 %v2726, 32
        %v2750 = vpop.permute.xlu0 %2749
        %2751 = vrot.lane.b32.xlu0 %v2727, 32
        %v2752 = vpop.permute.xlu0 %2751
        %2753 = vrot.lane.b32.xlu0 %v2728, 32
        %v2754 = vpop.permute.xlu0 %2753
        %2755 = vrot.lane.b32.xlu0 %v2729, 32
        %v2756 = vpop.permute.xlu0 %2755
        %2757 = vrot.lane.b32.xlu0 %v2730, 32
        %v2758 = vpop.permute.xlu0 %2757
        %2759 = vrot.lane.b32.xlu0 %v2731, 32
        %v2760 = vpop.permute.xlu0 %2759
        %2761 = vrot.lane.b32.xlu0 %v2732, 32
        %v2762 = vpop.permute.xlu0 %2761
        %2763 = vrot.lane.b32.xlu0 %v2733, 32
        %v2764 = vpop.permute.xlu0 %2763
        %2765 = vrot.lane.b32.xlu0 %v2734, 32
        %v2766 = vpop.permute.xlu0 %2765
        %vm2767 = vcmask 31744
        %v2770 = vsel %vm2767, %v2079, %v2144
        %v2773 = vsel %vm2767, %v2080, %v2146
        %v2776 = vsel %vm2767, %v2081, %v2148
        %v2779 = vsel %vm2767, %v2082, %v2150
        %v2782 = vsel %vm2767, %v2083, %v2152
        %v2785 = vsel %vm2767, %v2084, %v2154
        %v2788 = vsel %vm2767, %v2085, %v2156
        %v2791 = vsel %vm2767, %v2086, %v2158
        %v2794 = vsel %vm2767, %v2087, %v2160
        %v2797 = vsel %vm2767, %v2088, %v2162
        %v2800 = vsel %vm2767, %v2089, %v2164
        %v2803 = vsel %vm2767, %v2090, %v2166
        %v2806 = vsel %vm2767, %v2091, %v2168
        %v2809 = vsel %vm2767, %v2092, %v2170
        %v2812 = vsel %vm2767, %v2093, %v2172
        %v2815 = vsel %vm2767, %v2094, %v2174
        %vm2816 = vcmask 64512
        %v2818 = vsel %vm2816, %v2770, %v2224
        %v2820 = vsel %vm2816, %v2773, %v2226
        %v2822 = vsel %vm2816, %v2776, %v2228
        %v2824 = vsel %vm2816, %v2779, %v2230
        %v2826 = vsel %vm2816, %v2782, %v2232
        %v2828 = vsel %vm2816, %v2785, %v2234
        %v2830 = vsel %vm2816, %v2788, %v2236
        %v2832 = vsel %vm2816, %v2791, %v2238
        %v2834 = vsel %vm2816, %v2794, %v2240
        %v2836 = vsel %vm2816, %v2797, %v2242
        %v2838 = vsel %vm2816, %v2800, %v2244
        %v2840 = vsel %vm2816, %v2803, %v2246
        %v2842 = vsel %vm2816, %v2806, %v2248
        %v2844 = vsel %vm2816, %v2809, %v2250
        %v2846 = vsel %vm2816, %v2812, %v2252
        %v2848 = vsel %vm2816, %v2815, %v2254
        %vm2849 = vcmask 97280
        %v2851 = vsel %vm2849, %v2818, %v2320
        %v2853 = vsel %vm2849, %v2820, %v2322
        %v2855 = vsel %vm2849, %v2822, %v2324
        %v2857 = vsel %vm2849, %v2824, %v2326
        %v2859 = vsel %vm2849, %v2826, %v2328
        %v2861 = vsel %vm2849, %v2828, %v2330
        %v2863 = vsel %vm2849, %v2830, %v2332
        %v2865 = vsel %vm2849, %v2832, %v2334
        %v2867 = vsel %vm2849, %v2834, %v2336
        %v2869 = vsel %vm2849, %v2836, %v2338
        %v2871 = vsel %vm2849, %v2838, %v2340
        %v2873 = vsel %vm2849, %v2840, %v2342
        %v2875 = vsel %vm2849, %v2842, %v2344
        %v2877 = vsel %vm2849, %v2844, %v2346
        %v2879 = vsel %vm2849, %v2846, %v2348
        %v2881 = vsel %vm2849, %v2848, %v2350
        %vm2882 = vcmask 130048
        %v2884 = vsel %vm2882, %v2851, %v2400
        %v2886 = vsel %vm2882, %v2853, %v2402
        %v2888 = vsel %vm2882, %v2855, %v2404
        %v2890 = vsel %vm2882, %v2857, %v2406
        %v2892 = vsel %vm2882, %v2859, %v2408
        %v2894 = vsel %vm2882, %v2861, %v2410
        %v2896 = vsel %vm2882, %v2863, %v2412
        %v2898 = vsel %vm2882, %v2865, %v2414
        %v2900 = vsel %vm2882, %v2867, %v2416
        %v2902 = vsel %vm2882, %v2869, %v2418
        %v2904 = vsel %vm2882, %v2871, %v2420
        %v2906 = vsel %vm2882, %v2873, %v2422
        %v2908 = vsel %vm2882, %v2875, %v2424
        %v2910 = vsel %vm2882, %v2877, %v2426
        %v2912 = vsel %vm2882, %v2879, %v2428
        %v2914 = vsel %vm2882, %v2881, %v2430
        %vm2915 = vcmask 162816
        %v2917 = vsel %vm2915, %v2884, %v2480
        %v2919 = vsel %vm2915, %v2886, %v2482
        %v2921 = vsel %vm2915, %v2888, %v2484
        %v2923 = vsel %vm2915, %v2890, %v2486
        %v2925 = vsel %vm2915, %v2892, %v2488
        %v2927 = vsel %vm2915, %v2894, %v2490
        %v2929 = vsel %vm2915, %v2896, %v2492
        %v2931 = vsel %vm2915, %v2898, %v2494
        %v2933 = vsel %vm2915, %v2900, %v2496
        %v2935 = vsel %vm2915, %v2902, %v2498
        %v2937 = vsel %vm2915, %v2904, %v2500
        %v2939 = vsel %vm2915, %v2906, %v2502
        %v2941 = vsel %vm2915, %v2908, %v2504
        %v2943 = vsel %vm2915, %v2910, %v2506
        %v2945 = vsel %vm2915, %v2912, %v2508
        %v2947 = vsel %vm2915, %v2914, %v2510
        %vm2948 = vcmask 195584
        %v2950 = vsel %vm2948, %v2917, %v2576
        %v2952 = vsel %vm2948, %v2919, %v2578
        %v2954 = vsel %vm2948, %v2921, %v2580
        %v2956 = vsel %vm2948, %v2923, %v2582
        %v2958 = vsel %vm2948, %v2925, %v2584
        %v2960 = vsel %vm2948, %v2927, %v2586
        %v2962 = vsel %vm2948, %v2929, %v2588
        %v2964 = vsel %vm2948, %v2931, %v2590
        %v2966 = vsel %vm2948, %v2933, %v2592
        %v2968 = vsel %vm2948, %v2935, %v2594
        %v2970 = vsel %vm2948, %v2937, %v2596
        %v2972 = vsel %vm2948, %v2939, %v2598
        %v2974 = vsel %vm2948, %v2941, %v2600
        %v2976 = vsel %vm2948, %v2943, %v2602
        %v2978 = vsel %vm2948, %v2945, %v2604
        %v2980 = vsel %vm2948, %v2947, %v2606
        %vm2981 = vcmask 228352
        %v2983 = vsel %vm2981, %v2950, %v2656
        %v2985 = vsel %vm2981, %v2952, %v2658
        %v2987 = vsel %vm2981, %v2954, %v2660
        %v2989 = vsel %vm2981, %v2956, %v2662
        %v2991 = vsel %vm2981, %v2958, %v2664
        %v2993 = vsel %vm2981, %v2960, %v2666
        %v2995 = vsel %vm2981, %v2962, %v2668
        %v2997 = vsel %vm2981, %v2964, %v2670
        %v2999 = vsel %vm2981, %v2966, %v2672
        %v3001 = vsel %vm2981, %v2968, %v2674
        %v3003 = vsel %vm2981, %v2970, %v2676
        %v3005 = vsel %vm2981, %v2972, %v2678
        %v3007 = vsel %vm2981, %v2974, %v2680
        %v3009 = vsel %vm2981, %v2976, %v2682
        %v3011 = vsel %vm2981, %v2978, %v2684
        %v3013 = vsel %vm2981, %v2980, %v2686
        %vm3014 = vcmask 261120
        %v3016 = vsel %vm3014, %v2983, %v2736
        %v3018 = vsel %vm3014, %v2985, %v2738
        %v3020 = vsel %vm3014, %v2987, %v2740
        %v3022 = vsel %vm3014, %v2989, %v2742
        %v3024 = vsel %vm3014, %v2991, %v2744
        %v3026 = vsel %vm3014, %v2993, %v2746
        %v3028 = vsel %vm3014, %v2995, %v2748
        %v3030 = vsel %vm3014, %v2997, %v2750
        %v3032 = vsel %vm3014, %v2999, %v2752
        %v3034 = vsel %vm3014, %v3001, %v2754
        %v3036 = vsel %vm3014, %v3003, %v2756
        %v3038 = vsel %vm3014, %v3005, %v2758
        %v3040 = vsel %vm3014, %v3007, %v2760
        %v3042 = vsel %vm3014, %v3009, %v2762
        %v3044 = vsel %vm3014, %v3011, %v2764
        %v3046 = vsel %vm3014, %v3013, %v2766
        %v3047 = vld [vmem:[%s1] sm:$0xf]
        %v3048 = vld [vmem:[%s1 + $0x4] sm:$0xf]
        %v3049 = vld [vmem:[%s1 + $0x8] sm:$0xf]
        %v3050 = vld [vmem:[%s1 + $0xc] sm:$0xf]
        %v3051 = vld [vmem:[%s1 + $0x10] sm:$0x3]
        %v3052 = vld [vmem:[%s2] sm:$0x1]
        %v3054 = vlaneseq
        %v3055 = vshrl.u32 %v3054, 7
        %v3056 = vsub.s32 0, %v3055
        %v3057 = vrot.slane %v3052, %v3056
        %v3064 = vunpack.c.l.b16 %v3047
        %v3065 = vunpack.c.l.b16 %v3048
        %v3066 = vunpack.c.l.b16 %v3049
        %v3067 = vunpack.c.l.b16 %v3050
        %v3068 = vunpack.c.l.b16 %v3051
        %v3069 = vpack.c.b16 %v3065, %v3064
        %v3070 = vpack.c.b16 %v3067, %v3066
        %v3071 = vpack.c.b16 %v3068, %v3068
        %vm3074 = vcmask 293888
        %v3075 = vsel %vm3074, %v3016, 0
        %v3077 = vsel %vm3074, %v3018, 0
        %v3079 = vsel %vm3074, %v3020, 0
        %v3081 = vsel %vm3074, %v3022, 0
        %v3083 = vsel %vm3074, %v3024, 0
        %v3085 = vsel %vm3074, %v3026, 0
        %v3087 = vsel %vm3074, %v3028, 0
        %v3089 = vsel %vm3074, %v3030, 0
        %v3091 = vsel %vm3074, %v3032, 0
        %v3093 = vsel %vm3074, %v3034, 0
        %v3095 = vsel %vm3074, %v3036, 0
        %v3097 = vsel %vm3074, %v3038, 0
        %v3099 = vsel %vm3074, %v3040, 0
        %v3101 = vsel %vm3074, %v3042, 0
        %v3103 = vsel %vm3074, %v3044, 0
        %v3105 = vsel %vm3074, %v3046, 0
        %vm3107 = vcmask 1041408
        %v3109 = vsel %vm3107, %v3071, 0
        %3111 = vmatprep.subr.bf16.mxu0 0
        %3112 = vmatpush1.bf16.msra.mxu0 %v3069
        %3113 = vmatprep.subr.bf16.mxu0 0
        %3114 = vmatpush1.bf16.msra.mxu0 %v3070
        %3115 = vmatprep.subr.bf16.mxu0 0
        %3116 = vmatpush1.bf16.msra.mxu0 %v3109
        %3117 = vmatprep.subr.bf16.mxu0 0
        %3118 = vmatpush1.bf16.msra.mxu0 0
        %3119 = vmatprep.subr.bf16.mxu0 0
        %3120 = vmatpush1.bf16.msra.mxu0 0
        %3121 = vmatprep.subr.bf16.mxu0 0
        %3122 = vmatpush1.bf16.msra.mxu0 0
        %3123 = vmatprep.subr.bf16.mxu0 0
        %3124 = vmatpush1.bf16.msra.mxu0 0
        %3125 = vmatprep.subr.bf16.mxu0 0
        %3126 = vmatpush1.bf16.msra.mxu0 0
        %3127 = vmatprep.subr.bf16.mxu0 0
        %3128 = vmatpush1.bf16.msra.mxu0 0
        %3129 = vmatprep.subr.bf16.mxu0 0
        %3130 = vmatpush1.bf16.msra.mxu0 0
        %3131 = vmatprep.subr.bf16.mxu0 0
        %3132 = vmatpush1.bf16.msra.mxu0 0
        %3133 = vmatprep.subr.bf16.mxu0 0
        %3134 = vmatpush1.bf16.msra.mxu0 0
        %3135 = vmatprep.subr.bf16.mxu0 0
        %3136 = vmatpush1.bf16.msra.mxu0 0
        %3137 = vmatprep.subr.bf16.mxu0 0
        %3138 = vmatpush1.bf16.msra.mxu0 0
        %3139 = vmatprep.subr.bf16.mxu0 0
        %3140 = vmatpush1.bf16.msra.mxu0 0
        %3141 = vmatprep.subr.bf16.mxu0 0
        %3142 = vmatpush1.bf16.msra.mxu0 0
        %3143 = vmatprep.mubr.bf16.mxu0 0
        %3144 = vmatmul.mubr.bf16.gmra.mrb[0].mxu0 %v3075
        %v3145 = vpop.f32.mrb[0].mxu0
        %v3146 = vadd.f32 %v3057, %v3145
        %v3147 = vpop.f32.mrb[0].mxu0
        %v3148 = vpop.f32.mrb[0].mxu0
        %v3149 = vadd.f32 %v3057, %v3148
        %v3150 = vpop.f32.mrb[0].mxu0
        %3151 = vmatprep.mubr.bf16.mxu0 0
        %3152 = vmatmul.mubr.bf16.gmra.mrb[0].mxu0 %v3077
        %v3153 = vpop.f32.mrb[0].mxu0
        %v3154 = vadd.f32 %v3057, %v3153
        %v3155 = vpop.f32.mrb[0].mxu0
        %v3156 = vpop.f32.mrb[0].mxu0
        %v3157 = vadd.f32 %v3057, %v3156
        %v3158 = vpop.f32.mrb[0].mxu0
        %3159 = vmatprep.mubr.bf16.mxu0 0
        %3160 = vmatmul.mubr.bf16.gmra.mrb[0].mxu0 %v3079
        %v3161 = vpop.f32.mrb[0].mxu0
        %v3162 = vadd.f32 %v3057, %v3161
        %v3163 = vpop.f32.mrb[0].mxu0
        %v3164 = vpop.f32.mrb[0].mxu0
        %v3165 = vadd.f32 %v3057, %v3164
        %v3166 = vpop.f32.mrb[0].mxu0
        %3167 = vmatprep.mubr.bf16.mxu0 0
        %3168 = vmatmul.mubr.bf16.gmra.mrb[0].mxu0 %v3081
        %v3169 = vpop.f32.mrb[0].mxu0
        %v3170 = vadd.f32 %v3057, %v3169
        %v3171 = vpop.f32.mrb[0].mxu0
        %v3172 = vpop.f32.mrb[0].mxu0
        %v3173 = vadd.f32 %v3057, %v3172
        %v3174 = vpop.f32.mrb[0].mxu0
        %3175 = vmatprep.mubr.bf16.mxu0 0
        %3176 = vmatmul.mubr.bf16.gmra.mrb[0].mxu0 %v3083
        %v3177 = vpop.f32.mrb[0].mxu0
        %v3178 = vadd.f32 %v3057, %v3177
        %v3179 = vpop.f32.mrb[0].mxu0
        %v3180 = vpop.f32.mrb[0].mxu0
        %v3181 = vadd.f32 %v3057, %v3180
        %v3182 = vpop.f32.mrb[0].mxu0
        %3183 = vmatprep.mubr.bf16.mxu0 0
        %3184 = vmatmul.mubr.bf16.gmra.mrb[0].mxu0 %v3085
        %v3185 = vpop.f32.mrb[0].mxu0
        %v3186 = vadd.f32 %v3057, %v3185
        %v3187 = vpop.f32.mrb[0].mxu0
        %v3188 = vpop.f32.mrb[0].mxu0
        %v3189 = vadd.f32 %v3057, %v3188
        %v3190 = vpop.f32.mrb[0].mxu0
        %3191 = vmatprep.mubr.bf16.mxu0 0
        %3192 = vmatmul.mubr.bf16.gmra.mrb[0].mxu0 %v3087
        %v3193 = vpop.f32.mrb[0].mxu0
        %v3194 = vadd.f32 %v3057, %v3193
        %v3195 = vpop.f32.mrb[0].mxu0
        %v3196 = vpop.f32.mrb[0].mxu0
        %v3197 = vadd.f32 %v3057, %v3196
        %v3198 = vpop.f32.mrb[0].mxu0
        %3199 = vmatprep.mubr.bf16.mxu0 0
        %3200 = vmatmul.mubr.bf16.gmra.mrb[0].mxu0 %v3089
        %v3201 = vpop.f32.mrb[0].mxu0
        %v3202 = vadd.f32 %v3057, %v3201
        %v3203 = vpop.f32.mrb[0].mxu0
        %v3204 = vpop.f32.mrb[0].mxu0
        %v3205 = vadd.f32 %v3057, %v3204
        %v3206 = vpop.f32.mrb[0].mxu0
        %3207 = vmatprep.mubr.bf16.mxu0 0
        %3208 = vmatmul.mubr.bf16.gmra.mrb[0].mxu0 %v3091
        %v3209 = vpop.f32.mrb[0].mxu0
        %v3210 = vadd.f32 %v3057, %v3209
        %v3211 = vpop.f32.mrb[0].mxu0
        %v3212 = vpop.f32.mrb[0].mxu0
        %v3213 = vadd.f32 %v3057, %v3212
        %v3214 = vpop.f32.mrb[0].mxu0
        %3215 = vmatprep.mubr.bf16.mxu0 0
        %3216 = vmatmul.mubr.bf16.gmra.mrb[0].mxu0 %v3093
        %v3217 = vpop.f32.mrb[0].mxu0
        %v3218 = vadd.f32 %v3057, %v3217
        %v3219 = vpop.f32.mrb[0].mxu0
        %v3220 = vpop.f32.mrb[0].mxu0
        %v3221 = vadd.f32 %v3057, %v3220
        %v3222 = vpop.f32.mrb[0].mxu0
        %3223 = vmatprep.mubr.bf16.mxu0 0
        %3224 = vmatmul.mubr.bf16.gmra.mrb[0].mxu0 %v3095
        %v3225 = vpop.f32.mrb[0].mxu0
        %v3226 = vadd.f32 %v3057, %v3225
        %v3227 = vpop.f32.mrb[0].mxu0
        %v3228 = vpop.f32.mrb[0].mxu0
        %v3229 = vadd.f32 %v3057, %v3228
        %v3230 = vpop.f32.mrb[0].mxu0
        %3231 = vmatprep.mubr.bf16.mxu0 0
        %3232 = vmatmul.mubr.bf16.gmra.mrb[0].mxu0 %v3097
        %v3233 = vpop.f32.mrb[0].mxu0
        %v3234 = vadd.f32 %v3057, %v3233
        %v3235 = vpop.f32.mrb[0].mxu0
        %v3236 = vpop.f32.mrb[0].mxu0
        %v3237 = vadd.f32 %v3057, %v3236
        %v3238 = vpop.f32.mrb[0].mxu0
        %3239 = vmatprep.mubr.bf16.mxu0 0
        %3240 = vmatmul.mubr.bf16.gmra.mrb[0].mxu0 %v3099
        %v3241 = vpop.f32.mrb[0].mxu0
        %v3242 = vadd.f32 %v3057, %v3241
        %v3243 = vpop.f32.mrb[0].mxu0
        %v3244 = vpop.f32.mrb[0].mxu0
        %v3245 = vadd.f32 %v3057, %v3244
        %v3246 = vpop.f32.mrb[0].mxu0
        %3247 = vmatprep.mubr.bf16.mxu0 0
        %3248 = vmatmul.mubr.bf16.gmra.mrb[0].mxu0 %v3101
        %v3249 = vpop.f32.mrb[0].mxu0
        %v3250 = vadd.f32 %v3057, %v3249
        %v3251 = vpop.f32.mrb[0].mxu0
        %v3252 = vpop.f32.mrb[0].mxu0
        %v3253 = vadd.f32 %v3057, %v3252
        %v3254 = vpop.f32.mrb[0].mxu0
        %3255 = vmatprep.mubr.bf16.mxu0 0
        %3256 = vmatmul.mubr.bf16.gmra.mrb[0].mxu0 %v3103
        %v3257 = vpop.f32.mrb[0].mxu0
        %v3258 = vadd.f32 %v3057, %v3257
        %v3259 = vpop.f32.mrb[0].mxu0
        %v3260 = vpop.f32.mrb[0].mxu0
        %v3261 = vadd.f32 %v3057, %v3260
        %v3262 = vpop.f32.mrb[0].mxu0
        %3263 = vmatprep.mubr.bf16.mxu0 0
        %3264 = vmatmul.mubr.bf16.gmra.mrb[0].mxu0 %v3105
        %v3265 = vpop.f32.mrb[0].mxu0
        %v3266 = vadd.f32 %v3057, %v3265
        %v3267 = vpop.f32.mrb[0].mxu0
        %v3268 = vpop.f32.mrb[0].mxu0
        %v3269 = vadd.f32 %v3057, %v3268
        %v3270 = vpop.f32.mrb[0].mxu0
        %3271 = vdwg.mxu0
        %3272 = vxpose.xlu0.b32.start [1/16] %v3146, 128
        %3273 = vxpose.xlu0.b32.cont [2/16] %v3149, 128
        %3274 = vxpose.xlu0.b32.cont [3/16] %v3154, 128
        %3275 = vxpose.xlu0.b32.cont [4/16] %v3157, 128
        %3276 = vxpose.xlu0.b32.cont [5/16] %v3162, 128
        %3277 = vxpose.xlu0.b32.cont [6/16] %v3165, 128
        %3278 = vxpose.xlu0.b32.cont [7/16] %v3170, 128
        %3279 = vxpose.xlu0.b32.cont [8/16] %v3173, 128
        %3280 = vxpose.xlu0.b32.cont [9/16] %v3178, 128
        %3281 = vxpose.xlu0.b32.cont [10/16] %v3181, 128
        %3282 = vxpose.xlu0.b32.cont [11/16] %v3186, 128
        %3283 = vxpose.xlu0.b32.cont [12/16] %v3189, 128
        %3284 = vxpose.xlu0.b32.cont [13/16] %v3194, 128
        %3285 = vxpose.xlu0.b32.cont [14/16] %v3197, 128
        %3286 = vxpose.xlu0.b32.cont [15/16] %v3202, 128
        %3287 = vxpose.xlu0.b32.end [16/16] %v3205, 128
        %v3288 = vpop.trf.xlu0
        %v3289 = vpop.trf.xlu0
        %v3290 = vpop.trf.xlu0
        %v3291 = vpop.trf.xlu0
        %v3292 = vpop.trf.xlu0
        %v3293 = vpop.trf.xlu0
        %v3294 = vpop.trf.xlu0
        %v3295 = vpop.trf.xlu0
        %v3296 = vpop.trf.xlu0
        %v3297 = vpop.trf.xlu0
        %v3298 = vpop.trf.xlu0
        %v3299 = vpop.trf.xlu0
        %v3300 = vpop.trf.xlu0
        %v3301 = vpop.trf.xlu0
        %v3302 = vpop.trf.xlu0
        %v3303 = vpop.trf.xlu0
        %3304 = vxpose.xlu0.b32.start [1/16] %v3210, 128
        %3305 = vxpose.xlu0.b32.cont [2/16] %v3213, 128
        %3306 = vxpose.xlu0.b32.cont [3/16] %v3218, 128
        %3307 = vxpose.xlu0.b32.cont [4/16] %v3221, 128
        %3308 = vxpose.xlu0.b32.cont [5/16] %v3226, 128
        %3309 = vxpose.xlu0.b32.cont [6/16] %v3229, 128
        %3310 = vxpose.xlu0.b32.cont [7/16] %v3234, 128
        %3311 = vxpose.xlu0.b32.cont [8/16] %v3237, 128
        %3312 = vxpose.xlu0.b32.cont [9/16] %v3242, 128
        %3313 = vxpose.xlu0.b32.cont [10/16] %v3245, 128
        %3314 = vxpose.xlu0.b32.cont [11/16] %v3250, 128
        %3315 = vxpose.xlu0.b32.cont [12/16] %v3253, 128
        %3316 = vxpose.xlu0.b32.cont [13/16] %v3258, 128
        %3317 = vxpose.xlu0.b32.cont [14/16] %v3261, 128
        %3318 = vxpose.xlu0.b32.cont [15/16] %v3266, 128
        %3319 = vxpose.xlu0.b32.end [16/16] %v3269, 128
        %v3320 = vpop.trf.xlu0
        %v3321 = vpop.trf.xlu0
        %v3322 = vpop.trf.xlu0
        %v3323 = vpop.trf.xlu0
        %v3324 = vpop.trf.xlu0
        %v3325 = vpop.trf.xlu0
        %v3326 = vpop.trf.xlu0
        %v3327 = vpop.trf.xlu0
        %v3328 = vpop.trf.xlu0
        %v3329 = vpop.trf.xlu0
        %v3330 = vpop.trf.xlu0
        %v3331 = vpop.trf.xlu0
        %v3332 = vpop.trf.xlu0
        %v3333 = vpop.trf.xlu0
        %v3334 = vpop.trf.xlu0
        %v3335 = vpop.trf.xlu0
        %3336 = vst [vmem:[%s187] sm:$0xff] %v3288
        %3337 = vst [vmem:[%s187 + $0x8] sm:$0xff] %v3320
        %s3338 = sand.u32 %s109, 1
        %s3339 = scalar_lea.sflag [#allocation3], %s3338
        %s3340 = sand.u32 %s109, 1
        %s3341 = smul.addr %s3340, 16
        %s3342 = scalar_lea.vmem [#allocation2], %s3341
        // Predicated region
        $region33: #{tpu_custom_call.1} parent=31 // pred_check
          %p3343 = pneg %p119
        $region34: #{tpu_custom_call.1} parent=31 // pred_check_branch
          %3345 = sbr.rel (%p3343) target = $region36
        $region35: #{tpu_custom_call.1} parent=31 // pred_region
          %s3346 = smul.u32 2, %s22
          %s3348 = ssub.s32 256, 256
          %3349 = vsyncadd %s3339, %s3348
          %s3350 = smul.addr %s21, 2
          %s3351 = sadd.s32 %s3346, %s3350
          %s3352 = smul.addr %s3351, 128
          %s3353 = scalar_lea.hbm %s3, %s3352
          %s3355 = sshll.u32 %s3342, 4
          %s3356 = int_to_ptr.vmem [resolvable:$true] %s3355
          %3358 = dma.vmem_to_hbm [thread:$0]  %s3356, 256, %s3353, %s3339
        $region36: #{tpu_custom_call.1} parent=31 // pred_fallthru
          _
      $region32: #{tpu_custom_call.1} parent=5 // pred_fallthru
        _
      %p3359 = scmp.le.s32.totalorder 2, %s12
      // Predicated region
      $region37: #{tpu_custom_call.1} parent=5 // pred_check
        %p3360 = pneg %p3359
      $region38: #{tpu_custom_call.1} parent=5 // pred_check_branch
        %3362 = sbr.rel (%p3360) target = $region40
      $region39: #{tpu_custom_call.1} parent=5 // pred_region
        %s3363 = ssub.s32 %s12, 2
        // Predicated region
        $region41: #{tpu_custom_call.1} parent=39 // pred_check
          %p3364 = pneg %p125
        $region42: #{tpu_custom_call.1} parent=39 // pred_check_branch
          %3366 = sbr.rel (%p3364) target = $region44
        $region43: #{tpu_custom_call.1} parent=39 // pred_region
          %s3367 = sand.u32 %s110, 1
          %s3368 = scalar_lea.sflag [#allocation3], %s3367
          %s3369 = sand.u32 %s110, 1
          %s3370 = smul.addr %s3369, 16
          %s3371 = scalar_lea.vmem [#allocation2], %s3370
          %3372 = dma.done %s3368, 256
        $region44: #{tpu_custom_call.1} parent=39 // pred_fallthru
          _
      $region40: #{tpu_custom_call.1} parent=5 // pred_fallthru
        _
    $region6: #{tpu_custom_call.1} parent=1 // loop_footer
      %s16 = sadd.s32 1, %s12
    $region7: #{tpu_custom_call.1} parent=1 // loop_footer_branch
      %11 = sbr.rel target = $region3
    $region8: #{tpu_custom_call.1} parent=1 // loop_exit
      _
    %3373 = vsyncpa [#allocation3], 1
    %s3374 = scalar_lea.sflag [#allocation3], 1
    %3375 = vsyncpa %s3374, 1

// kernel: tpu_custom_call.1
$region0: #{tpu_custom_call.1}
  #allocation0 [shape = 'u32[]', space=smem, size = 0x4, offset = 0x4, fixed_abs, tag = 'smem constant byte address 0x4 - core index']
  #allocation1 [shape = 'u32[144,128]{1,0:T(1,128)}', space=vmem, size = 0x12000, scoped, tag = 'internal scratch']
  %s0 = inlined_call_operand.vmem [shape: bf16[2,1,18,18,4], index: 0, kind: input, shape index: {}]
  %s1 = inlined_call_operand.vmem [shape: bf16[36,128], index: 1, kind: input, shape index: {}]
  %s2 = inlined_call_operand.vmem [shape: f32[1,128], index: 2, kind: input, shape index: {}]
  %s3 = inlined_call_operand.hbm [shape: f32[2,8,256], index: 3, kind: output, shape index: {}]
  %s4 = sld [smem:[#allocation0]]
  $region45: #{tpu_custom_call.1} parent=0
    _
  %s6 = ssub.s32 1, %s4
  %s7 = scalar_select 0, %s6, %s4
  $region1: #{tpu_custom_call.1} parent=0
    #allocation2 [shape = 'u8[16384]{0}', space=vmem, size = 0x4000, scoped, tag = 'output window, operand 0']
    #allocation3 [shape = 's32[2]{0}', space=sflag, size = 0x8, scoped, tag = 'scoped memory for tpu_custom_call.1']
    %8 = vsyncpa [#allocation3], 0
    %s9 = scalar_lea.sflag [#allocation3], 1
    %10 = vsyncpa %s9, 0
    loop: start=0, step=1, limit=4
    $region2: #{tpu_custom_call.1} parent=1 // loop_pre_header
      _
    $region3: #{tpu_custom_call.1} parent=1 // loop_header
      %s12 = sphi 0, %s16
      %p13 = scmp.ge.s32.totalorder %s12, 4
      %s19 = sphi 0, %s31
      %s20 = sphi 0, %s27
      %s21 = sphi 0, %s19
      %s22 = sphi 0, %s20
      %s23 = sphi 0, %s21
      %s24 = sphi 0, %s22
      %s36 = sphi 0, %s38
      %s39 = sphi 0, %s36
      %s40 = sphi 0, %s39
      %s56 = sphi 0, %s40
      %s60 = sphi 0, %s60
      %s62 = sphi 0, %s60
      %s63 = sphi 0, %s62
      %s77 = sphi 0, %s63
      %s81 = sphi 0, %s81
      %s83 = sphi 0, %s81
      %s84 = sphi 0, %s83
      %s98 = sphi 0, %s84
      %s106 = sphi 0, %s108
      %s109 = sphi 0, %s106
      %s110 = sphi 0, %s109
      %s126 = sphi 0, %s110
    $region4: #{tpu_custom_call.1} parent=1 // loop_header_branch
      %15 = sbr.rel (%p13) target = $region8
    $region5: #{tpu_custom_call.1} parent=1 // loop_body
      %s17 = ssub.s32 %s12, 1
      %s18 = ssub.s32 %s12, 2
      %s25 = sadd.s32 1, %s20
      %p26 = scmp.ge.s32.totalorder %s25, 1
      %s27 = scalar_select %p26, 0, %s25
      %s28 = sadd.s32 1, %s19
      %s29 = scalar_select %p26, %s28, %s19
      %p30 = scmp.ge.s32.totalorder %s29, 2
      %s31 = scalar_select %p30, 0, %s29
      %s32 = ssub.s32 %s19, %s31
      %s33 = ssub.s32 %s20, %s27
      %s34 = sor.u32 %s32, %s33
      %p35 = scmp.eq.s32.totalorder %s34, 0
      %s37 = sadd.s32 %s36, 1
      %s38 = scalar_select %p35, %s36, %s37
      %p41 = pneg %p35
      %p42 = scmp.eq.s32.totalorder %s12, 1
      %p43 = por %p41, %p42
      %p44 = scmp.ne.s32.totalorder %s36, %s39
      %p45 = scmp.eq.s32.totalorder %s12, 0
      %p46 = por %p44, %p45
      %p47 = scmp.ne.s32.totalorder %s36, %s39
      %p48 = scmp.eq.s32.totalorder %s17, 1
      %p49 = por %p47, %p48
      %p50 = scmp.ne.s32.totalorder %s39, %s40
      %p51 = scmp.eq.s32.totalorder %s17, 0
      %p52 = por %p50, %p51
      %p53 = scmp.ne.s32.totalorder %s39, %s40
      %p54 = scmp.eq.s32.totalorder %s18, 1
      %p55 = por %p53, %p54
      %p57 = scmp.ne.s32.totalorder %s40, %s56
      %p58 = scmp.eq.s32.totalorder %s18, 0
      %p59 = por %p57, %p58
      %s61 = sadd.s32 %s60, 1
      %p64 = scmp.eq.s32.totalorder %s12, 1
      %p65 = scmp.ne.s32.totalorder %s60, %s62
      %p66 = scmp.eq.s32.totalorder %s12, 0
      %p67 = por %p65, %p66
      %p68 = scmp.ne.s32.totalorder %s60, %s62
      %p69 = scmp.eq.s32.totalorder %s17, 1
      %p70 = por %p68, %p69
      %p71 = scmp.ne.s32.totalorder %s62, %s63
      %p72 = scmp.eq.s32.totalorder %s17, 0
      %p73 = por %p71, %p72
      %p74 = scmp.ne.s32.totalorder %s62, %s63
      %p75 = scmp.eq.s32.totalorder %s18, 1
      %p76 = por %p74, %p75
      %p78 = scmp.ne.s32.totalorder %s63, %s77
      %p79 = scmp.eq.s32.totalorder %s18, 0
      %p80 = por %p78, %p79
      %s82 = sadd.s32 %s81, 1
      %p85 = scmp.eq.s32.totalorder %s12, 1
      %p86 = scmp.ne.s32.totalorder %s81, %s83
      %p87 = scmp.eq.s32.totalorder %s12, 0
      %p88 = por %p86, %p87
      %p89 = scmp.ne.s32.totalorder %s81, %s83
      %p90 = scmp.eq.s32.totalorder %s17, 1
      %p91 = por %p89, %p90
      %p92 = scmp.ne.s32.totalorder %s83, %s84
      %p93 = scmp.eq.s32.totalorder %s17, 0
      %p94 = por %p92, %p93
      %p95 = scmp.ne.s32.totalorder %s83, %s84
      %p96 = scmp.eq.s32.totalorder %s18, 1
      %p97 = por %p95, %p96
      %p99 = scmp.ne.s32.totalorder %s84, %s98
      %p100 = scmp.eq.s32.totalorder %s18, 0
      %p101 = por %p99, %p100
      %s102 = ssub.s32 %s19, %s31
      %s103 = ssub.s32 %s20, %s27
      %s104 = sor.u32 %s102, %s103
      %p105 = scmp.eq.s32.totalorder %s104, 0
      %s107 = sadd.s32 %s106, 1
      %s108 = scalar_select %p105, %s106, %s107
      %p111 = pneg %p105
      %p112 = scmp.eq.s32.totalorder %s12, 1
      %p113 = por %p111, %p112
      %p114 = scmp.ne.s32.totalorder %s106, %s109
      %p115 = scmp.eq.s32.totalorder %s12, 0
      %p116 = por %p114, %p115
      %p117 = scmp.ne.s32.totalorder %s106, %s109
      %p118 = scmp.eq.s32.totalorder %s17, 1
      %p119 = por %p117, %p118
      %p120 = scmp.ne.s32.totalorder %s109, %s110
      %p121 = scmp.eq.s32.totalorder %s17, 0
      %p122 = por %p120, %p121
      %p123 = scmp.ne.s32.totalorder %s109, %s110
      %p124 = scmp.eq.s32.totalorder %s18, 1
      %p125 = por %p123, %p124
      %p127 = scmp.ne.s32.totalorder %s110, %s126
      %p128 = scmp.eq.s32.totalorder %s18, 0
      %p129 = por %p127, %p128
      %p130 = scmp.le.s32.totalorder 1, %s12
      %p131 = scmp.lt.s32.totalorder %s12, 3
      %p132 = pnand %p130, %p131
      %p133 = pneg %p132
      // Predicated region
      $region9: #{tpu_custom_call.1} parent=5 // pred_check
        _
      $region10: #{tpu_custom_call.1} parent=5 // pred_check_branch
        %135 = sbr.rel (%p132) target = $region12
      $region11: #{tpu_custom_call.1} parent=5 // pred_region
        %s136 = ssub.s32 %s12, 1
        // Predicated region
        $region13: #{tpu_custom_call.1} parent=11 // pred_check
          %p137 = pneg %p73
        $region14: #{tpu_custom_call.1} parent=11 // pred_check_branch
          %139 = sbr.rel (%p137) target = $region16
        $region15: #{tpu_custom_call.1} parent=11 // pred_region
          _
        $region16: #{tpu_custom_call.1} parent=11 // pred_fallthru
          _
        // Predicated region
        $region17: #{tpu_custom_call.1} parent=11 // pred_check
          %p140 = pneg %p94
        $region18: #{tpu_custom_call.1} parent=11 // pred_check_branch
          %142 = sbr.rel (%p140) target = $region20
        $region19: #{tpu_custom_call.1} parent=11 // pred_region
          _
        $region20: #{tpu_custom_call.1} parent=11 // pred_fallthru
          _
      $region12: #{tpu_custom_call.1} parent=5 // pred_fallthru
        _
      %p143 = scmp.lt.s32.totalorder %s12, 2
      // Predicated region
      $region21: #{tpu_custom_call.1} parent=5 // pred_check
        %p144 = pneg %p143
      $region22: #{tpu_custom_call.1} parent=5 // pred_check_branch
        %146 = sbr.rel (%p144) target = $region24
      $region23: #{tpu_custom_call.1} parent=5 // pred_region
        // Predicated region
        $region25: #{tpu_custom_call.1} parent=23 // pred_check
          %p147 = pneg %p46
        $region26: #{tpu_custom_call.1} parent=23 // pred_check_branch
          %149 = sbr.rel (%p147) target = $region28
        $region27: #{tpu_custom_call.1} parent=23 // pred_region
          %p150 = scmp.lt.s32.totalorder %s19, 1
          %s151 = scalar_select %p150, %s19, 1
          %p152 = scmp.lt.s32.totalorder %s20, 0
          %s153 = scalar_select %p152, %s20, 0
          %s154 = smul.addr %s153, 54
          %s155 = smul.addr %s151, 54
          %s156 = sadd.s32 %s154, %s155
          %s157 = smul.addr %s156, 4
          %s158 = scalar_lea.vmem %s0, %s157
        $region28: #{tpu_custom_call.1} parent=23 // pred_fallthru
          _
      $region24: #{tpu_custom_call.1} parent=5 // pred_fallthru
        _
      %p159 = scmp.le.s32.totalorder 1, %s12
      %p160 = scmp.lt.s32.totalorder %s12, 3
      %p161 = pnand %p159, %p160
      %p162 = pneg %p161
      // Predicated region
      $region29: #{tpu_custom_call.1} parent=5 // pred_check
        _
      $region30: #{tpu_custom_call.1} parent=5 // pred_check_branch
        %164 = sbr.rel (%p161) target = $region32
      $region31: #{tpu_custom_call.1} parent=5 // pred_region
        %s165 = ssub.s32 %s12, 1
        %p166 = scmp.lt.s32.totalorder %s21, 1
        %s167 = scalar_select %p166, %s21, 1
        %p168 = scmp.lt.s32.totalorder %s22, 0
        %s169 = scalar_select %p168, %s22, 0
        %s170 = smul.addr %s169, 54
        %s171 = smul.addr %s167, 54
        %s172 = sadd.s32 %s170, %s171
        %s173 = smul.addr %s172, 4
        %s174 = scalar_lea.vmem %s0, %s173
        %p175 = pneg %p52
        %p176 = pneg %p49
        %p177 = pneg %p73
        %p178 = pneg %p70
        %p179 = pneg %p94
        %p180 = pneg %p91
        %p181 = pneg %p122
        %p182 = pneg %p119
        %s183 = sand.u32 %s109, 1
        %s184 = scalar_lea.sflag [#allocation3], %s183
        %s185 = sand.u32 %s109, 1
        %s186 = smul.addr %s185, 16
        %s187 = scalar_lea.vmem [#allocation2], %s186
        %p188 = scmp.lt.s32.totalorder %s21, 1
        %s189 = scalar_select %p188, %s21, 1
        %p190 = scmp.lt.s32.totalorder %s22, 0
        %s191 = scalar_select %p190, %s22, 0
        %s192 = smul.addr %s191, 54
        %s193 = smul.addr %s189, 54
        %s194 = sadd.s32 %s192, %s193
        %s195 = smul.addr %s194, 4
        %s196 = scalar_lea.vmem %s0, %s195
        %s197 = smul.u32 2, %s22
        %v199 = vld [vmem:[%s196] sm:$0xf]
        %v200 = vld [vmem:[%s196 + $0x4] sm:$0xf]
        %v201 = vld [vmem:[%s196 + $0xc] sm:$0xf]
        %v202 = vld [vmem:[%s196 + $0x10] sm:$0xf]
        %v203 = vld [vmem:[%s196 + $0x18] sm:$0xf]
        %v204 = vld [vmem:[%s196 + $0x1c] sm:$0xf]
        %v205 = vld [vmem:[%s196 + $0x24] sm:$0xf]
        %v206 = vld [vmem:[%s196 + $0x28] sm:$0xf]
        %v207 = vld [vmem:[%s196 + $0x30] sm:$0xf]
        %v208 = vld [vmem:[%s196 + $0x34] sm:$0xf]
        %v209 = vld [vmem:[%s196 + $0x3c] sm:$0xf]
        %v210 = vld [vmem:[%s196 + $0x40] sm:$0xf]
        %v211 = vld [vmem:[%s196 + $0x48] sm:$0xf]
        %v212 = vld [vmem:[%s196 + $0x4c] sm:$0xf]
        %v213 = vld [vmem:[%s196 + $0x54] sm:$0xf]
        %v214 = vld [vmem:[%s196 + $0x58] sm:$0xf]
        %v215 = vld [vmem:[%s196 + $0x60] sm:$0xf]
        %v216 = vld [vmem:[%s196 + $0x64] sm:$0xf]
        %v217 = vld [vmem:[%s196 + $0x6c] sm:$0xf]
        %v218 = vld [vmem:[%s196 + $0x70] sm:$0xf]
        %v219 = vld [vmem:[%s196 + $0x78] sm:$0xf]
        %v220 = vld [vmem:[%s196 + $0x7c] sm:$0xf]
        %v221 = vld [vmem:[%s196 + $0x84] sm:$0xf]
        %v222 = vld [vmem:[%s196 + $0x88] sm:$0xf]
        %v223 = vld [vmem:[%s196 + $0x90] sm:$0xf]
        %v224 = vld [vmem:[%s196 + $0x94] sm:$0xf]
        %v225 = vld [vmem:[%s196 + $0x9c] sm:$0xf]
        %v226 = vld [vmem:[%s196 + $0xa0] sm:$0xf]
        %v227 = vld [vmem:[%s196 + $0xa8] sm:$0xf]
        %v228 = vld [vmem:[%s196 + $0xac] sm:$0xf]
        %v229 = vld [vmem:[%s196 + $0xb4] sm:$0xf]
        %v230 = vld [vmem:[%s196 + $0xb8] sm:$0xf]
        %v231 = vld [vmem:[%s196 + $0x8] sm:$0x1]
        %v232 = vld [vmem:[%s196 + $0x14] sm:$0x1]
        %v233 = vld [vmem:[%s196 + $0x20] sm:$0x1]
        %v234 = vld [vmem:[%s196 + $0x2c] sm:$0x1]
        %v235 = vld [vmem:[%s196 + $0x38] sm:$0x1]
        %v236 = vld [vmem:[%s196 + $0x44] sm:$0x1]
        %v237 = vld [vmem:[%s196 + $0x50] sm:$0x1]
        %v238 = vld [vmem:[%s196 + $0x5c] sm:$0x1]
        %v239 = vld [vmem:[%s196 + $0x68] sm:$0x1]
        %v240 = vld [vmem:[%s196 + $0x74] sm:$0x1]
        %v241 = vld [vmem:[%s196 + $0x80] sm:$0x1]
        %v242 = vld [vmem:[%s196 + $0x8c] sm:$0x1]
        %v243 = vld [vmem:[%s196 + $0x98] sm:$0x1]
        %v244 = vld [vmem:[%s196 + $0xa4] sm:$0x1]
        %v245 = vld [vmem:[%s196 + $0xb0] sm:$0x1]
        %v246 = vld [vmem:[%s196 + $0xbc] sm:$0x1]
        %vm247 = vsmask.f32 3328
        %vm248 = vsmask.f32 7440
        %vm249 = vmor %vm247, %vm248
        %v251 = vshrl.u32 %v199, 16
        %v253 = vrot.slane %v251, 4
        %v254 = vshll.u32 %v199, 16
        %v256 = vrot.slane %v254, 5
        %v257 = vor.u32 %v253, %v256
        %v258 = vrot.slane %v257, 4
        %v260 = vshll.u32 %v200, 16
        %v262 = vrot.slane %v260, 5
        %v263 = vsel %vm249, %v258, %v262
        %v264 = vshrl.u32 %v200, 16
        %v266 = vrot.slane %v264, 4
        %v267 = vor.u32 %v266, %v262
        %v268 = vrot.slane %v267, 4
        %v270 = vshll.u32 %v231, 16
        %v272 = vrot.slane %v270, 5
        %v273 = vsel %vm249, %v268, %v272
        %v275 = vshrl.u32 %v201, 16
        %v277 = vrot.slane %v275, 4
        %v278 = vshll.u32 %v201, 16
        %v280 = vrot.slane %v278, 5
        %v281 = vor.u32 %v277, %v280
        %v282 = vrot.slane %v281, 4
        %v284 = vshll.u32 %v202, 16
        %v286 = vrot.slane %v284, 5
        %v287 = vsel %vm249, %v282, %v286
        %v288 = vshrl.u32 %v202, 16
        %v290 = vrot.slane %v288, 4
        %v291 = vor.u32 %v290, %v286
        %v292 = vrot.slane %v291, 4
        %v294 = vshll.u32 %v232, 16
        %v296 = vrot.slane %v294, 5
        %v297 = vsel %vm249, %v292, %v296
        %v299 = vshrl.u32 %v203, 16
        %v301 = vrot.slane %v299, 4
        %v302 = vshll.u32 %v203, 16
        %v304 = vrot.slane %v302, 5
        %v305 = vor.u32 %v301, %v304
        %v306 = vrot.slane %v305, 4
        %v308 = vshll.u32 %v204, 16
        %v310 = vrot.slane %v308, 5
        %v311 = vsel %vm249, %v306, %v310
        %v312 = vshrl.u32 %v204, 16
        %v314 = vrot.slane %v312, 4
        %v315 = vor.u32 %v314, %v310
        %v316 = vrot.slane %v315, 4
        %v318 = vshll.u32 %v233, 16
        %v320 = vrot.slane %v318, 5
        %v321 = vsel %vm249, %v316, %v320
        %v323 = vshrl.u32 %v205, 16
        %v325 = vrot.slane %v323, 4
        %v326 = vshll.u32 %v205, 16
        %v328 = vrot.slane %v326, 5
        %v329 = vor.u32 %v325, %v328
        %v330 = vrot.slane %v329, 4
        %v332 = vshll.u32 %v206, 16
        %v334 = vrot.slane %v332, 5
        %v335 = vsel %vm249, %v330, %v334
        %v336 = vshrl.u32 %v206, 16
        %v338 = vrot.slane %v336, 4
        %v339 = vor.u32 %v338, %v334
        %v340 = vrot.slane %v339, 4
        %v342 = vshll.u32 %v234, 16
        %v344 = vrot.slane %v342, 5
        %v345 = vsel %vm249, %v340, %v344
        %v347 = vshrl.u32 %v207, 16
        %v349 = vrot.slane %v347, 4
        %v350 = vshll.u32 %v207, 16
        %v352 = vrot.slane %v350, 5
        %v353 = vor.u32 %v349, %v352
        %v354 = vrot.slane %v353, 4
        %v356 = vshll.u32 %v208, 16
        %v358 = vrot.slane %v356, 5
        %v359 = vsel %vm249, %v354, %v358
        %v360 = vshrl.u32 %v208, 16
        %v362 = vrot.slane %v360, 4
        %v363 = vor.u32 %v362, %v358
        %v364 = vrot.slane %v363, 4
        %v366 = vshll.u32 %v235, 16
        %v368 = vrot.slane %v366, 5
        %v369 = vsel %vm249, %v364, %v368
        %v371 = vshrl.u32 %v209, 16
        %v373 = vrot.slane %v371, 4
        %v374 = vshll.u32 %v209, 16
        %v376 = vrot.slane %v374, 5
        %v377 = vor.u32 %v373, %v376
        %v378 = vrot.slane %v377, 4
        %v380 = vshll.u32 %v210, 16
        %v382 = vrot.slane %v380, 5
        %v383 = vsel %vm249, %v378, %v382
        %v384 = vshrl.u32 %v210, 16
        %v386 = vrot.slane %v384, 4
        %v387 = vor.u32 %v386, %v382
        %v388 = vrot.slane %v387, 4
        %v390 = vshll.u32 %v236, 16
        %v392 = vrot.slane %v390, 5
        %v393 = vsel %vm249, %v388, %v392
        %v395 = vshrl.u32 %v211, 16
        %v397 = vrot.slane %v395, 4
        %v398 = vshll.u32 %v211, 16
        %v400 = vrot.slane %v398, 5
        %v401 = vor.u32 %v397, %v400
        %v402 = vrot.slane %v401, 4
        %v404 = vshll.u32 %v212, 16
        %v406 = vrot.slane %v404, 5
        %v407 = vsel %vm249, %v402, %v406
        %v408 = vshrl.u32 %v212, 16
        %v410 = vrot.slane %v408, 4
        %v411 = vor.u32 %v410, %v406
        %v412 = vrot.slane %v411, 4
        %v414 = vshll.u32 %v237, 16
        %v416 = vrot.slane %v414, 5
        %v417 = vsel %vm249, %v412, %v416
        %v419 = vshrl.u32 %v213, 16
        %v421 = vrot.slane %v419, 4
        %v422 = vshll.u32 %v213, 16
        %v424 = vrot.slane %v422, 5
        %v425 = vor.u32 %v421, %v424
        %v426 = vrot.slane %v425, 4
        %v428 = vshll.u32 %v214, 16
        %v430 = vrot.slane %v428, 5
        %v431 = vsel %vm249, %v426, %v430
        %v432 = vshrl.u32 %v214, 16
        %v434 = vrot.slane %v432, 4
        %v435 = vor.u32 %v434, %v430
        %v436 = vrot.slane %v435, 4
        %v438 = vshll.u32 %v238, 16
        %v440 = vrot.slane %v438, 5
        %v441 = vsel %vm249, %v436, %v440
        %v443 = vshrl.u32 %v215, 16
        %v445 = vrot.slane %v443, 4
        %v446 = vshll.u32 %v215, 16
        %v448 = vrot.slane %v446, 5
        %v449 = vor.u32 %v445, %v448
        %v450 = vrot.slane %v449, 4
        %v452 = vshll.u32 %v216, 16
        %v454 = vrot.slane %v452, 5
        %v455 = vsel %vm249, %v450, %v454
        %v456 = vshrl.u32 %v216, 16
        %v458 = vrot.slane %v456, 4
        %v459 = vor.u32 %v458, %v454
        %v460 = vrot.slane %v459, 4
        %v462 = vshll.u32 %v239, 16
        %v464 = vrot.slane %v462, 5
        %v465 = vsel %vm249, %v460, %v464
        %v467 = vshrl.u32 %v217, 16
        %v469 = vrot.slane %v467, 4
        %v470 = vshll.u32 %v217, 16
        %v472 = vrot.slane %v470, 5
        %v473 = vor.u32 %v469, %v472
        %v474 = vrot.slane %v473, 4
        %v476 = vshll.u32 %v218, 16
        %v478 = vrot.slane %v476, 5
        %v479 = vsel %vm249, %v474, %v478
        %v480 = vshrl.u32 %v218, 16
        %v482 = vrot.slane %v480, 4
        %v483 = vor.u32 %v482, %v478
        %v484 = vrot.slane %v483, 4
        %v486 = vshll.u32 %v240, 16
        %v488 = vrot.slane %v486, 5
        %v489 = vsel %vm249, %v484, %v488
        %v491 = vshrl.u32 %v219, 16
        %v493 = vrot.slane %v491, 4
        %v494 = vshll.u32 %v219, 16
        %v496 = vrot.slane %v494, 5
        %v497 = vor.u32 %v493, %v496
        %v498 = vrot.slane %v497, 4
        %v500 = vshll.u32 %v220, 16
        %v502 = vrot.slane %v500, 5
        %v503 = vsel %vm249, %v498, %v502
        %v504 = vshrl.u32 %v220, 16
        %v506 = vrot.slane %v504, 4
        %v507 = vor.u32 %v506, %v502
        %v508 = vrot.slane %v507, 4
        %v510 = vshll.u32 %v241, 16
        %v512 = vrot.slane %v510, 5
        %v513 = vsel %vm249, %v508, %v512
        %v515 = vshrl.u32 %v221, 16
        %v517 = vrot.slane %v515, 4
        %v518 = vshll.u32 %v221, 16
        %v520 = vrot.slane %v518, 5
        %v521 = vor.u32 %v517, %v520
        %v522 = vrot.slane %v521, 4
        %v524 = vshll.u32 %v222, 16
        %v526 = vrot.slane %v524, 5
        %v527 = vsel %vm249, %v522, %v526
        %v528 = vshrl.u32 %v222, 16
        %v530 = vrot.slane %v528, 4
        %v531 = vor.u32 %v530, %v526
        %v532 = vrot.slane %v531, 4
        %v534 = vshll.u32 %v242, 16
        %v536 = vrot.slane %v534, 5
        %v537 = vsel %vm249, %v532, %v536
        %v539 = vshrl.u32 %v223, 16
        %v541 = vrot.slane %v539, 4
        %v542 = vshll.u32 %v223, 16
        %v544 = vrot.slane %v542, 5
        %v545 = vor.u32 %v541, %v544
        %v546 = vrot.slane %v545, 4
        %v548 = vshll.u32 %v224, 16
        %v550 = vrot.slane %v548, 5
        %v551 = vsel %vm249, %v546, %v550
        %v552 = vshrl.u32 %v224, 16
        %v554 = vrot.slane %v552, 4
        %v555 = vor.u32 %v554, %v550
        %v556 = vrot.slane %v555, 4
        %v558 = vshll.u32 %v243, 16
        %v560 = vrot.slane %v558, 5
        %v561 = vsel %vm249, %v556, %v560
        %v563 = vshrl.u32 %v225, 16
        %v565 = vrot.slane %v563, 4
        %v566 = vshll.u32 %v225, 16
        %v568 = vrot.slane %v566, 5
        %v569 = vor.u32 %v565, %v568
        %v570 = vrot.slane %v569, 4
        %v572 = vshll.u32 %v226, 16
        %v574 = vrot.slane %v572, 5
        %v575 = vsel %vm249, %v570, %v574
        %v576 = vshrl.u32 %v226, 16
        %v578 = vrot.slane %v576, 4
        %v579 = vor.u32 %v578, %v574
        %v580 = vrot.slane %v579, 4
        %v582 = vshll.u32 %v244, 16
        %v584 = vrot.slane %v582, 5
        %v585 = vsel %vm249, %v580, %v584
        %v587 = vshrl.u32 %v227, 16
        %v589 = vrot.slane %v587, 4
        %v590 = vshll.u32 %v227, 16
        %v592 = vrot.slane %v590, 5
        %v593 = vor.u32 %v589, %v592
        %v594 = vrot.slane %v593, 4
        %v596 = vshll.u32 %v228, 16
        %v598 = vrot.slane %v596, 5
        %v599 = vsel %vm249, %v594, %v598
        %v600 = vshrl.u32 %v228, 16
        %v602 = vrot.slane %v600, 4
        %v603 = vor.u32 %v602, %v598
        %v604 = vrot.slane %v603, 4
        %v606 = vshll.u32 %v245, 16
        %v608 = vrot.slane %v606, 5
        %v609 = vsel %vm249, %v604, %v608
        %v611 = vshrl.u32 %v229, 16
        %v613 = vrot.slane %v611, 4
        %v614 = vshll.u32 %v229, 16
        %v616 = vrot.slane %v614, 5
        %v617 = vor.u32 %v613, %v616
        %v618 = vrot.slane %v617, 4
        %v620 = vshll.u32 %v230, 16
        %v622 = vrot.slane %v620, 5
        %v623 = vsel %vm249, %v618, %v622
        %v624 = vshrl.u32 %v230, 16
        %v626 = vrot.slane %v624, 4
        %v627 = vor.u32 %v626, %v622
        %v628 = vrot.slane %v627, 4
        %v630 = vshll.u32 %v246, 16
        %v632 = vrot.slane %v630, 5
        %v633 = vsel %vm249, %v628, %v632
        %v634 = vld [vmem:[%s196] sm:$0xe]
        %v635 = vld [vmem:[%s196 + $0xc] sm:$0xe]
        %v636 = vld [vmem:[%s196 + $0x18] sm:$0xe]
        %v637 = vld [vmem:[%s196 + $0x24] sm:$0xe]
        %v638 = vld [vmem:[%s196 + $0x30] sm:$0xe]
        %v639 = vld [vmem:[%s196 + $0x3c] sm:$0xe]
        %v640 = vld [vmem:[%s196 + $0x48] sm:$0xe]
        %v641 = vld [vmem:[%s196 + $0x54] sm:$0xe]
        %v642 = vld [vmem:[%s196 + $0x60] sm:$0xe]
        %v643 = vld [vmem:[%s196 + $0x6c] sm:$0xe]
        %v644 = vld [vmem:[%s196 + $0x78] sm:$0xe]
        %v645 = vld [vmem:[%s196 + $0x84] sm:$0xe]
        %v646 = vld [vmem:[%s196 + $0x90] sm:$0xe]
        %v647 = vld [vmem:[%s196 + $0x9c] sm:$0xe]
        %v648 = vld [vmem:[%s196 + $0xa8] sm:$0xe]
        %v649 = vld [vmem:[%s196 + $0xb4] sm:$0xe]
        %vm698 = vcmask 1042432
        %vm699 = vcmask 1046532
        %vm700 = vmor %vm698, %vm699
        %v701 = vrot.slane %v634, 5
        %v702 = vrot.slane %v701, 4
        %v703 = vrot.slane %v200, 5
        %v704 = vsel %vm700, %v702, %v703
        %v705 = vrot.slane %v703, 4
        %v706 = vrot.slane %v231, 5
        %v707 = vsel %vm700, %v705, %v706
        %v708 = vrot.slane %v635, 5
        %v709 = vrot.slane %v708, 4
        %v710 = vrot.slane %v202, 5
        %v711 = vsel %vm700, %v709, %v710
        %v712 = vrot.slane %v710, 4
        %v713 = vrot.slane %v232, 5
        %v714 = vsel %vm700, %v712, %v713
        %v715 = vrot.slane %v636, 5
        %v716 = vrot.slane %v715, 4
        %v717 = vrot.slane %v204, 5
        %v718 = vsel %vm700, %v716, %v717
        %v719 = vrot.slane %v717, 4
        %v720 = vrot.slane %v233, 5
        %v721 = vsel %vm700, %v719, %v720
        %v722 = vrot.slane %v637, 5
        %v723 = vrot.slane %v722, 4
        %v724 = vrot.slane %v206, 5
        %v725 = vsel %vm700, %v723, %v724
        %v726 = vrot.slane %v724, 4
        %v727 = vrot.slane %v234, 5
        %v728 = vsel %vm700, %v726, %v727
        %v729 = vrot.slane %v638, 5
        %v730 = vrot.slane %v729, 4
        %v731 = vrot.slane %v208, 5
        %v732 = vsel %vm700, %v730, %v731
        %v733 = vrot.slane %v731, 4
        %v734 = vrot.slane %v235, 5
        %v735 = vsel %vm700, %v733, %v734
        %v736 = vrot.slane %v639, 5
        %v737 = vrot.slane %v736, 4
        %v738 = vrot.slane %v210, 5
        %v739 = vsel %vm700, %v737, %v738
        %v740 = vrot.slane %v738, 4
        %v741 = vrot.slane %v236, 5
        %v742 = vsel %vm700, %v740, %v741
        %v743 = vrot.slane %v640, 5
        %v744 = vrot.slane %v743, 4
        %v745 = vrot.slane %v212, 5
        %v746 = vsel %vm700, %v744, %v745
        %v747 = vrot.slane %v745, 4
        %v748 = vrot.slane %v237, 5
        %v749 = vsel %vm700, %v747, %v748
        %v750 = vrot.slane %v641, 5
        %v751 = vrot.slane %v750, 4
        %v752 = vrot.slane %v214, 5
        %v753 = vsel %vm700, %v751, %v752
        %v754 = vrot.slane %v752, 4
        %v755 = vrot.slane %v238, 5
        %v756 = vsel %vm700, %v754, %v755
        %v757 = vrot.slane %v642, 5
        %v758 = vrot.slane %v757, 4
        %v759 = vrot.slane %v216, 5
        %v760 = vsel %vm700, %v758, %v759
        %v761 = vrot.slane %v759, 4
        %v762 = vrot.slane %v239, 5
        %v763 = vsel %vm700, %v761, %v762
        %v764 = vrot.slane %v643, 5
        %v765 = vrot.slane %v764, 4
        %v766 = vrot.slane %v218, 5
        %v767 = vsel %vm700, %v765, %v766
        %v768 = vrot.slane %v766, 4
        %v769 = vrot.slane %v240, 5
        %v770 = vsel %vm700, %v768, %v769
        %v771 = vrot.slane %v644, 5
        %v772 = vrot.slane %v771, 4
        %v773 = vrot.slane %v220, 5
        %v774 = vsel %vm700, %v772, %v773
        %v775 = vrot.slane %v773, 4
        %v776 = vrot.slane %v241, 5
        %v777 = vsel %vm700, %v775, %v776
        %v778 = vrot.slane %v645, 5
        %v779 = vrot.slane %v778, 4
        %v780 = vrot.slane %v222, 5
        %v781 = vsel %vm700, %v779, %v780
        %v782 = vrot.slane %v780, 4
        %v783 = vrot.slane %v242, 5
        %v784 = vsel %vm700, %v782, %v783
        %v785 = vrot.slane %v646, 5
        %v786 = vrot.slane %v785, 4
        %v787 = vrot.slane %v224, 5
        %v788 = vsel %vm700, %v786, %v787
        %v789 = vrot.slane %v787, 4
        %v790 = vrot.slane %v243, 5
        %v791 = vsel %vm700, %v789, %v790
        %v792 = vrot.slane %v647, 5
        %v793 = vrot.slane %v792, 4
        %v794 = vrot.slane %v226, 5
        %v795 = vsel %vm700, %v793, %v794
        %v796 = vrot.slane %v794, 4
        %v797 = vrot.slane %v244, 5
        %v798 = vsel %vm700, %v796, %v797
        %v799 = vrot.slane %v648, 5
        %v800 = vrot.slane %v799, 4
        %v801 = vrot.slane %v228, 5
        %v802 = vsel %vm700, %v800, %v801
        %v803 = vrot.slane %v801, 4
        %v804 = vrot.slane %v245, 5
        %v805 = vsel %vm700, %v803, %v804
        %v806 = vrot.slane %v649, 5
        %v807 = vrot.slane %v806, 4
        %v808 = vrot.slane %v230, 5
        %v809 = vsel %vm700, %v807, %v808
        %v810 = vrot.slane %v808, 4
        %v811 = vrot.slane %v246, 5
        %v812 = vsel %vm700, %v810, %v811
        %s813 = scalar_lea.vmem %s196, 12
        %v814 = vld [vmem:[%s813] sm:$0xf]
        %v815 = vld [vmem:[%s813 + $0x4] sm:$0xf]
        %v816 = vld [vmem:[%s813 + $0xc] sm:$0xf]
        %v817 = vld [vmem:[%s813 + $0x10] sm:$0xf]
        %v818 = vld [vmem:[%s813 + $0x18] sm:$0xf]
        %v819 = vld [vmem:[%s813 + $0x1c] sm:$0xf]
        %v820 = vld [vmem:[%s813 + $0x24] sm:$0xf]
        %v821 = vld [vmem:[%s813 + $0x28] sm:$0xf]
        %v822 = vld [vmem:[%s813 + $0x30] sm:$0xf]
        %v823 = vld [vmem:[%s813 + $0x34] sm:$0xf]
        %v824 = vld [vmem:[%s813 + $0x3c] sm:$0xf]
        %v825 = vld [vmem:[%s813 + $0x40] sm:$0xf]
        %v826 = vld [vmem:[%s813 + $0x48] sm:$0xf]
        %v827 = vld [vmem:[%s813 + $0x4c] sm:$0xf]
        %v828 = vld [vmem:[%s813 + $0x54] sm:$0xf]
        %v829 = vld [vmem:[%s813 + $0x58] sm:$0xf]
        %v830 = vld [vmem:[%s813 + $0x60] sm:$0xf]
        %v831 = vld [vmem:[%s813 + $0x64] sm:$0xf]
        %v832 = vld [vmem:[%s813 + $0x6c] sm:$0xf]
        %v833 = vld [vmem:[%s813 + $0x70] sm:$0xf]
        %v834 = vld [vmem:[%s813 + $0x78] sm:$0xf]
        %v835 = vld [vmem:[%s813 + $0x7c] sm:$0xf]
        %v836 = vld [vmem:[%s813 + $0x84] sm:$0xf]
        %v837 = vld [vmem:[%s813 + $0x88] sm:$0xf]
        %v838 = vld [vmem:[%s813 + $0x90] sm:$0xf]
        %v839 = vld [vmem:[%s813 + $0x94] sm:$0xf]
        %v840 = vld [vmem:[%s813 + $0x9c] sm:$0xf]
        %v841 = vld [vmem:[%s813 + $0xa0] sm:$0xf]
        %v842 = vld [vmem:[%s813 + $0xa8] sm:$0xf]
        %v843 = vld [vmem:[%s813 + $0xac] sm:$0xf]
        %v844 = vld [vmem:[%s813 + $0xb4] sm:$0xf]
        %v845 = vld [vmem:[%s813 + $0xb8] sm:$0xf]
        %v846 = vld [vmem:[%s813 + $0x8] sm:$0x1]
        %v847 = vld [vmem:[%s813 + $0x14] sm:$0x1]
        %v848 = vld [vmem:[%s813 + $0x20] sm:$0x1]
        %v849 = vld [vmem:[%s813 + $0x2c] sm:$0x1]
        %v850 = vld [vmem:[%s813 + $0x38] sm:$0x1]
        %v851 = vld [vmem:[%s813 + $0x44] sm:$0x1]
        %v852 = vld [vmem:[%s813 + $0x50] sm:$0x1]
        %v853 = vld [vmem:[%s813 + $0x5c] sm:$0x1]
        %v854 = vld [vmem:[%s813 + $0x68] sm:$0x1]
        %v855 = vld [vmem:[%s813 + $0x74] sm:$0x1]
        %v856 = vld [vmem:[%s813 + $0x80] sm:$0x1]
        %v857 = vld [vmem:[%s813 + $0x8c] sm:$0x1]
        %v858 = vld [vmem:[%s813 + $0x98] sm:$0x1]
        %v859 = vld [vmem:[%s813 + $0xa4] sm:$0x1]
        %v860 = vld [vmem:[%s813 + $0xb0] sm:$0x1]
        %v861 = vld [vmem:[%s813 + $0xbc] sm:$0x1]
        %v863 = vshrl.u32 %v814, 16
        %v865 = vrot.slane %v863, 4
        %v866 = vshll.u32 %v814, 16
        %v868 = vrot.slane %v866, 5
        %v869 = vor.u32 %v865, %v868
        %v870 = vrot.slane %v869, 4
        %v872 = vshll.u32 %v815, 16
        %v874 = vrot.slane %v872, 5
        %v875 = vsel %vm249, %v870, %v874
        %v876 = vshrl.u32 %v815, 16
        %v878 = vrot.slane %v876, 4
        %v879 = vor.u32 %v878, %v874
        %v880 = vrot.slane %v879, 4
        %v882 = vshll.u32 %v846, 16
        %v884 = vrot.slane %v882, 5
        %v885 = vsel %vm249, %v880, %v884
        %v887 = vshrl.u32 %v816, 16
        %v889 = vrot.slane %v887, 4
        %v890 = vshll.u32 %v816, 16
        %v892 = vrot.slane %v890, 5
        %v893 = vor.u32 %v889, %v892
        %v894 = vrot.slane %v893, 4
        %v896 = vshll.u32 %v817, 16
        %v898 = vrot.slane %v896, 5
        %v899 = vsel %vm249, %v894, %v898
        %v900 = vshrl.u32 %v817, 16
        %v902 = vrot.slane %v900, 4
        %v903 = vor.u32 %v902, %v898
        %v904 = vrot.slane %v903, 4
        %v906 = vshll.u32 %v847, 16
        %v908 = vrot.slane %v906, 5
        %v909 = vsel %vm249, %v904, %v908
        %v911 = vshrl.u32 %v818, 16
        %v913 = vrot.slane %v911, 4
        %v914 = vshll.u32 %v818, 16
        %v916 = vrot.slane %v914, 5
        %v917 = vor.u32 %v913, %v916
        %v918 = vrot.slane %v917, 4
        %v920 = vshll.u32 %v819, 16
        %v922 = vrot.slane %v920, 5
        %v923 = vsel %vm249, %v918, %v922
        %v924 = vshrl.u32 %v819, 16
        %v926 = vrot.slane %v924, 4
        %v927 = vor.u32 %v926, %v922
        %v928 = vrot.slane %v927, 4
        %v930 = vshll.u32 %v848, 16
        %v932 = vrot.slane %v930, 5
        %v933 = vsel %vm249, %v928, %v932
        %v935 = vshrl.u32 %v820, 16
        %v937 = vrot.slane %v935, 4
        %v938 = vshll.u32 %v820, 16
        %v940 = vrot.slane %v938, 5
        %v941 = vor.u32 %v937, %v940
        %v942 = vrot.slane %v941, 4
        %v944 = vshll.u32 %v821, 16
        %v946 = vrot.slane %v944, 5
        %v947 = vsel %vm249, %v942, %v946
        %v948 = vshrl.u32 %v821, 16
        %v950 = vrot.slane %v948, 4
        %v951 = vor.u32 %v950, %v946
        %v952 = vrot.slane %v951, 4
        %v954 = vshll.u32 %v849, 16
        %v956 = vrot.slane %v954, 5
        %v957 = vsel %vm249, %v952, %v956
        %v959 = vshrl.u32 %v822, 16
        %v961 = vrot.slane %v959, 4
        %v962 = vshll.u32 %v822, 16
        %v964 = vrot.slane %v962, 5
        %v965 = vor.u32 %v961, %v964
        %v966 = vrot.slane %v965, 4
        %v968 = vshll.u32 %v823, 16
        %v970 = vrot.slane %v968, 5
        %v971 = vsel %vm249, %v966, %v970
        %v972 = vshrl.u32 %v823, 16
        %v974 = vrot.slane %v972, 4
        %v975 = vor.u32 %v974, %v970
        %v976 = vrot.slane %v975, 4
        %v978 = vshll.u32 %v850, 16
        %v980 = vrot.slane %v978, 5
        %v981 = vsel %vm249, %v976, %v980
        %v983 = vshrl.u32 %v824, 16
        %v985 = vrot.slane %v983, 4
        %v986 = vshll.u32 %v824, 16
        %v988 = vrot.slane %v986, 5
        %v989 = vor.u32 %v985, %v988
        %v990 = vrot.slane %v989, 4
        %v992 = vshll.u32 %v825, 16
        %v994 = vrot.slane %v992, 5
        %v995 = vsel %vm249, %v990, %v994
        %v996 = vshrl.u32 %v825, 16
        %v998 = vrot.slane %v996, 4
        %v999 = vor.u32 %v998, %v994
        %v1000 = vrot.slane %v999, 4
        %v1002 = vshll.u32 %v851, 16
        %v1004 = vrot.slane %v1002, 5
        %v1005 = vsel %vm249, %v1000, %v1004
        %v1007 = vshrl.u32 %v826, 16
        %v1009 = vrot.slane %v1007, 4
        %v1010 = vshll.u32 %v826, 16
        %v1012 = vrot.slane %v1010, 5
        %v1013 = vor.u32 %v1009, %v1012
        %v1014 = vrot.slane %v1013, 4
        %v1016 = vshll.u32 %v827, 16
        %v1018 = vrot.slane %v1016, 5
        %v1019 = vsel %vm249, %v1014, %v1018
        %v1020 = vshrl.u32 %v827, 16
        %v1022 = vrot.slane %v1020, 4
        %v1023 = vor.u32 %v1022, %v1018
        %v1024 = vrot.slane %v1023, 4
        %v1026 = vshll.u32 %v852, 16
        %v1028 = vrot.slane %v1026, 5
        %v1029 = vsel %vm249, %v1024, %v1028
        %v1031 = vshrl.u32 %v828, 16
        %v1033 = vrot.slane %v1031, 4
        %v1034 = vshll.u32 %v828, 16
        %v1036 = vrot.slane %v1034, 5
        %v1037 = vor.u32 %v1033, %v1036
        %v1038 = vrot.slane %v1037, 4
        %v1040 = vshll.u32 %v829, 16
        %v1042 = vrot.slane %v1040, 5
        %v1043 = vsel %vm249, %v1038, %v1042
        %v1044 = vshrl.u32 %v829, 16
        %v1046 = vrot.slane %v1044, 4
        %v1047 = vor.u32 %v1046, %v1042
        %v1048 = vrot.slane %v1047, 4
        %v1050 = vshll.u32 %v853, 16
        %v1052 = vrot.slane %v1050, 5
        %v1053 = vsel %vm249, %v1048, %v1052
        %v1055 = vshrl.u32 %v830, 16
        %v1057 = vrot.slane %v1055, 4
        %v1058 = vshll.u32 %v830, 16
        %v1060 = vrot.slane %v1058, 5
        %v1061 = vor.u32 %v1057, %v1060
        %v1062 = vrot.slane %v1061, 4
        %v1064 = vshll.u32 %v831, 16
        %v1066 = vrot.slane %v1064, 5
        %v1067 = vsel %vm249, %v1062, %v1066
        %v1068 = vshrl.u32 %v831, 16
        %v1070 = vrot.slane %v1068, 4
        %v1071 = vor.u32 %v1070, %v1066
        %v1072 = vrot.slane %v1071, 4
        %v1074 = vshll.u32 %v854, 16
        %v1076 = vrot.slane %v1074, 5
        %v1077 = vsel %vm249, %v1072, %v1076
        %v1079 = vshrl.u32 %v832, 16
        %v1081 = vrot.slane %v1079, 4
        %v1082 = vshll.u32 %v832, 16
        %v1084 = vrot.slane %v1082, 5
        %v1085 = vor.u32 %v1081, %v1084
        %v1086 = vrot.slane %v1085, 4
        %v1088 = vshll.u32 %v833, 16
        %v1090 = vrot.slane %v1088, 5
        %v1091 = vsel %vm249, %v1086, %v1090
        %v1092 = vshrl.u32 %v833, 16
        %v1094 = vrot.slane %v1092, 4
        %v1095 = vor.u32 %v1094, %v1090
        %v1096 = vrot.slane %v1095, 4
        %v1098 = vshll.u32 %v855, 16
        %v1100 = vrot.slane %v1098, 5
        %v1101 = vsel %vm249, %v1096, %v1100
        %v1103 = vshrl.u32 %v834, 16
        %v1105 = vrot.slane %v1103, 4
        %v1106 = vshll.u32 %v834, 16
        %v1108 = vrot.slane %v1106, 5
        %v1109 = vor.u32 %v1105, %v1108
        %v1110 = vrot.slane %v1109, 4
        %v1112 = vshll.u32 %v835, 16
        %v1114 = vrot.slane %v1112, 5
        %v1115 = vsel %vm249, %v1110, %v1114
        %v1116 = vshrl.u32 %v835, 16
        %v1118 = vrot.slane %v1116, 4
        %v1119 = vor.u32 %v1118, %v1114
        %v1120 = vrot.slane %v1119, 4
        %v1122 = vshll.u32 %v856, 16
        %v1124 = vrot.slane %v1122, 5
        %v1125 = vsel %vm249, %v1120, %v1124
        %v1127 = vshrl.u32 %v836, 16
        %v1129 = vrot.slane %v1127, 4
        %v1130 = vshll.u32 %v836, 16
        %v1132 = vrot.slane %v1130, 5
        %v1133 = vor.u32 %v1129, %v1132
        %v1134 = vrot.slane %v1133, 4
        %v1136 = vshll.u32 %v837, 16
        %v1138 = vrot.slane %v1136, 5
        %v1139 = vsel %vm249, %v1134, %v1138
        %v1140 = vshrl.u32 %v837, 16
        %v1142 = vrot.slane %v1140, 4
        %v1143 = vor.u32 %v1142, %v1138
        %v1144 = vrot.slane %v1143, 4
        %v1146 = vshll.u32 %v857, 16
        %v1148 = vrot.slane %v1146, 5
        %v1149 = vsel %vm249, %v1144, %v1148
        %v1151 = vshrl.u32 %v838, 16
        %v1153 = vrot.slane %v1151, 4
        %v1154 = vshll.u32 %v838, 16
        %v1156 = vrot.slane %v1154, 5
        %v1157 = vor.u32 %v1153, %v1156
        %v1158 = vrot.slane %v1157, 4
        %v1160 = vshll.u32 %v839, 16
        %v1162 = vrot.slane %v1160, 5
        %v1163 = vsel %vm249, %v1158, %v1162
        %v1164 = vshrl.u32 %v839, 16
        %v1166 = vrot.slane %v1164, 4
        %v1167 = vor.u32 %v1166, %v1162
        %v1168 = vrot.slane %v1167, 4
        %v1170 = vshll.u32 %v858, 16
        %v1172 = vrot.slane %v1170, 5
        %v1173 = vsel %vm249, %v1168, %v1172
        %v1175 = vshrl.u32 %v840, 16
        %v1177 = vrot.slane %v1175, 4
        %v1178 = vshll.u32 %v840, 16
        %v1180 = vrot.slane %v1178, 5
        %v1181 = vor.u32 %v1177, %v1180
        %v1182 = vrot.slane %v1181, 4
        %v1184 = vshll.u32 %v841, 16
        %v1186 = vrot.slane %v1184, 5
        %v1187 = vsel %vm249, %v1182, %v1186
        %v1188 = vshrl.u32 %v841, 16
        %v1190 = vrot.slane %v1188, 4
        %v1191 = vor.u32 %v1190, %v1186
        %v1192 = vrot.slane %v1191, 4
        %v1194 = vshll.u32 %v859, 16
        %v1196 = vrot.slane %v1194, 5
        %v1197 = vsel %vm249, %v1192, %v1196
        %v1199 = vshrl.u32 %v842, 16
        %v1201 = vrot.slane %v1199, 4
        %v1202 = vshll.u32 %v842, 16
        %v1204 = vrot.slane %v1202, 5
        %v1205 = vor.u32 %v1201, %v1204
        %v1206 = vrot.slane %v1205, 4
        %v1208 = vshll.u32 %v843, 16
        %v1210 = vrot.slane %v1208, 5
        %v1211 = vsel %vm249, %v1206, %v1210
        %v1212 = vshrl.u32 %v843, 16
        %v1214 = vrot.slane %v1212, 4
        %v1215 = vor.u32 %v1214, %v1210
        %v1216 = vrot.slane %v1215, 4
        %v1218 = vshll.u32 %v860, 16
        %v1220 = vrot.slane %v1218, 5
        %v1221 = vsel %vm249, %v1216, %v1220
        %v1223 = vshrl.u32 %v844, 16
        %v1225 = vrot.slane %v1223, 4
        %v1226 = vshll.u32 %v844, 16
        %v1228 = vrot.slane %v1226, 5
        %v1229 = vor.u32 %v1225, %v1228
        %v1230 = vrot.slane %v1229, 4
        %v1232 = vshll.u32 %v845, 16
        %v1234 = vrot.slane %v1232, 5
        %v1235 = vsel %vm249, %v1230, %v1234
        %v1236 = vshrl.u32 %v845, 16
        %v1238 = vrot.slane %v1236, 4
        %v1239 = vor.u32 %v1238, %v1234
        %v1240 = vrot.slane %v1239, 4
        %v1242 = vshll.u32 %v861, 16
        %v1244 = vrot.slane %v1242, 5
        %v1245 = vsel %vm249, %v1240, %v1244
        %v1246 = vld [vmem:[%s813] sm:$0xe]
        %v1247 = vld [vmem:[%s813 + $0xc] sm:$0xe]
        %v1248 = vld [vmem:[%s813 + $0x18] sm:$0xe]
        %v1249 = vld [vmem:[%s813 + $0x24] sm:$0xe]
        %v1250 = vld [vmem:[%s813 + $0x30] sm:$0xe]
        %v1251 = vld [vmem:[%s813 + $0x3c] sm:$0xe]
        %v1252 = vld [vmem:[%s813 + $0x48] sm:$0xe]
        %v1253 = vld [vmem:[%s813 + $0x54] sm:$0xe]
        %v1254 = vld [vmem:[%s813 + $0x60] sm:$0xe]
        %v1255 = vld [vmem:[%s813 + $0x6c] sm:$0xe]
        %v1256 = vld [vmem:[%s813 + $0x78] sm:$0xe]
        %v1257 = vld [vmem:[%s813 + $0x84] sm:$0xe]
        %v1258 = vld [vmem:[%s813 + $0x90] sm:$0xe]
        %v1259 = vld [vmem:[%s813 + $0x9c] sm:$0xe]
        %v1260 = vld [vmem:[%s813 + $0xa8] sm:$0xe]
        %v1261 = vld [vmem:[%s813 + $0xb4] sm:$0xe]
        %v1310 = vrot.slane %v1246, 5
        %v1311 = vrot.slane %v1310, 4
        %v1312 = vrot.slane %v815, 5
        %v1313 = vsel %vm700, %v1311, %v1312
        %v1314 = vrot.slane %v1312, 4
        %v1315 = vrot.slane %v846, 5
        %v1316 = vsel %vm700, %v1314, %v1315
        %v1317 = vrot.slane %v1247, 5
        %v1318 = vrot.slane %v1317, 4
        %v1319 = vrot.slane %v817, 5
        %v1320 = vsel %vm700, %v1318, %v1319
        %v1321 = vrot.slane %v1319, 4
        %v1322 = vrot.slane %v847, 5
        %v1323 = vsel %vm700, %v1321, %v1322
        %v1324 = vrot.slane %v1248, 5
        %v1325 = vrot.slane %v1324, 4
        %v1326 = vrot.slane %v819, 5
        %v1327 = vsel %vm700, %v1325, %v1326
        %v1328 = vrot.slane %v1326, 4
        %v1329 = vrot.slane %v848, 5
        %v1330 = vsel %vm700, %v1328, %v1329
        %v1331 = vrot.slane %v1249, 5
        %v1332 = vrot.slane %v1331, 4
        %v1333 = vrot.slane %v821, 5
        %v1334 = vsel %vm700, %v1332, %v1333
        %v1335 = vrot.slane %v1333, 4
        %v1336 = vrot.slane %v849, 5
        %v1337 = vsel %vm700, %v1335, %v1336
        %v1338 = vrot.slane %v1250, 5
        %v1339 = vrot.slane %v1338, 4
        %v1340 = vrot.slane %v823, 5
        %v1341 = vsel %vm700, %v1339, %v1340
        %v1342 = vrot.slane %v1340, 4
        %v1343 = vrot.slane %v850, 5
        %v1344 = vsel %vm700, %v1342, %v1343
        %v1345 = vrot.slane %v1251, 5
        %v1346 = vrot.slane %v1345, 4
        %v1347 = vrot.slane %v825, 5
        %v1348 = vsel %vm700, %v1346, %v1347
        %v1349 = vrot.slane %v1347, 4
        %v1350 = vrot.slane %v851, 5
        %v1351 = vsel %vm700, %v1349, %v1350
        %v1352 = vrot.slane %v1252, 5
        %v1353 = vrot.slane %v1352, 4
        %v1354 = vrot.slane %v827, 5
        %v1355 = vsel %vm700, %v1353, %v1354
        %v1356 = vrot.slane %v1354, 4
        %v1357 = vrot.slane %v852, 5
        %v1358 = vsel %vm700, %v1356, %v1357
        %v1359 = vrot.slane %v1253, 5
        %v1360 = vrot.slane %v1359, 4
        %v1361 = vrot.slane %v829, 5
        %v1362 = vsel %vm700, %v1360, %v1361
        %v1363 = vrot.slane %v1361, 4
        %v1364 = vrot.slane %v853, 5
        %v1365 = vsel %vm700, %v1363, %v1364
        %v1366 = vrot.slane %v1254, 5
        %v1367 = vrot.slane %v1366, 4
        %v1368 = vrot.slane %v831, 5
        %v1369 = vsel %vm700, %v1367, %v1368
        %v1370 = vrot.slane %v1368, 4
        %v1371 = vrot.slane %v854, 5
        %v1372 = vsel %vm700, %v1370, %v1371
        %v1373 = vrot.slane %v1255, 5
        %v1374 = vrot.slane %v1373, 4
        %v1375 = vrot.slane %v833, 5
        %v1376 = vsel %vm700, %v1374, %v1375
        %v1377 = vrot.slane %v1375, 4
        %v1378 = vrot.slane %v855, 5
        %v1379 = vsel %vm700, %v1377, %v1378
        %v1380 = vrot.slane %v1256, 5
        %v1381 = vrot.slane %v1380, 4
        %v1382 = vrot.slane %v835, 5
        %v1383 = vsel %vm700, %v1381, %v1382
        %v1384 = vrot.slane %v1382, 4
        %v1385 = vrot.slane %v856, 5
        %v1386 = vsel %vm700, %v1384, %v1385
        %v1387 = vrot.slane %v1257, 5
        %v1388 = vrot.slane %v1387, 4
        %v1389 = vrot.slane %v837, 5
        %v1390 = vsel %vm700, %v1388, %v1389
        %v1391 = vrot.slane %v1389, 4
        %v1392 = vrot.slane %v857, 5
        %v1393 = vsel %vm700, %v1391, %v1392
        %v1394 = vrot.slane %v1258, 5
        %v1395 = vrot.slane %v1394, 4
        %v1396 = vrot.slane %v839, 5
        %v1397 = vsel %vm700, %v1395, %v1396
        %v1398 = vrot.slane %v1396, 4
        %v1399 = vrot.slane %v858, 5
        %v1400 = vsel %vm700, %v1398, %v1399
        %v1401 = vrot.slane %v1259, 5
        %v1402 = vrot.slane %v1401, 4
        %v1403 = vrot.slane %v841, 5
        %v1404 = vsel %vm700, %v1402, %v1403
        %v1405 = vrot.slane %v1403, 4
        %v1406 = vrot.slane %v859, 5
        %v1407 = vsel %vm700, %v1405, %v1406
        %v1408 = vrot.slane %v1260, 5
        %v1409 = vrot.slane %v1408, 4
        %v1410 = vrot.slane %v843, 5
        %v1411 = vsel %vm700, %v1409, %v1410
        %v1412 = vrot.slane %v1410, 4
        %v1413 = vrot.slane %v860, 5
        %v1414 = vsel %vm700, %v1412, %v1413
        %v1415 = vrot.slane %v1261, 5
        %v1416 = vrot.slane %v1415, 4
        %v1417 = vrot.slane %v845, 5
        %v1418 = vsel %vm700, %v1416, %v1417
        %v1419 = vrot.slane %v1417, 4
        %v1420 = vrot.slane %v861, 5
        %v1421 = vsel %vm700, %v1419, %v1420
        %s1422 = scalar_lea.vmem %s196, 24
        %v1423 = vld [vmem:[%s1422] sm:$0xf]
        %v1424 = vld [vmem:[%s1422 + $0x4] sm:$0xf]
        %v1425 = vld [vmem:[%s1422 + $0xc] sm:$0xf]
        %v1426 = vld [vmem:[%s1422 + $0x10] sm:$0xf]
        %v1427 = vld [vmem:[%s1422 + $0x18] sm:$0xf]
        %v1428 = vld [vmem:[%s1422 + $0x1c] sm:$0xf]
        %v1429 = vld [vmem:[%s1422 + $0x24] sm:$0xf]
        %v1430 = vld [vmem:[%s1422 + $0x28] sm:$0xf]
        %v1431 = vld [vmem:[%s1422 + $0x30] sm:$0xf]
        %v1432 = vld [vmem:[%s1422 + $0x34] sm:$0xf]
        %v1433 = vld [vmem:[%s1422 + $0x3c] sm:$0xf]
        %v1434 = vld [vmem:[%s1422 + $0x40] sm:$0xf]
        %v1435 = vld [vmem:[%s1422 + $0x48] sm:$0xf]
        %v1436 = vld [vmem:[%s1422 + $0x4c] sm:$0xf]
        %v1437 = vld [vmem:[%s1422 + $0x54] sm:$0xf]
        %v1438 = vld [vmem:[%s1422 + $0x58] sm:$0xf]
        %v1439 = vld [vmem:[%s1422 + $0x60] sm:$0xf]
        %v1440 = vld [vmem:[%s1422 + $0x64] sm:$0xf]
        %v1441 = vld [vmem:[%s1422 + $0x6c] sm:$0xf]
        %v1442 = vld [vmem:[%s1422 + $0x70] sm:$0xf]
        %v1443 = vld [vmem:[%s1422 + $0x78] sm:$0xf]
        %v1444 = vld [vmem:[%s1422 + $0x7c] sm:$0xf]
        %v1445 = vld [vmem:[%s1422 + $0x84] sm:$0xf]
        %v1446 = vld [vmem:[%s1422 + $0x88] sm:$0xf]
        %v1447 = vld [vmem:[%s1422 + $0x90] sm:$0xf]
        %v1448 = vld [vmem:[%s1422 + $0x94] sm:$0xf]
        %v1449 = vld [vmem:[%s1422 + $0x9c] sm:$0xf]
        %v1450 = vld [vmem:[%s1422 + $0xa0] sm:$0xf]
        %v1451 = vld [vmem:[%s1422 + $0xa8] sm:$0xf]
        %v1452 = vld [vmem:[%s1422 + $0xac] sm:$0xf]
        %v1453 = vld [vmem:[%s1422 + $0xb4] sm:$0xf]
        %v1454 = vld [vmem:[%s1422 + $0xb8] sm:$0xf]
        %v1455 = vld [vmem:[%s1422 + $0x8] sm:$0x1]
        %v1456 = vld [vmem:[%s1422 + $0x14] sm:$0x1]
        %v1457 = vld [vmem:[%s1422 + $0x20] sm:$0x1]
        %v1458 = vld [vmem:[%s1422 + $0x2c] sm:$0x1]
        %v1459 = vld [vmem:[%s1422 + $0x38] sm:$0x1]
        %v1460 = vld [vmem:[%s1422 + $0x44] sm:$0x1]
        %v1461 = vld [vmem:[%s1422 + $0x50] sm:$0x1]
        %v1462 = vld [vmem:[%s1422 + $0x5c] sm:$0x1]
        %v1463 = vld [vmem:[%s1422 + $0x68] sm:$0x1]
        %v1464 = vld [vmem:[%s1422 + $0x74] sm:$0x1]
        %v1465 = vld [vmem:[%s1422 + $0x80] sm:$0x1]
        %v1466 = vld [vmem:[%s1422 + $0x8c] sm:$0x1]
        %v1467 = vld [vmem:[%s1422 + $0x98] sm:$0x1]
        %v1468 = vld [vmem:[%s1422 + $0xa4] sm:$0x1]
        %v1469 = vld [vmem:[%s1422 + $0xb0] sm:$0x1]
        %v1470 = vld [vmem:[%s1422 + $0xbc] sm:$0x1]
        %v1472 = vshrl.u32 %v1423, 16
        %v1474 = vrot.slane %v1472, 4
        %v1475 = vshll.u32 %v1423, 16
        %v1477 = vrot.slane %v1475, 5
        %v1478 = vor.u32 %v1474, %v1477
        %v1479 = vrot.slane %v1478, 4
        %v1481 = vshll.u32 %v1424, 16
        %v1483 = vrot.slane %v1481, 5
        %v1484 = vsel %vm249, %v1479, %v1483
        %v1485 = vshrl.u32 %v1424, 16
        %v1487 = vrot.slane %v1485, 4
        %v1488 = vor.u32 %v1487, %v1483
        %v1489 = vrot.slane %v1488, 4
        %v1491 = vshll.u32 %v1455, 16
        %v1493 = vrot.slane %v1491, 5
        %v1494 = vsel %vm249, %v1489, %v1493
        %v1496 = vshrl.u32 %v1425, 16
        %v1498 = vrot.slane %v1496, 4
        %v1499 = vshll.u32 %v1425, 16
        %v1501 = vrot.slane %v1499, 5
        %v1502 = vor.u32 %v1498, %v1501
        %v1503 = vrot.slane %v1502, 4
        %v1505 = vshll.u32 %v1426, 16
        %v1507 = vrot.slane %v1505, 5
        %v1508 = vsel %vm249, %v1503, %v1507
        %v1509 = vshrl.u32 %v1426, 16
        %v1511 = vrot.slane %v1509, 4
        %v1512 = vor.u32 %v1511, %v1507
        %v1513 = vrot.slane %v1512, 4
        %v1515 = vshll.u32 %v1456, 16
        %v1517 = vrot.slane %v1515, 5
        %v1518 = vsel %vm249, %v1513, %v1517
        %v1520 = vshrl.u32 %v1427, 16
        %v1522 = vrot.slane %v1520, 4
        %v1523 = vshll.u32 %v1427, 16
        %v1525 = vrot.slane %v1523, 5
        %v1526 = vor.u32 %v1522, %v1525
        %v1527 = vrot.slane %v1526, 4
        %v1529 = vshll.u32 %v1428, 16
        %v1531 = vrot.slane %v1529, 5
        %v1532 = vsel %vm249, %v1527, %v1531
        %v1533 = vshrl.u32 %v1428, 16
        %v1535 = vrot.slane %v1533, 4
        %v1536 = vor.u32 %v1535, %v1531
        %v1537 = vrot.slane %v1536, 4
        %v1539 = vshll.u32 %v1457, 16
        %v1541 = vrot.slane %v1539, 5
        %v1542 = vsel %vm249, %v1537, %v1541
        %v1544 = vshrl.u32 %v1429, 16
        %v1546 = vrot.slane %v1544, 4
        %v1547 = vshll.u32 %v1429, 16
        %v1549 = vrot.slane %v1547, 5
        %v1550 = vor.u32 %v1546, %v1549
        %v1551 = vrot.slane %v1550, 4
        %v1553 = vshll.u32 %v1430, 16
        %v1555 = vrot.slane %v1553, 5
        %v1556 = vsel %vm249, %v1551, %v1555
        %v1557 = vshrl.u32 %v1430, 16
        %v1559 = vrot.slane %v1557, 4
        %v1560 = vor.u32 %v1559, %v1555
        %v1561 = vrot.slane %v1560, 4
        %v1563 = vshll.u32 %v1458, 16
        %v1565 = vrot.slane %v1563, 5
        %v1566 = vsel %vm249, %v1561, %v1565
        %v1568 = vshrl.u32 %v1431, 16
        %v1570 = vrot.slane %v1568, 4
        %v1571 = vshll.u32 %v1431, 16
        %v1573 = vrot.slane %v1571, 5
        %v1574 = vor.u32 %v1570, %v1573
        %v1575 = vrot.slane %v1574, 4
        %v1577 = vshll.u32 %v1432, 16
        %v1579 = vrot.slane %v1577, 5
        %v1580 = vsel %vm249, %v1575, %v1579
        %v1581 = vshrl.u32 %v1432, 16
        %v1583 = vrot.slane %v1581, 4
        %v1584 = vor.u32 %v1583, %v1579
        %v1585 = vrot.slane %v1584, 4
        %v1587 = vshll.u32 %v1459, 16
        %v1589 = vrot.slane %v1587, 5
        %v1590 = vsel %vm249, %v1585, %v1589
        %v1592 = vshrl.u32 %v1433, 16
        %v1594 = vrot.slane %v1592, 4
        %v1595 = vshll.u32 %v1433, 16
        %v1597 = vrot.slane %v1595, 5
        %v1598 = vor.u32 %v1594, %v1597
        %v1599 = vrot.slane %v1598, 4
        %v1601 = vshll.u32 %v1434, 16
        %v1603 = vrot.slane %v1601, 5
        %v1604 = vsel %vm249, %v1599, %v1603
        %v1605 = vshrl.u32 %v1434, 16
        %v1607 = vrot.slane %v1605, 4
        %v1608 = vor.u32 %v1607, %v1603
        %v1609 = vrot.slane %v1608, 4
        %v1611 = vshll.u32 %v1460, 16
        %v1613 = vrot.slane %v1611, 5
        %v1614 = vsel %vm249, %v1609, %v1613
        %v1616 = vshrl.u32 %v1435, 16
        %v1618 = vrot.slane %v1616, 4
        %v1619 = vshll.u32 %v1435, 16
        %v1621 = vrot.slane %v1619, 5
        %v1622 = vor.u32 %v1618, %v1621
        %v1623 = vrot.slane %v1622, 4
        %v1625 = vshll.u32 %v1436, 16
        %v1627 = vrot.slane %v1625, 5
        %v1628 = vsel %vm249, %v1623, %v1627
        %v1629 = vshrl.u32 %v1436, 16
        %v1631 = vrot.slane %v1629, 4
        %v1632 = vor.u32 %v1631, %v1627
        %v1633 = vrot.slane %v1632, 4
        %v1635 = vshll.u32 %v1461, 16
        %v1637 = vrot.slane %v1635, 5
        %v1638 = vsel %vm249, %v1633, %v1637
        %v1640 = vshrl.u32 %v1437, 16
        %v1642 = vrot.slane %v1640, 4
        %v1643 = vshll.u32 %v1437, 16
        %v1645 = vrot.slane %v1643, 5
        %v1646 = vor.u32 %v1642, %v1645
        %v1647 = vrot.slane %v1646, 4
        %v1649 = vshll.u32 %v1438, 16
        %v1651 = vrot.slane %v1649, 5
        %v1652 = vsel %vm249, %v1647, %v1651
        %v1653 = vshrl.u32 %v1438, 16
        %v1655 = vrot.slane %v1653, 4
        %v1656 = vor.u32 %v1655, %v1651
        %v1657 = vrot.slane %v1656, 4
        %v1659 = vshll.u32 %v1462, 16
        %v1661 = vrot.slane %v1659, 5
        %v1662 = vsel %vm249, %v1657, %v1661
        %v1664 = vshrl.u32 %v1439, 16
        %v1666 = vrot.slane %v1664, 4
        %v1667 = vshll.u32 %v1439, 16
        %v1669 = vrot.slane %v1667, 5
        %v1670 = vor.u32 %v1666, %v1669
        %v1671 = vrot.slane %v1670, 4
        %v1673 = vshll.u32 %v1440, 16
        %v1675 = vrot.slane %v1673, 5
        %v1676 = vsel %vm249, %v1671, %v1675
        %v1677 = vshrl.u32 %v1440, 16
        %v1679 = vrot.slane %v1677, 4
        %v1680 = vor.u32 %v1679, %v1675
        %v1681 = vrot.slane %v1680, 4
        %v1683 = vshll.u32 %v1463, 16
        %v1685 = vrot.slane %v1683, 5
        %v1686 = vsel %vm249, %v1681, %v1685
        %v1688 = vshrl.u32 %v1441, 16
        %v1690 = vrot.slane %v1688, 4
        %v1691 = vshll.u32 %v1441, 16
        %v1693 = vrot.slane %v1691, 5
        %v1694 = vor.u32 %v1690, %v1693
        %v1695 = vrot.slane %v1694, 4
        %v1697 = vshll.u32 %v1442, 16
        %v1699 = vrot.slane %v1697, 5
        %v1700 = vsel %vm249, %v1695, %v1699
        %v1701 = vshrl.u32 %v1442, 16
        %v1703 = vrot.slane %v1701, 4
        %v1704 = vor.u32 %v1703, %v1699
        %v1705 = vrot.slane %v1704, 4
        %v1707 = vshll.u32 %v1464, 16
        %v1709 = vrot.slane %v1707, 5
        %v1710 = vsel %vm249, %v1705, %v1709
        %v1712 = vshrl.u32 %v1443, 16
        %v1714 = vrot.slane %v1712, 4
        %v1715 = vshll.u32 %v1443, 16
        %v1717 = vrot.slane %v1715, 5
        %v1718 = vor.u32 %v1714, %v1717
        %v1719 = vrot.slane %v1718, 4
        %v1721 = vshll.u32 %v1444, 16
        %v1723 = vrot.slane %v1721, 5
        %v1724 = vsel %vm249, %v1719, %v1723
        %v1725 = vshrl.u32 %v1444, 16
        %v1727 = vrot.slane %v1725, 4
        %v1728 = vor.u32 %v1727, %v1723
        %v1729 = vrot.slane %v1728, 4
        %v1731 = vshll.u32 %v1465, 16
        %v1733 = vrot.slane %v1731, 5
        %v1734 = vsel %vm249, %v1729, %v1733
        %v1736 = vshrl.u32 %v1445, 16
        %v1738 = vrot.slane %v1736, 4
        %v1739 = vshll.u32 %v1445, 16
        %v1741 = vrot.slane %v1739, 5
        %v1742 = vor.u32 %v1738, %v1741
        %v1743 = vrot.slane %v1742, 4
        %v1745 = vshll.u32 %v1446, 16
        %v1747 = vrot.slane %v1745, 5
        %v1748 = vsel %vm249, %v1743, %v1747
        %v1749 = vshrl.u32 %v1446, 16
        %v1751 = vrot.slane %v1749, 4
        %v1752 = vor.u32 %v1751, %v1747
        %v1753 = vrot.slane %v1752, 4
        %v1755 = vshll.u32 %v1466, 16
        %v1757 = vrot.slane %v1755, 5
        %v1758 = vsel %vm249, %v1753, %v1757
        %v1760 = vshrl.u32 %v1447, 16
        %v1762 = vrot.slane %v1760, 4
        %v1763 = vshll.u32 %v1447, 16
        %v1765 = vrot.slane %v1763, 5
        %v1766 = vor.u32 %v1762, %v1765
        %v1767 = vrot.slane %v1766, 4
        %v1769 = vshll.u32 %v1448, 16
        %v1771 = vrot.slane %v1769, 5
        %v1772 = vsel %vm249, %v1767, %v1771
        %v1773 = vshrl.u32 %v1448, 16
        %v1775 = vrot.slane %v1773, 4
        %v1776 = vor.u32 %v1775, %v1771
        %v1777 = vrot.slane %v1776, 4
        %v1779 = vshll.u32 %v1467, 16
        %v1781 = vrot.slane %v1779, 5
        %v1782 = vsel %vm249, %v1777, %v1781
        %v1784 = vshrl.u32 %v1449, 16
        %v1786 = vrot.slane %v1784, 4
        %v1787 = vshll.u32 %v1449, 16
        %v1789 = vrot.slane %v1787, 5
        %v1790 = vor.u32 %v1786, %v1789
        %v1791 = vrot.slane %v1790, 4
        %v1793 = vshll.u32 %v1450, 16
        %v1795 = vrot.slane %v1793, 5
        %v1796 = vsel %vm249, %v1791, %v1795
        %v1797 = vshrl.u32 %v1450, 16
        %v1799 = vrot.slane %v1797, 4
        %v1800 = vor.u32 %v1799, %v1795
        %v1801 = vrot.slane %v1800, 4
        %v1803 = vshll.u32 %v1468, 16
        %v1805 = vrot.slane %v1803, 5
        %v1806 = vsel %vm249, %v1801, %v1805
        %v1808 = vshrl.u32 %v1451, 16
        %v1810 = vrot.slane %v1808, 4
        %v1811 = vshll.u32 %v1451, 16
        %v1813 = vrot.slane %v1811, 5
        %v1814 = vor.u32 %v1810, %v1813
        %v1815 = vrot.slane %v1814, 4
        %v1817 = vshll.u32 %v1452, 16
        %v1819 = vrot.slane %v1817, 5
        %v1820 = vsel %vm249, %v1815, %v1819
        %v1821 = vshrl.u32 %v1452, 16
        %v1823 = vrot.slane %v1821, 4
        %v1824 = vor.u32 %v1823, %v1819
        %v1825 = vrot.slane %v1824, 4
        %v1827 = vshll.u32 %v1469, 16
        %v1829 = vrot.slane %v1827, 5
        %v1830 = vsel %vm249, %v1825, %v1829
        %v1832 = vshrl.u32 %v1453, 16
        %v1834 = vrot.slane %v1832, 4
        %v1835 = vshll.u32 %v1453, 16
        %v1837 = vrot.slane %v1835, 5
        %v1838 = vor.u32 %v1834, %v1837
        %v1839 = vrot.slane %v1838, 4
        %v1841 = vshll.u32 %v1454, 16
        %v1843 = vrot.slane %v1841, 5
        %v1844 = vsel %vm249, %v1839, %v1843
        %v1845 = vshrl.u32 %v1454, 16
        %v1847 = vrot.slane %v1845, 4
        %v1848 = vor.u32 %v1847, %v1843
        %v1849 = vrot.slane %v1848, 4
        %v1851 = vshll.u32 %v1470, 16
        %v1853 = vrot.slane %v1851, 5
        %v1854 = vsel %vm249, %v1849, %v1853
        %v1855 = vld [vmem:[%s1422] sm:$0xe]
        %v1856 = vld [vmem:[%s1422 + $0xc] sm:$0xe]
        %v1857 = vld [vmem:[%s1422 + $0x18] sm:$0xe]
        %v1858 = vld [vmem:[%s1422 + $0x24] sm:$0xe]
        %v1859 = vld [vmem:[%s1422 + $0x30] sm:$0xe]
        %v1860 = vld [vmem:[%s1422 + $0x3c] sm:$0xe]
        %v1861 = vld [vmem:[%s1422 + $0x48] sm:$0xe]
        %v1862 = vld [vmem:[%s1422 + $0x54] sm:$0xe]
        %v1863 = vld [vmem:[%s1422 + $0x60] sm:$0xe]
        %v1864 = vld [vmem:[%s1422 + $0x6c] sm:$0xe]
        %v1865 = vld [vmem:[%s1422 + $0x78] sm:$0xe]
        %v1866 = vld [vmem:[%s1422 + $0x84] sm:$0xe]
        %v1867 = vld [vmem:[%s1422 + $0x90] sm:$0xe]
        %v1868 = vld [vmem:[%s1422 + $0x9c] sm:$0xe]
        %v1869 = vld [vmem:[%s1422 + $0xa8] sm:$0xe]
        %v1870 = vld [vmem:[%s1422 + $0xb4] sm:$0xe]
        %v1919 = vrot.slane %v1855, 5
        %v1920 = vrot.slane %v1919, 4
        %v1921 = vrot.slane %v1424, 5
        %v1922 = vsel %vm700, %v1920, %v1921
        %v1923 = vrot.slane %v1921, 4
        %v1924 = vrot.slane %v1455, 5
        %v1925 = vsel %vm700, %v1923, %v1924
        %v1926 = vrot.slane %v1856, 5
        %v1927 = vrot.slane %v1926, 4
        %v1928 = vrot.slane %v1426, 5
        %v1929 = vsel %vm700, %v1927, %v1928
        %v1930 = vrot.slane %v1928, 4
        %v1931 = vrot.slane %v1456, 5
        %v1932 = vsel %vm700, %v1930, %v1931
        %v1933 = vrot.slane %v1857, 5
        %v1934 = vrot.slane %v1933, 4
        %v1935 = vrot.slane %v1428, 5
        %v1936 = vsel %vm700, %v1934, %v1935
        %v1937 = vrot.slane %v1935, 4
        %v1938 = vrot.slane %v1457, 5
        %v1939 = vsel %vm700, %v1937, %v1938
        %v1940 = vrot.slane %v1858, 5
        %v1941 = vrot.slane %v1940, 4
        %v1942 = vrot.slane %v1430, 5
        %v1943 = vsel %vm700, %v1941, %v1942
        %v1944 = vrot.slane %v1942, 4
        %v1945 = vrot.slane %v1458, 5
        %v1946 = vsel %vm700, %v1944, %v1945
        %v1947 = vrot.slane %v1859, 5
        %v1948 = vrot.slane %v1947, 4
        %v1949 = vrot.slane %v1432, 5
        %v1950 = vsel %vm700, %v1948, %v1949
        %v1951 = vrot.slane %v1949, 4
        %v1952 = vrot.slane %v1459, 5
        %v1953 = vsel %vm700, %v1951, %v1952
        %v1954 = vrot.slane %v1860, 5
        %v1955 = vrot.slane %v1954, 4
        %v1956 = vrot.slane %v1434, 5
        %v1957 = vsel %vm700, %v1955, %v1956
        %v1958 = vrot.slane %v1956, 4
        %v1959 = vrot.slane %v1460, 5
        %v1960 = vsel %vm700, %v1958, %v1959
        %v1961 = vrot.slane %v1861, 5
        %v1962 = vrot.slane %v1961, 4
        %v1963 = vrot.slane %v1436, 5
        %v1964 = vsel %vm700, %v1962, %v1963
        %v1965 = vrot.slane %v1963, 4
        %v1966 = vrot.slane %v1461, 5
        %v1967 = vsel %vm700, %v1965, %v1966
        %v1968 = vrot.slane %v1862, 5
        %v1969 = vrot.slane %v1968, 4
        %v1970 = vrot.slane %v1438, 5
        %v1971 = vsel %vm700, %v1969, %v1970
        %v1972 = vrot.slane %v1970, 4
        %v1973 = vrot.slane %v1462, 5
        %v1974 = vsel %vm700, %v1972, %v1973
        %v1975 = vrot.slane %v1863, 5
        %v1976 = vrot.slane %v1975, 4
        %v1977 = vrot.slane %v1440, 5
        %v1978 = vsel %vm700, %v1976, %v1977
        %v1979 = vrot.slane %v1977, 4
        %v1980 = vrot.slane %v1463, 5
        %v1981 = vsel %vm700, %v1979, %v1980
        %v1982 = vrot.slane %v1864, 5
        %v1983 = vrot.slane %v1982, 4
        %v1984 = vrot.slane %v1442, 5
        %v1985 = vsel %vm700, %v1983, %v1984
        %v1986 = vrot.slane %v1984, 4
        %v1987 = vrot.slane %v1464, 5
        %v1988 = vsel %vm700, %v1986, %v1987
        %v1989 = vrot.slane %v1865, 5
        %v1990 = vrot.slane %v1989, 4
        %v1991 = vrot.slane %v1444, 5
        %v1992 = vsel %vm700, %v1990, %v1991
        %v1993 = vrot.slane %v1991, 4
        %v1994 = vrot.slane %v1465, 5
        %v1995 = vsel %vm700, %v1993, %v1994
        %v1996 = vrot.slane %v1866, 5
        %v1997 = vrot.slane %v1996, 4
        %v1998 = vrot.slane %v1446, 5
        %v1999 = vsel %vm700, %v1997, %v1998
        %v2000 = vrot.slane %v1998, 4
        %v2001 = vrot.slane %v1466, 5
        %v2002 = vsel %vm700, %v2000, %v2001
        %v2003 = vrot.slane %v1867, 5
        %v2004 = vrot.slane %v2003, 4
        %v2005 = vrot.slane %v1448, 5
        %v2006 = vsel %vm700, %v2004, %v2005
        %v2007 = vrot.slane %v2005, 4
        %v2008 = vrot.slane %v1467, 5
        %v2009 = vsel %vm700, %v2007, %v2008
        %v2010 = vrot.slane %v1868, 5
        %v2011 = vrot.slane %v2010, 4
        %v2012 = vrot.slane %v1450, 5
        %v2013 = vsel %vm700, %v2011, %v2012
        %v2014 = vrot.slane %v2012, 4
        %v2015 = vrot.slane %v1468, 5
        %v2016 = vsel %vm700, %v2014, %v2015
        %v2017 = vrot.slane %v1869, 5
        %v2018 = vrot.slane %v2017, 4
        %v2019 = vrot.slane %v1452, 5
        %v2020 = vsel %vm700, %v2018, %v2019
        %v2021 = vrot.slane %v2019, 4
        %v2022 = vrot.slane %v1469, 5
        %v2023 = vsel %vm700, %v2021, %v2022
        %v2024 = vrot.slane %v1870, 5
        %v2025 = vrot.slane %v2024, 4
        %v2026 = vrot.slane %v1454, 5
        %v2027 = vsel %vm700, %v2025, %v2026
        %v2028 = vrot.slane %v2026, 4
        %v2029 = vrot.slane %v1470, 5
        %v2030 = vsel %vm700, %v2028, %v2029
        %v2047 = vunpack.c.l.b16 %v199
        %v2048 = vunpack.c.l.b16 %v200
        %v2049 = vunpack.c.l.b16 %v201
        %v2050 = vunpack.c.l.b16 %v202
        %v2051 = vunpack.c.l.b16 %v203
        %v2052 = vunpack.c.l.b16 %v204
        %v2053 = vunpack.c.l.b16 %v205
        %v2054 = vunpack.c.l.b16 %v206
        %v2055 = vunpack.c.l.b16 %v207
        %v2056 = vunpack.c.l.b16 %v208
        %v2057 = vunpack.c.l.b16 %v209
        %v2058 = vunpack.c.l.b16 %v210
        %v2059 = vunpack.c.l.b16 %v211
        %v2060 = vunpack.c.l.b16 %v212
        %v2061 = vunpack.c.l.b16 %v213
        %v2062 = vunpack.c.l.b16 %v214
        %v2063 = vunpack.c.l.b16 %v215
        %v2064 = vunpack.c.l.b16 %v216
        %v2065 = vunpack.c.l.b16 %v217
        %v2066 = vunpack.c.l.b16 %v218
        %v2067 = vunpack.c.l.b16 %v219
        %v2068 = vunpack.c.l.b16 %v220
        %v2069 = vunpack.c.l.b16 %v221
        %v2070 = vunpack.c.l.b16 %v222
        %v2071 = vunpack.c.l.b16 %v223
        %v2072 = vunpack.c.l.b16 %v224
        %v2073 = vunpack.c.l.b16 %v225
        %v2074 = vunpack.c.l.b16 %v226
        %v2075 = vunpack.c.l.b16 %v227
        %v2076 = vunpack.c.l.b16 %v228
        %v2077 = vunpack.c.l.b16 %v229
        %v2078 = vunpack.c.l.b16 %v230
        %v2079 = vpack.c.b16 %v2048, %v2047
        %v2080 = vpack.c.b16 %v2050, %v2049
        %v2081 = vpack.c.b16 %v2052, %v2051
        %v2082 = vpack.c.b16 %v2054, %v2053
        %v2083 = vpack.c.b16 %v2056, %v2055
        %v2084 = vpack.c.b16 %v2058, %v2057
        %v2085 = vpack.c.b16 %v2060, %v2059
        %v2086 = vpack.c.b16 %v2062, %v2061
        %v2087 = vpack.c.b16 %v2064, %v2063
        %v2088 = vpack.c.b16 %v2066, %v2065
        %v2089 = vpack.c.b16 %v2068, %v2067
        %v2090 = vpack.c.b16 %v2070, %v2069
        %v2091 = vpack.c.b16 %v2072, %v2071
        %v2092 = vpack.c.b16 %v2074, %v2073
        %v2093 = vpack.c.b16 %v2076, %v2075
        %v2094 = vpack.c.b16 %v2078, %v2077
        %v2095 = vunpack.c.l.b16 %v263
        %v2096 = vunpack.c.l.b16 %v273
        %v2097 = vunpack.c.l.b16 %v287
        %v2098 = vunpack.c.l.b16 %v297
        %v2099 = vunpack.c.l.b16 %v311
        %v2100 = vunpack.c.l.b16 %v321
        %v2101 = vunpack.c.l.b16 %v335
        %v2102 = vunpack.c.l.b16 %v345
        %v2103 = vunpack.c.l.b16 %v359
        %v2104 = vunpack.c.l.b16 %v369
        %v2105 = vunpack.c.l.b16 %v383
        %v2106 = vunpack.c.l.b16 %v393
        %v2107 = vunpack.c.l.b16 %v407
        %v2108 = vunpack.c.l.b16 %v417
        %v2109 = vunpack.c.l.b16 %v431
        %v2110 = vunpack.c.l.b16 %v441
        %v2111 = vunpack.c.l.b16 %v455
        %v2112 = vunpack.c.l.b16 %v465
        %v2113 = vunpack.c.l.b16 %v479
        %v2114 = vunpack.c.l.b16 %v489
        %v2115 = vunpack.c.l.b16 %v503
        %v2116 = vunpack.c.l.b16 %v513
        %v2117 = vunpack.c.l.b16 %v527
        %v2118 = vunpack.c.l.b16 %v537
        %v2119 = vunpack.c.l.b16 %v551
        %v2120 = vunpack.c.l.b16 %v561
        %v2121 = vunpack.c.l.b16 %v575
        %v2122 = vunpack.c.l.b16 %v585
        %v2123 = vunpack.c.l.b16 %v599
        %v2124 = vunpack.c.l.b16 %v609
        %v2125 = vunpack.c.l.b16 %v623
        %v2126 = vunpack.c.l.b16 %v633
        %v2127 = vpack.c.b16 %v2096, %v2095
        %v2128 = vpack.c.b16 %v2098, %v2097
        %v2129 = vpack.c.b16 %v2100, %v2099
        %v2130 = vpack.c.b16 %v2102, %v2101
        %v2131 = vpack.c.b16 %v2104, %v2103
        %v2132 = vpack.c.b16 %v2106, %v2105
        %v2133 = vpack.c.b16 %v2108, %v2107
        %v2134 = vpack.c.b16 %v2110, %v2109
        %v2135 = vpack.c.b16 %v2112, %v2111
        %v2136 = vpack.c.b16 %v2114, %v2113
        %v2137 = vpack.c.b16 %v2116, %v2115
        %v2138 = vpack.c.b16 %v2118, %v2117
        %v2139 = vpack.c.b16 %v2120, %v2119
        %v2140 = vpack.c.b16 %v2122, %v2121
        %v2141 = vpack.c.b16 %v2124, %v2123
        %v2142 = vpack.c.b16 %v2126, %v2125
        %2143 = vrot.lane.b32.xlu0 %v2127, 4
        %v2144 = vpop.permute.xlu0 %2143
        %2145 = vrot.lane.b32.xlu0 %v2128, 4
        %v2146 = vpop.permute.xlu0 %2145
        %2147 = vrot.lane.b32.xlu0 %v2129, 4
        %v2148 = vpop.permute.xlu0 %2147
        %2149 = vrot.lane.b32.xlu0 %v2130, 4
        %v2150 = vpop.permute.xlu0 %2149
        %2151 = vrot.lane.b32.xlu0 %v2131, 4
        %v2152 = vpop.permute.xlu0 %2151
        %2153 = vrot.lane.b32.xlu0 %v2132, 4
        %v2154 = vpop.permute.xlu0 %2153
        %2155 = vrot.lane.b32.xlu0 %v2133, 4
        %v2156 = vpop.permute.xlu0 %2155
        %2157 = vrot.lane.b32.xlu0 %v2134, 4
        %v2158 = vpop.permute.xlu0 %2157
        %2159 = vrot.lane.b32.xlu0 %v2135, 4
        %v2160 = vpop.permute.xlu0 %2159
        %2161 = vrot.lane.b32.xlu0 %v2136, 4
        %v2162 = vpop.permute.xlu0 %2161
        %2163 = vrot.lane.b32.xlu0 %v2137, 4
        %v2164 = vpop.permute.xlu0 %2163
        %2165 = vrot.lane.b32.xlu0 %v2138, 4
        %v2166 = vpop.permute.xlu0 %2165
        %2167 = vrot.lane.b32.xlu0 %v2139, 4
        %v2168 = vpop.permute.xlu0 %2167
        %2169 = vrot.lane.b32.xlu0 %v2140, 4
        %v2170 = vpop.permute.xlu0 %2169
        %2171 = vrot.lane.b32.xlu0 %v2141, 4
        %v2172 = vpop.permute.xlu0 %2171
        %2173 = vrot.lane.b32.xlu0 %v2142, 4
        %v2174 = vpop.permute.xlu0 %2173
        %v2175 = vunpack.c.l.b16 %v704
        %v2176 = vunpack.c.l.b16 %v707
        %v2177 = vunpack.c.l.b16 %v711
        %v2178 = vunpack.c.l.b16 %v714
        %v2179 = vunpack.c.l.b16 %v718
        %v2180 = vunpack.c.l.b16 %v721
        %v2181 = vunpack.c.l.b16 %v725
        %v2182 = vunpack.c.l.b16 %v728
        %v2183 = vunpack.c.l.b16 %v732
        %v2184 = vunpack.c.l.b16 %v735
        %v2185 = vunpack.c.l.b16 %v739
        %v2186 = vunpack.c.l.b16 %v742
        %v2187 = vunpack.c.l.b16 %v746
        %v2188 = vunpack.c.l.b16 %v749
        %v2189 = vunpack.c.l.b16 %v753
        %v2190 = vunpack.c.l.b16 %v756
        %v2191 = vunpack.c.l.b16 %v760
        %v2192 = vunpack.c.l.b16 %v763
        %v2193 = vunpack.c.l.b16 %v767
        %v2194 = vunpack.c.l.b16 %v770
        %v2195 = vunpack.c.l.b16 %v774
        %v2196 = vunpack.c.l.b16 %v777
        %v2197 = vunpack.c.l.b16 %v781
        %v2198 = vunpack.c.l.b16 %v784
        %v2199 = vunpack.c.l.b16 %v788
        %v2200 = vunpack.c.l.b16 %v791
        %v2201 = vunpack.c.l.b16 %v795
        %v2202 = vunpack.c.l.b16 %v798
        %v2203 = vunpack.c.l.b16 %v802
        %v2204 = vunpack.c.l.b16 %v805
        %v2205 = vunpack.c.l.b16 %v809
        %v2206 = vunpack.c.l.b16 %v812
        %v2207 = vpack.c.b16 %v2176, %v2175
        %v2208 = vpack.c.b16 %v2178, %v2177
        %v2209 = vpack.c.b16 %v2180, %v2179
        %v2210 = vpack.c.b16 %v2182, %v2181
        %v2211 = vpack.c.b16 %v2184, %v2183
        %v2212 = vpack.c.b16 %v2186, %v2185
        %v2213 = vpack.c.b16 %v2188, %v2187
        %v2214 = vpack.c.b16 %v2190, %v2189
        %v2215 = vpack.c.b16 %v2192, %v2191
        %v2216 = vpack.c.b16 %v2194, %v2193
        %v2217 = vpack.c.b16 %v2196, %v2195
        %v2218 = vpack.c.b16 %v2198, %v2197
        %v2219 = vpack.c.b16 %v2200, %v2199
        %v2220 = vpack.c.b16 %v2202, %v2201
        %v2221 = vpack.c.b16 %v2204, %v2203
        %v2222 = vpack.c.b16 %v2206, %v2205
        %2223 = vrot.lane.b32.xlu0 %v2207, 8
        %v2224 = vpop.permute.xlu0 %2223
        %2225 = vrot.lane.b32.xlu0 %v2208, 8
        %v2226 = vpop.permute.xlu0 %2225
        %2227 = vrot.lane.b32.xlu0 %v2209, 8
        %v2228 = vpop.permute.xlu0 %2227
        %2229 = vrot.lane.b32.xlu0 %v2210, 8
        %v2230 = vpop.permute.xlu0 %2229
        %2231 = vrot.lane.b32.xlu0 %v2211, 8
        %v2232 = vpop.permute.xlu0 %2231
        %2233 = vrot.lane.b32.xlu0 %v2212, 8
        %v2234 = vpop.permute.xlu0 %2233
        %2235 = vrot.lane.b32.xlu0 %v2213, 8
        %v2236 = vpop.permute.xlu0 %2235
        %2237 = vrot.lane.b32.xlu0 %v2214, 8
        %v2238 = vpop.permute.xlu0 %2237
        %2239 = vrot.lane.b32.xlu0 %v2215, 8
        %v2240 = vpop.permute.xlu0 %2239
        %2241 = vrot.lane.b32.xlu0 %v2216, 8
        %v2242 = vpop.permute.xlu0 %2241
        %2243 = vrot.lane.b32.xlu0 %v2217, 8
        %v2244 = vpop.permute.xlu0 %2243
        %2245 = vrot.lane.b32.xlu0 %v2218, 8
        %v2246 = vpop.permute.xlu0 %2245
        %2247 = vrot.lane.b32.xlu0 %v2219, 8
        %v2248 = vpop.permute.xlu0 %2247
        %2249 = vrot.lane.b32.xlu0 %v2220, 8
        %v2250 = vpop.permute.xlu0 %2249
        %2251 = vrot.lane.b32.xlu0 %v2221, 8
        %v2252 = vpop.permute.xlu0 %2251
        %2253 = vrot.lane.b32.xlu0 %v2222, 8
        %v2254 = vpop.permute.xlu0 %2253
        %v2271 = vunpack.c.l.b16 %v814
        %v2272 = vunpack.c.l.b16 %v815
        %v2273 = vunpack.c.l.b16 %v816
        %v2274 = vunpack.c.l.b16 %v817
        %v2275 = vunpack.c.l.b16 %v818
        %v2276 = vunpack.c.l.b16 %v819
        %v2277 = vunpack.c.l.b16 %v820
        %v2278 = vunpack.c.l.b16 %v821
        %v2279 = vunpack.c.l.b16 %v822
        %v2280 = vunpack.c.l.b16 %v823
        %v2281 = vunpack.c.l.b16 %v824
        %v2282 = vunpack.c.l.b16 %v825
        %v2283 = vunpack.c.l.b16 %v826
        %v2284 = vunpack.c.l.b16 %v827
        %v2285 = vunpack.c.l.b16 %v828
        %v2286 = vunpack.c.l.b16 %v829
        %v2287 = vunpack.c.l.b16 %v830
        %v2288 = vunpack.c.l.b16 %v831
        %v2289 = vunpack.c.l.b16 %v832
        %v2290 = vunpack.c.l.b16 %v833
        %v2291 = vunpack.c.l.b16 %v834
        %v2292 = vunpack.c.l.b16 %v835
        %v2293 = vunpack.c.l.b16 %v836
        %v2294 = vunpack.c.l.b16 %v837
        %v2295 = vunpack.c.l.b16 %v838
        %v2296 = vunpack.c.l.b16 %v839
        %v2297 = vunpack.c.l.b16 %v840
        %v2298 = vunpack.c.l.b16 %v841
        %v2299 = vunpack.c.l.b16 %v842
        %v2300 = vunpack.c.l.b16 %v843
        %v2301 = vunpack.c.l.b16 %v844
        %v2302 = vunpack.c.l.b16 %v845
        %v2303 = vpack.c.b16 %v2272, %v2271
        %v2304 = vpack.c.b16 %v2274, %v2273
        %v2305 = vpack.c.b16 %v2276, %v2275
        %v2306 = vpack.c.b16 %v2278, %v2277
        %v2307 = vpack.c.b16 %v2280, %v2279
        %v2308 = vpack.c.b16 %v2282, %v2281
        %v2309 = vpack.c.b16 %v2284, %v2283
        %v2310 = vpack.c.b16 %v2286, %v2285
        %v2311 = vpack.c.b16 %v2288, %v2287
        %v2312 = vpack.c.b16 %v2290, %v2289
        %v2313 = vpack.c.b16 %v2292, %v2291
        %v2314 = vpack.c.b16 %v2294, %v2293
        %v2315 = vpack.c.b16 %v2296, %v2295
        %v2316 = vpack.c.b16 %v2298, %v2297
        %v2317 = vpack.c.b16 %v2300, %v2299
        %v2318 = vpack.c.b16 %v2302, %v2301
        %2319 = vrot.lane.b32.xlu0 %v2303, 12
        %v2320 = vpop.permute.xlu0 %2319
        %2321 = vrot.lane.b32.xlu0 %v2304, 12
        %v2322 = vpop.permute.xlu0 %2321
        %2323 = vrot.lane.b32.xlu0 %v2305, 12
        %v2324 = vpop.permute.xlu0 %2323
        %2325 = vrot.lane.b32.xlu0 %v2306, 12
        %v2326 = vpop.permute.xlu0 %2325
        %2327 = vrot.lane.b32.xlu0 %v2307, 12
        %v2328 = vpop.permute.xlu0 %2327
        %2329 = vrot.lane.b32.xlu0 %v2308, 12
        %v2330 = vpop.permute.xlu0 %2329
        %2331 = vrot.lane.b32.xlu0 %v2309, 12
        %v2332 = vpop.permute.xlu0 %2331
        %2333 = vrot.lane.b32.xlu0 %v2310, 12
        %v2334 = vpop.permute.xlu0 %2333
        %2335 = vrot.lane.b32.xlu0 %v2311, 12
        %v2336 = vpop.permute.xlu0 %2335
        %2337 = vrot.lane.b32.xlu0 %v2312, 12
        %v2338 = vpop.permute.xlu0 %2337
        %2339 = vrot.lane.b32.xlu0 %v2313, 12
        %v2340 = vpop.permute.xlu0 %2339
        %2341 = vrot.lane.b32.xlu0 %v2314, 12
        %v2342 = vpop.permute.xlu0 %2341
        %2343 = vrot.lane.b32.xlu0 %v2315, 12
        %v2344 = vpop.permute.xlu0 %2343
        %2345 = vrot.lane.b32.xlu0 %v2316, 12
        %v2346 = vpop.permute.xlu0 %2345
        %2347 = vrot.lane.b32.xlu0 %v2317, 12
        %v2348 = vpop.permute.xlu0 %2347
        %2349 = vrot.lane.b32.xlu0 %v2318, 12
        %v2350 = vpop.permute.xlu0 %2349
        %v2351 = vunpack.c.l.b16 %v875
        %v2352 = vunpack.c.l.b16 %v885
        %v2353 = vunpack.c.l.b16 %v899
        %v2354 = vunpack.c.l.b16 %v909
        %v2355 = vunpack.c.l.b16 %v923
        %v2356 = vunpack.c.l.b16 %v933
        %v2357 = vunpack.c.l.b16 %v947
        %v2358 = vunpack.c.l.b16 %v957
        %v2359 = vunpack.c.l.b16 %v971
        %v2360 = vunpack.c.l.b16 %v981
        %v2361 = vunpack.c.l.b16 %v995
        %v2362 = vunpack.c.l.b16 %v1005
        %v2363 = vunpack.c.l.b16 %v1019
        %v2364 = vunpack.c.l.b16 %v1029
        %v2365 = vunpack.c.l.b16 %v1043
        %v2366 = vunpack.c.l.b16 %v1053
        %v2367 = vunpack.c.l.b16 %v1067
        %v2368 = vunpack.c.l.b16 %v1077
        %v2369 = vunpack.c.l.b16 %v1091
        %v2370 = vunpack.c.l.b16 %v1101
        %v2371 = vunpack.c.l.b16 %v1115
        %v2372 = vunpack.c.l.b16 %v1125
        %v2373 = vunpack.c.l.b16 %v1139
        %v2374 = vunpack.c.l.b16 %v1149
        %v2375 = vunpack.c.l.b16 %v1163
        %v2376 = vunpack.c.l.b16 %v1173
        %v2377 = vunpack.c.l.b16 %v1187
        %v2378 = vunpack.c.l.b16 %v1197
        %v2379 = vunpack.c.l.b16 %v1211
        %v2380 = vunpack.c.l.b16 %v1221
        %v2381 = vunpack.c.l.b16 %v1235
        %v2382 = vunpack.c.l.b16 %v1245
        %v2383 = vpack.c.b16 %v2352, %v2351
        %v2384 = vpack.c.b16 %v2354, %v2353
        %v2385 = vpack.c.b16 %v2356, %v2355
        %v2386 = vpack.c.b16 %v2358, %v2357
        %v2387 = vpack.c.b16 %v2360, %v2359
        %v2388 = vpack.c.b16 %v2362, %v2361
        %v2389 = vpack.c.b16 %v2364, %v2363
        %v2390 = vpack.c.b16 %v2366, %v2365
        %v2391 = vpack.c.b16 %v2368, %v2367
        %v2392 = vpack.c.b16 %v2370, %v2369
        %v2393 = vpack.c.b16 %v2372, %v2371
        %v2394 = vpack.c.b16 %v2374, %v2373
        %v2395 = vpack.c.b16 %v2376, %v2375
        %v2396 = vpack.c.b16 %v2378, %v2377
        %v2397 = vpack.c.b16 %v2380, %v2379
        %v2398 = vpack.c.b16 %v2382, %v2381
        %2399 = vrot.lane.b32.xlu0 %v2383, 16
        %v2400 = vpop.permute.xlu0 %2399
        %2401 = vrot.lane.b32.xlu0 %v2384, 16
        %v2402 = vpop.permute.xlu0 %2401
        %2403 = vrot.lane.b32.xlu0 %v2385, 16
        %v2404 = vpop.permute.xlu0 %2403
        %2405 = vrot.lane.b32.xlu0 %v2386, 16
        %v2406 = vpop.permute.xlu0 %2405
        %2407 = vrot.lane.b32.xlu0 %v2387, 16
        %v2408 = vpop.permute.xlu0 %2407
        %2409 = vrot.lane.b32.xlu0 %v2388, 16
        %v2410 = vpop.permute.xlu0 %2409
        %2411 = vrot.lane.b32.xlu0 %v2389, 16
        %v2412 = vpop.permute.xlu0 %2411
        %2413 = vrot.lane.b32.xlu0 %v2390, 16
        %v2414 = vpop.permute.xlu0 %2413
        %2415 = vrot.lane.b32.xlu0 %v2391, 16
        %v2416 = vpop.permute.xlu0 %2415
        %2417 = vrot.lane.b32.xlu0 %v2392, 16
        %v2418 = vpop.permute.xlu0 %2417
        %2419 = vrot.lane.b32.xlu0 %v2393, 16
        %v2420 = vpop.permute.xlu0 %2419
        %2421 = vrot.lane.b32.xlu0 %v2394, 16
        %v2422 = vpop.permute.xlu0 %2421
        %2423 = vrot.lane.b32.xlu0 %v2395, 16
        %v2424 = vpop.permute.xlu0 %2423
        %2425 = vrot.lane.b32.xlu0 %v2396, 16
        %v2426 = vpop.permute.xlu0 %2425
        %2427 = vrot.lane.b32.xlu0 %v2397, 16
        %v2428 = vpop.permute.xlu0 %2427
        %2429 = vrot.lane.b32.xlu0 %v2398, 16
        %v2430 = vpop.permute.xlu0 %2429
        %v2431 = vunpack.c.l.b16 %v1313
        %v2432 = vunpack.c.l.b16 %v1316
        %v2433 = vunpack.c.l.b16 %v1320
        %v2434 = vunpack.c.l.b16 %v1323
        %v2435 = vunpack.c.l.b16 %v1327
        %v2436 = vunpack.c.l.b16 %v1330
        %v2437 = vunpack.c.l.b16 %v1334
        %v2438 = vunpack.c.l.b16 %v1337
        %v2439 = vunpack.c.l.b16 %v1341
        %v2440 = vunpack.c.l.b16 %v1344
        %v2441 = vunpack.c.l.b16 %v1348
        %v2442 = vunpack.c.l.b16 %v1351
        %v2443 = vunpack.c.l.b16 %v1355
        %v2444 = vunpack.c.l.b16 %v1358
        %v2445 = vunpack.c.l.b16 %v1362
        %v2446 = vunpack.c.l.b16 %v1365
        %v2447 = vunpack.c.l.b16 %v1369
        %v2448 = vunpack.c.l.b16 %v1372
        %v2449 = vunpack.c.l.b16 %v1376
        %v2450 = vunpack.c.l.b16 %v1379
        %v2451 = vunpack.c.l.b16 %v1383
        %v2452 = vunpack.c.l.b16 %v1386
        %v2453 = vunpack.c.l.b16 %v1390
        %v2454 = vunpack.c.l.b16 %v1393
        %v2455 = vunpack.c.l.b16 %v1397
        %v2456 = vunpack.c.l.b16 %v1400
        %v2457 = vunpack.c.l.b16 %v1404
        %v2458 = vunpack.c.l.b16 %v1407
        %v2459 = vunpack.c.l.b16 %v1411
        %v2460 = vunpack.c.l.b16 %v1414
        %v2461 = vunpack.c.l.b16 %v1418
        %v2462 = vunpack.c.l.b16 %v1421
        %v2463 = vpack.c.b16 %v2432, %v2431
        %v2464 = vpack.c.b16 %v2434, %v2433
        %v2465 = vpack.c.b16 %v2436, %v2435
        %v2466 = vpack.c.b16 %v2438, %v2437
        %v2467 = vpack.c.b16 %v2440, %v2439
        %v2468 = vpack.c.b16 %v2442, %v2441
        %v2469 = vpack.c.b16 %v2444, %v2443
        %v2470 = vpack.c.b16 %v2446, %v2445
        %v2471 = vpack.c.b16 %v2448, %v2447
        %v2472 = vpack.c.b16 %v2450, %v2449
        %v2473 = vpack.c.b16 %v2452, %v2451
        %v2474 = vpack.c.b16 %v2454, %v2453
        %v2475 = vpack.c.b16 %v2456, %v2455
        %v2476 = vpack.c.b16 %v2458, %v2457
        %v2477 = vpack.c.b16 %v2460, %v2459
        %v2478 = vpack.c.b16 %v2462, %v2461
        %2479 = vrot.lane.b32.xlu0 %v2463, 20
        %v2480 = vpop.permute.xlu0 %2479
        %2481 = vrot.lane.b32.xlu0 %v2464, 20
        %v2482 = vpop.permute.xlu0 %2481
        %2483 = vrot.lane.b32.xlu0 %v2465, 20
        %v2484 = vpop.permute.xlu0 %2483
        %2485 = vrot.lane.b32.xlu0 %v2466, 20
        %v2486 = vpop.permute.xlu0 %2485
        %2487 = vrot.lane.b32.xlu0 %v2467, 20
        %v2488 = vpop.permute.xlu0 %2487
        %2489 = vrot.lane.b32.xlu0 %v2468, 20
        %v2490 = vpop.permute.xlu0 %2489
        %2491 = vrot.lane.b32.xlu0 %v2469, 20
        %v2492 = vpop.permute.xlu0 %2491
        %2493 = vrot.lane.b32.xlu0 %v2470, 20
        %v2494 = vpop.permute.xlu0 %2493
        %2495 = vrot.lane.b32.xlu0 %v2471, 20
        %v2496 = vpop.permute.xlu0 %2495
        %2497 = vrot.lane.b32.xlu0 %v2472, 20
        %v2498 = vpop.permute.xlu0 %2497
        %2499 = vrot.lane.b32.xlu0 %v2473, 20
        %v2500 = vpop.permute.xlu0 %2499
        %2501 = vrot.lane.b32.xlu0 %v2474, 20
        %v2502 = vpop.permute.xlu0 %2501
        %2503 = vrot.lane.b32.xlu0 %v2475, 20
        %v2504 = vpop.permute.xlu0 %2503
        %2505 = vrot.lane.b32.xlu0 %v2476, 20
        %v2506 = vpop.permute.xlu0 %2505
        %2507 = vrot.lane.b32.xlu0 %v2477, 20
        %v2508 = vpop.permute.xlu0 %2507
        %2509 = vrot.lane.b32.xlu0 %v2478, 20
        %v2510 = vpop.permute.xlu0 %2509
        %v2527 = vunpack.c.l.b16 %v1423
        %v2528 = vunpack.c.l.b16 %v1424
        %v2529 = vunpack.c.l.b16 %v1425
        %v2530 = vunpack.c.l.b16 %v1426
        %v2531 = vunpack.c.l.b16 %v1427
        %v2532 = vunpack.c.l.b16 %v1428
        %v2533 = vunpack.c.l.b16 %v1429
        %v2534 = vunpack.c.l.b16 %v1430
        %v2535 = vunpack.c.l.b16 %v1431
        %v2536 = vunpack.c.l.b16 %v1432
        %v2537 = vunpack.c.l.b16 %v1433
        %v2538 = vunpack.c.l.b16 %v1434
        %v2539 = vunpack.c.l.b16 %v1435
        %v2540 = vunpack.c.l.b16 %v1436
        %v2541 = vunpack.c.l.b16 %v1437
        %v2542 = vunpack.c.l.b16 %v1438
        %v2543 = vunpack.c.l.b16 %v1439
        %v2544 = vunpack.c.l.b16 %v1440
        %v2545 = vunpack.c.l.b16 %v1441
        %v2546 = vunpack.c.l.b16 %v1442
        %v2547 = vunpack.c.l.b16 %v1443
        %v2548 = vunpack.c.l.b16 %v1444
        %v2549 = vunpack.c.l.b16 %v1445
        %v2550 = vunpack.c.l.b16 %v1446
        %v2551 = vunpack.c.l.b16 %v1447
        %v2552 = vunpack.c.l.b16 %v1448
        %v2553 = vunpack.c.l.b16 %v1449
        %v2554 = vunpack.c.l.b16 %v1450
        %v2555 = vunpack.c.l.b16 %v1451
        %v2556 = vunpack.c.l.b16 %v1452
        %v2557 = vunpack.c.l.b16 %v1453
        %v2558 = vunpack.c.l.b16 %v1454
        %v2559 = vpack.c.b16 %v2528, %v2527
        %v2560 = vpack.c.b16 %v2530, %v2529
        %v2561 = vpack.c.b16 %v2532, %v2531
        %v2562 = vpack.c.b16 %v2534, %v2533
        %v2563 = vpack.c.b16 %v2536, %v2535
        %v2564 = vpack.c.b16 %v2538, %v2537
        %v2565 = vpack.c.b16 %v2540, %v2539
        %v2566 = vpack.c.b16 %v2542, %v2541
        %v2567 = vpack.c.b16 %v2544, %v2543
        %v2568 = vpack.c.b16 %v2546, %v2545
        %v2569 = vpack.c.b16 %v2548, %v2547
        %v2570 = vpack.c.b16 %v2550, %v2549
        %v2571 = vpack.c.b16 %v2552, %v2551
        %v2572 = vpack.c.b16 %v2554, %v2553
        %v2573 = vpack.c.b16 %v2556, %v2555
        %v2574 = vpack.c.b16 %v2558, %v2557
        %2575 = vrot.lane.b32.xlu0 %v2559, 24
        %v2576 = vpop.permute.xlu0 %2575
        %2577 = vrot.lane.b32.xlu0 %v2560, 24
        %v2578 = vpop.permute.xlu0 %2577
        %2579 = vrot.lane.b32.xlu0 %v2561, 24
        %v2580 = vpop.permute.xlu0 %2579
        %2581 = vrot.lane.b32.xlu0 %v2562, 24
        %v2582 = vpop.permute.xlu0 %2581
        %2583 = vrot.lane.b32.xlu0 %v2563, 24
        %v2584 = vpop.permute.xlu0 %2583
        %2585 = vrot.lane.b32.xlu0 %v2564, 24
        %v2586 = vpop.permute.xlu0 %2585
        %2587 = vrot.lane.b32.xlu0 %v2565, 24
        %v2588 = vpop.permute.xlu0 %2587
        %2589 = vrot.lane.b32.xlu0 %v2566, 24
        %v2590 = vpop.permute.xlu0 %2589
        %2591 = vrot.lane.b32.xlu0 %v2567, 24
        %v2592 = vpop.permute.xlu0 %2591
        %2593 = vrot.lane.b32.xlu0 %v2568, 24
        %v2594 = vpop.permute.xlu0 %2593
        %2595 = vrot.lane.b32.xlu0 %v2569, 24
        %v2596 = vpop.permute.xlu0 %2595
        %2597 = vrot.lane.b32.xlu0 %v2570, 24
        %v2598 = vpop.permute.xlu0 %2597
        %2599 = vrot.lane.b32.xlu0 %v2571, 24
        %v2600 = vpop.permute.xlu0 %2599
        %2601 = vrot.lane.b32.xlu0 %v2572, 24
        %v2602 = vpop.permute.xlu0 %2601
        %2603 = vrot.lane.b32.xlu0 %v2573, 24
        %v2604 = vpop.permute.xlu0 %2603
        %2605 = vrot.lane.b32.xlu0 %v2574, 24
        %v2606 = vpop.permute.xlu0 %2605
        %v2607 = vunpack.c.l.b16 %v1484
        %v2608 = vunpack.c.l.b16 %v1494
        %v2609 = vunpack.c.l.b16 %v1508
        %v2610 = vunpack.c.l.b16 %v1518
        %v2611 = vunpack.c.l.b16 %v1532
        %v2612 = vunpack.c.l.b16 %v1542
        %v2613 = vunpack.c.l.b16 %v1556
        %v2614 = vunpack.c.l.b16 %v1566
        %v2615 = vunpack.c.l.b16 %v1580
        %v2616 = vunpack.c.l.b16 %v1590
        %v2617 = vunpack.c.l.b16 %v1604
        %v2618 = vunpack.c.l.b16 %v1614
        %v2619 = vunpack.c.l.b16 %v1628
        %v2620 = vunpack.c.l.b16 %v1638
        %v2621 = vunpack.c.l.b16 %v1652
        %v2622 = vunpack.c.l.b16 %v1662
        %v2623 = vunpack.c.l.b16 %v1676
        %v2624 = vunpack.c.l.b16 %v1686
        %v2625 = vunpack.c.l.b16 %v1700
        %v2626 = vunpack.c.l.b16 %v1710
        %v2627 = vunpack.c.l.b16 %v1724
        %v2628 = vunpack.c.l.b16 %v1734
        %v2629 = vunpack.c.l.b16 %v1748
        %v2630 = vunpack.c.l.b16 %v1758
        %v2631 = vunpack.c.l.b16 %v1772
        %v2632 = vunpack.c.l.b16 %v1782
        %v2633 = vunpack.c.l.b16 %v1796
        %v2634 = vunpack.c.l.b16 %v1806
        %v2635 = vunpack.c.l.b16 %v1820
        %v2636 = vunpack.c.l.b16 %v1830
        %v2637 = vunpack.c.l.b16 %v1844
        %v2638 = vunpack.c.l.b16 %v1854
        %v2639 = vpack.c.b16 %v2608, %v2607
        %v2640 = vpack.c.b16 %v2610, %v2609
        %v2641 = vpack.c.b16 %v2612, %v2611
        %v2642 = vpack.c.b16 %v2614, %v2613
        %v2643 = vpack.c.b16 %v2616, %v2615
        %v2644 = vpack.c.b16 %v2618, %v2617
        %v2645 = vpack.c.b16 %v2620, %v2619
        %v2646 = vpack.c.b16 %v2622, %v2621
        %v2647 = vpack.c.b16 %v2624, %v2623
        %v2648 = vpack.c.b16 %v2626, %v2625
        %v2649 = vpack.c.b16 %v2628, %v2627
        %v2650 = vpack.c.b16 %v2630, %v2629
        %v2651 = vpack.c.b16 %v2632, %v2631
        %v2652 = vpack.c.b16 %v2634, %v2633
        %v2653 = vpack.c.b16 %v2636, %v2635
        %v2654 = vpack.c.b16 %v2638, %v2637
        %2655 = vrot.lane.b32.xlu0 %v2639, 28
        %v2656 = vpop.permute.xlu0 %2655
        %2657 = vrot.lane.b32.xlu0 %v2640, 28
        %v2658 = vpop.permute.xlu0 %2657
        %2659 = vrot.lane.b32.xlu0 %v2641, 28
        %v2660 = vpop.permute.xlu0 %2659
        %2661 = vrot.lane.b32.xlu0 %v2642, 28
        %v2662 = vpop.permute.xlu0 %2661
        %2663 = vrot.lane.b32.xlu0 %v2643, 28
        %v2664 = vpop.permute.xlu0 %2663
        %2665 = vrot.lane.b32.xlu0 %v2644, 28
        %v2666 = vpop.permute.xlu0 %2665
        %2667 = vrot.lane.b32.xlu0 %v2645, 28
        %v2668 = vpop.permute.xlu0 %2667
        %2669 = vrot.lane.b32.xlu0 %v2646, 28
        %v2670 = vpop.permute.xlu0 %2669
        %2671 = vrot.lane.b32.xlu0 %v2647, 28
        %v2672 = vpop.permute.xlu0 %2671
        %2673 = vrot.lane.b32.xlu0 %v2648, 28
        %v2674 = vpop.permute.xlu0 %2673
        %2675 = vrot.lane.b32.xlu0 %v2649, 28
        %v2676 = vpop.permute.xlu0 %2675
        %2677 = vrot.lane.b32.xlu0 %v2650, 28
        %v2678 = vpop.permute.xlu0 %2677
        %2679 = vrot.lane.b32.xlu0 %v2651, 28
        %v2680 = vpop.permute.xlu0 %2679
        %2681 = vrot.lane.b32.xlu0 %v2652, 28
        %v2682 = vpop.permute.xlu0 %2681
        %2683 = vrot.lane.b32.xlu0 %v2653, 28
        %v2684 = vpop.permute.xlu0 %2683
        %2685 = vrot.lane.b32.xlu0 %v2654, 28
        %v2686 = vpop.permute.xlu0 %2685
        %v2687 = vunpack.c.l.b16 %v1922
        %v2688 = vunpack.c.l.b16 %v1925
        %v2689 = vunpack.c.l.b16 %v1929
        %v2690 = vunpack.c.l.b16 %v1932
        %v2691 = vunpack.c.l.b16 %v1936
        %v2692 = vunpack.c.l.b16 %v1939
        %v2693 = vunpack.c.l.b16 %v1943
        %v2694 = vunpack.c.l.b16 %v1946
        %v2695 = vunpack.c.l.b16 %v1950
        %v2696 = vunpack.c.l.b16 %v1953
        %v2697 = vunpack.c.l.b16 %v1957
        %v2698 = vunpack.c.l.b16 %v1960
        %v2699 = vunpack.c.l.b16 %v1964
        %v2700 = vunpack.c.l.b16 %v1967
        %v2701 = vunpack.c.l.b16 %v1971
        %v2702 = vunpack.c.l.b16 %v1974
        %v2703 = vunpack.c.l.b16 %v1978
        %v2704 = vunpack.c.l.b16 %v1981
        %v2705 = vunpack.c.l.b16 %v1985
        %v2706 = vunpack.c.l.b16 %v1988
        %v2707 = vunpack.c.l.b16 %v1992
        %v2708 = vunpack.c.l.b16 %v1995
        %v2709 = vunpack.c.l.b16 %v1999
        %v2710 = vunpack.c.l.b16 %v2002
        %v2711 = vunpack.c.l.b16 %v2006
        %v2712 = vunpack.c.l.b16 %v2009
        %v2713 = vunpack.c.l.b16 %v2013
        %v2714 = vunpack.c.l.b16 %v2016
        %v2715 = vunpack.c.l.b16 %v2020
        %v2716 = vunpack.c.l.b16 %v2023
        %v2717 = vunpack.c.l.b16 %v2027
        %v2718 = vunpack.c.l.b16 %v2030
        %v2719 = vpack.c.b16 %v2688, %v2687
        %v2720 = vpack.c.b16 %v2690, %v2689
        %v2721 = vpack.c.b16 %v2692, %v2691
        %v2722 = vpack.c.b16 %v2694, %v2693
        %v2723 = vpack.c.b16 %v2696, %v2695
        %v2724 = vpack.c.b16 %v2698, %v2697
        %v2725 = vpack.c.b16 %v2700, %v2699
        %v2726 = vpack.c.b16 %v2702, %v2701
        %v2727 = vpack.c.b16 %v2704, %v2703
        %v2728 = vpack.c.b16 %v2706, %v2705
        %v2729 = vpack.c.b16 %v2708, %v2707
        %v2730 = vpack.c.b16 %v2710, %v2709
        %v2731 = vpack.c.b16 %v2712, %v2711
        %v2732 = vpack.c.b16 %v2714, %v2713
        %v2733 = vpack.c.b16 %v2716, %v2715
        %v2734 = vpack.c.b16 %v2718, %v2717
        %2735 = vrot.lane.b32.xlu0 %v2719, 32
        %v2736 = vpop.permute.xlu0 %2735
        %2737 = vrot.lane.b32.xlu0 %v2720, 32
        %v2738 = vpop.permute.xlu0 %2737
        %2739 = vrot.lane.b32.xlu0 %v2721, 32
        %v2740 = vpop.permute.xlu0 %2739
        %2741 = vrot.lane.b32.xlu0 %v2722, 32
        %v2742 = vpop.permute.xlu0 %2741
        %2743 = vrot.lane.b32.xlu0 %v2723, 32
        %v2744 = vpop.permute.xlu0 %2743
        %2745 = vrot.lane.b32.xlu0 %v2724, 32
        %v2746 = vpop.permute.xlu0 %2745
        %2747 = vrot.lane.b32.xlu0 %v2725, 32
        %v2748 = vpop.permute.xlu0 %2747
        %2749 = vrot.lane.b32.xlu0 %v2726, 32
        %v2750 = vpop.permute.xlu0 %2749
        %2751 = vrot.lane.b32.xlu0 %v2727, 32
        %v2752 = vpop.permute.xlu0 %2751
        %2753 = vrot.lane.b32.xlu0 %v2728, 32
        %v2754 = vpop.permute.xlu0 %2753
        %2755 = vrot.lane.b32.xlu0 %v2729, 32
        %v2756 = vpop.permute.xlu0 %2755
        %2757 = vrot.lane.b32.xlu0 %v2730, 32
        %v2758 = vpop.permute.xlu0 %2757
        %2759 = vrot.lane.b32.xlu0 %v2731, 32
        %v2760 = vpop.permute.xlu0 %2759
        %2761 = vrot.lane.b32.xlu0 %v2732, 32
        %v2762 = vpop.permute.xlu0 %2761
        %2763 = vrot.lane.b32.xlu0 %v2733, 32
        %v2764 = vpop.permute.xlu0 %2763
        %2765 = vrot.lane.b32.xlu0 %v2734, 32
        %v2766 = vpop.permute.xlu0 %2765
        %vm2767 = vcmask 31744
        %v2770 = vsel %vm2767, %v2079, %v2144
        %v2773 = vsel %vm2767, %v2080, %v2146
        %v2776 = vsel %vm2767, %v2081, %v2148
        %v2779 = vsel %vm2767, %v2082, %v2150
        %v2782 = vsel %vm2767, %v2083, %v2152
        %v2785 = vsel %vm2767, %v2084, %v2154
        %v2788 = vsel %vm2767, %v2085, %v2156
        %v2791 = vsel %vm2767, %v2086, %v2158
        %v2794 = vsel %vm2767, %v2087, %v2160
        %v2797 = vsel %vm2767, %v2088, %v2162
        %v2800 = vsel %vm2767, %v2089, %v2164
        %v2803 = vsel %vm2767, %v2090, %v2166
        %v2806 = vsel %vm2767, %v2091, %v2168
        %v2809 = vsel %vm2767, %v2092, %v2170
        %v2812 = vsel %vm2767, %v2093, %v2172
        %v2815 = vsel %vm2767, %v2094, %v2174
        %vm2816 = vcmask 64512
        %v2818 = vsel %vm2816, %v2770, %v2224
        %v2820 = vsel %vm2816, %v2773, %v2226
        %v2822 = vsel %vm2816, %v2776, %v2228
        %v2824 = vsel %vm2816, %v2779, %v2230
        %v2826 = vsel %vm2816, %v2782, %v2232
        %v2828 = vsel %vm2816, %v2785, %v2234
        %v2830 = vsel %vm2816, %v2788, %v2236
        %v2832 = vsel %vm2816, %v2791, %v2238
        %v2834 = vsel %vm2816, %v2794, %v2240
        %v2836 = vsel %vm2816, %v2797, %v2242
        %v2838 = vsel %vm2816, %v2800, %v2244
        %v2840 = vsel %vm2816, %v2803, %v2246
        %v2842 = vsel %vm2816, %v2806, %v2248
        %v2844 = vsel %vm2816, %v2809, %v2250
        %v2846 = vsel %vm2816, %v2812, %v2252
        %v2848 = vsel %vm2816, %v2815, %v2254
        %vm2849 = vcmask 97280
        %v2851 = vsel %vm2849, %v2818, %v2320
        %v2853 = vsel %vm2849, %v2820, %v2322
        %v2855 = vsel %vm2849, %v2822, %v2324
        %v2857 = vsel %vm2849, %v2824, %v2326
        %v2859 = vsel %vm2849, %v2826, %v2328
        %v2861 = vsel %vm2849, %v2828, %v2330
        %v2863 = vsel %vm2849, %v2830, %v2332
        %v2865 = vsel %vm2849, %v2832, %v2334
        %v2867 = vsel %vm2849, %v2834, %v2336
        %v2869 = vsel %vm2849, %v2836, %v2338
        %v2871 = vsel %vm2849, %v2838, %v2340
        %v2873 = vsel %vm2849, %v2840, %v2342
        %v2875 = vsel %vm2849, %v2842, %v2344
        %v2877 = vsel %vm2849, %v2844, %v2346
        %v2879 = vsel %vm2849, %v2846, %v2348
        %v2881 = vsel %vm2849, %v2848, %v2350
        %vm2882 = vcmask 130048
        %v2884 = vsel %vm2882, %v2851, %v2400
        %v2886 = vsel %vm2882, %v2853, %v2402
        %v2888 = vsel %vm2882, %v2855, %v2404
        %v2890 = vsel %vm2882, %v2857, %v2406
        %v2892 = vsel %vm2882, %v2859, %v2408
        %v2894 = vsel %vm2882, %v2861, %v2410
        %v2896 = vsel %vm2882, %v2863, %v2412
        %v2898 = vsel %vm2882, %v2865, %v2414
        %v2900 = vsel %vm2882, %v2867, %v2416
        %v2902 = vsel %vm2882, %v2869, %v2418
        %v2904 = vsel %vm2882, %v2871, %v2420
        %v2906 = vsel %vm2882, %v2873, %v2422
        %v2908 = vsel %vm2882, %v2875, %v2424
        %v2910 = vsel %vm2882, %v2877, %v2426
        %v2912 = vsel %vm2882, %v2879, %v2428
        %v2914 = vsel %vm2882, %v2881, %v2430
        %vm2915 = vcmask 162816
        %v2917 = vsel %vm2915, %v2884, %v2480
        %v2919 = vsel %vm2915, %v2886, %v2482
        %v2921 = vsel %vm2915, %v2888, %v2484
        %v2923 = vsel %vm2915, %v2890, %v2486
        %v2925 = vsel %vm2915, %v2892, %v2488
        %v2927 = vsel %vm2915, %v2894, %v2490
        %v2929 = vsel %vm2915, %v2896, %v2492
        %v2931 = vsel %vm2915, %v2898, %v2494
        %v2933 = vsel %vm2915, %v2900, %v2496
        %v2935 = vsel %vm2915, %v2902, %v2498
        %v2937 = vsel %vm2915, %v2904, %v2500
        %v2939 = vsel %vm2915, %v2906, %v2502
        %v2941 = vsel %vm2915, %v2908, %v2504
        %v2943 = vsel %vm2915, %v2910, %v2506
        %v2945 = vsel %vm2915, %v2912, %v2508
        %v2947 = vsel %vm2915, %v2914, %v2510
        %vm2948 = vcmask 195584
        %v2950 = vsel %vm2948, %v2917, %v2576
        %v2952 = vsel %vm2948, %v2919, %v2578
        %v2954 = vsel %vm2948, %v2921, %v2580
        %v2956 = vsel %vm2948, %v2923, %v2582
        %v2958 = vsel %vm2948, %v2925, %v2584
        %v2960 = vsel %vm2948, %v2927, %v2586
        %v2962 = vsel %vm2948, %v2929, %v2588
        %v2964 = vsel %vm2948, %v2931, %v2590
        %v2966 = vsel %vm2948, %v2933, %v2592
        %v2968 = vsel %vm2948, %v2935, %v2594
        %v2970 = vsel %vm2948, %v2937, %v2596
        %v2972 = vsel %vm2948, %v2939, %v2598
        %v2974 = vsel %vm2948, %v2941, %v2600
        %v2976 = vsel %vm2948, %v2943, %v2602
        %v2978 = vsel %vm2948, %v2945, %v2604
        %v2980 = vsel %vm2948, %v2947, %v2606
        %vm2981 = vcmask 228352
        %v2983 = vsel %vm2981, %v2950, %v2656
        %v2985 = vsel %vm2981, %v2952, %v2658
        %v2987 = vsel %vm2981, %v2954, %v2660
        %v2989 = vsel %vm2981, %v2956, %v2662
        %v2991 = vsel %vm2981, %v2958, %v2664
        %v2993 = vsel %vm2981, %v2960, %v2666
        %v2995 = vsel %vm2981, %v2962, %v2668
        %v2997 = vsel %vm2981, %v2964, %v2670
        %v2999 = vsel %vm2981, %v2966, %v2672
        %v3001 = vsel %vm2981, %v2968, %v2674
        %v3003 = vsel %vm2981, %v2970, %v2676
        %v3005 = vsel %vm2981, %v2972, %v2678
        %v3007 = vsel %vm2981, %v2974, %v2680
        %v3009 = vsel %vm2981, %v2976, %v2682
        %v3011 = vsel %vm2981, %v2978, %v2684
        %v3013 = vsel %vm2981, %v2980, %v2686
        %vm3014 = vcmask 261120
        %v3016 = vsel %vm3014, %v2983, %v2736
        %v3018 = vsel %vm3014, %v2985, %v2738
        %v3020 = vsel %vm3014, %v2987, %v2740
        %v3022 = vsel %vm3014, %v2989, %v2742
        %v3024 = vsel %vm3014, %v2991, %v2744
        %v3026 = vsel %vm3014, %v2993, %v2746
        %v3028 = vsel %vm3014, %v2995, %v2748
        %v3030 = vsel %vm3014, %v2997, %v2750
        %v3032 = vsel %vm3014, %v2999, %v2752
        %v3034 = vsel %vm3014, %v3001, %v2754
        %v3036 = vsel %vm3014, %v3003, %v2756
        %v3038 = vsel %vm3014, %v3005, %v2758
        %v3040 = vsel %vm3014, %v3007, %v2760
        %v3042 = vsel %vm3014, %v3009, %v2762
        %v3044 = vsel %vm3014, %v3011, %v2764
        %v3046 = vsel %vm3014, %v3013, %v2766
        %v3047 = vld [vmem:[%s1] sm:$0xf]
        %v3048 = vld [vmem:[%s1 + $0x4] sm:$0xf]
        %v3049 = vld [vmem:[%s1 + $0x8] sm:$0xf]
        %v3050 = vld [vmem:[%s1 + $0xc] sm:$0xf]
        %v3051 = vld [vmem:[%s1 + $0x10] sm:$0x3]
        %v3052 = vld [vmem:[%s2] sm:$0x1]
        %v3054 = vlaneseq
        %v3055 = vshrl.u32 %v3054, 7
        %v3056 = vsub.s32 0, %v3055
        %v3057 = vrot.slane %v3052, %v3056
        %v3064 = vunpack.c.l.b16 %v3047
        %v3065 = vunpack.c.l.b16 %v3048
        %v3066 = vunpack.c.l.b16 %v3049
        %v3067 = vunpack.c.l.b16 %v3050
        %v3068 = vunpack.c.l.b16 %v3051
        %v3069 = vpack.c.b16 %v3065, %v3064
        %v3070 = vpack.c.b16 %v3067, %v3066
        %v3071 = vpack.c.b16 %v3068, %v3068
        %vm3074 = vcmask 293888
        %v3075 = vsel %vm3074, %v3016, 0
        %v3077 = vsel %vm3074, %v3018, 0
        %v3079 = vsel %vm3074, %v3020, 0
        %v3081 = vsel %vm3074, %v3022, 0
        %v3083 = vsel %vm3074, %v3024, 0
        %v3085 = vsel %vm3074, %v3026, 0
        %v3087 = vsel %vm3074, %v3028, 0
        %v3089 = vsel %vm3074, %v3030, 0
        %v3091 = vsel %vm3074, %v3032, 0
        %v3093 = vsel %vm3074, %v3034, 0
        %v3095 = vsel %vm3074, %v3036, 0
        %v3097 = vsel %vm3074, %v3038, 0
        %v3099 = vsel %vm3074, %v3040, 0
        %v3101 = vsel %vm3074, %v3042, 0
        %v3103 = vsel %vm3074, %v3044, 0
        %v3105 = vsel %vm3074, %v3046, 0
        %vm3107 = vcmask 1041408
        %v3109 = vsel %vm3107, %v3071, 0
        %3111 = vmatprep.subr.bf16.mxu0 0
        %3112 = vmatpush1.bf16.msra.mxu0 %v3069
        %3113 = vmatprep.subr.bf16.mxu0 0
        %3114 = vmatpush1.bf16.msra.mxu0 %v3070
        %3115 = vmatprep.subr.bf16.mxu0 0
        %3116 = vmatpush1.bf16.msra.mxu0 %v3109
        %3117 = vmatprep.subr.bf16.mxu0 0
        %3118 = vmatpush1.bf16.msra.mxu0 0
        %3119 = vmatprep.subr.bf16.mxu0 0
        %3120 = vmatpush1.bf16.msra.mxu0 0
        %3121 = vmatprep.subr.bf16.mxu0 0
        %3122 = vmatpush1.bf16.msra.mxu0 0
        %3123 = vmatprep.subr.bf16.mxu0 0
        %3124 = vmatpush1.bf16.msra.mxu0 0
        %3125 = vmatprep.subr.bf16.mxu0 0
        %3126 = vmatpush1.bf16.msra.mxu0 0
        %3127 = vmatprep.subr.bf16.mxu0 0
        %3128 = vmatpush1.bf16.msra.mxu0 0
        %3129 = vmatprep.subr.bf16.mxu0 0
        %3130 = vmatpush1.bf16.msra.mxu0 0
        %3131 = vmatprep.subr.bf16.mxu0 0
        %3132 = vmatpush1.bf16.msra.mxu0 0
        %3133 = vmatprep.subr.bf16.mxu0 0
        %3134 = vmatpush1.bf16.msra.mxu0 0
        %3135 = vmatprep.subr.bf16.mxu0 0
        %3136 = vmatpush1.bf16.msra.mxu0 0
        %3137 = vmatprep.subr.bf16.mxu0 0
        %3138 = vmatpush1.bf16.msra.mxu0 0
        %3139 = vmatprep.subr.bf16.mxu0 0
        %3140 = vmatpush1.bf16.msra.mxu0 0
        %3141 = vmatprep.subr.bf16.mxu0 0
        %3142 = vmatpush1.bf16.msra.mxu0 0
        %3143 = vmatprep.mubr.bf16.mxu0 0
        %3144 = vmatmul.mubr.bf16.gmra.mrb[0].mxu0 %v3075
        %v3145 = vpop.f32.mrb[0].mxu0
        %v3146 = vadd.f32 %v3057, %v3145
        %v3147 = vpop.f32.mrb[0].mxu0
        %v3148 = vpop.f32.mrb[0].mxu0
        %v3149 = vadd.f32 %v3057, %v3148
        %v3150 = vpop.f32.mrb[0].mxu0
        %3151 = vmatprep.mubr.bf16.mxu0 0
        %3152 = vmatmul.mubr.bf16.gmra.mrb[0].mxu0 %v3077
        %v3153 = vpop.f32.mrb[0].mxu0
        %v3154 = vadd.f32 %v3057, %v3153
        %v3155 = vpop.f32.mrb[0].mxu0
        %v3156 = vpop.f32.mrb[0].mxu0
        %v3157 = vadd.f32 %v3057, %v3156
        %v3158 = vpop.f32.mrb[0].mxu0
        %3159 = vmatprep.mubr.bf16.mxu0 0
        %3160 = vmatmul.mubr.bf16.gmra.mrb[0].mxu0 %v3079
        %v3161 = vpop.f32.mrb[0].mxu0
        %v3162 = vadd.f32 %v3057, %v3161
        %v3163 = vpop.f32.mrb[0].mxu0
        %v3164 = vpop.f32.mrb[0].mxu0
        %v3165 = vadd.f32 %v3057, %v3164
        %v3166 = vpop.f32.mrb[0].mxu0
        %3167 = vmatprep.mubr.bf16.mxu0 0
        %3168 = vmatmul.mubr.bf16.gmra.mrb[0].mxu0 %v3081
        %v3169 = vpop.f32.mrb[0].mxu0
        %v3170 = vadd.f32 %v3057, %v3169
        %v3171 = vpop.f32.mrb[0].mxu0
        %v3172 = vpop.f32.mrb[0].mxu0
        %v3173 = vadd.f32 %v3057, %v3172
        %v3174 = vpop.f32.mrb[0].mxu0
        %3175 = vmatprep.mubr.bf16.mxu0 0
        %3176 = vmatmul.mubr.bf16.gmra.mrb[0].mxu0 %v3083
        %v3177 = vpop.f32.mrb[0].mxu0
        %v3178 = vadd.f32 %v3057, %v3177
        %v3179 = vpop.f32.mrb[0].mxu0
        %v3180 = vpop.f32.mrb[0].mxu0
        %v3181 = vadd.f32 %v3057, %v3180
        %v3182 = vpop.f32.mrb[0].mxu0
        %3183 = vmatprep.mubr.bf16.mxu0 0
        %3184 = vmatmul.mubr.bf16.gmra.mrb[0].mxu0 %v3085
        %v3185 = vpop.f32.mrb[0].mxu0
        %v3186 = vadd.f32 %v3057, %v3185
        %v3187 = vpop.f32.mrb[0].mxu0
        %v3188 = vpop.f32.mrb[0].mxu0
        %v3189 = vadd.f32 %v3057, %v3188
        %v3190 = vpop.f32.mrb[0].mxu0
        %3191 = vmatprep.mubr.bf16.mxu0 0
        %3192 = vmatmul.mubr.bf16.gmra.mrb[0].mxu0 %v3087
        %v3193 = vpop.f32.mrb[0].mxu0
        %v3194 = vadd.f32 %v3057, %v3193
        %v3195 = vpop.f32.mrb[0].mxu0
        %v3196 = vpop.f32.mrb[0].mxu0
        %v3197 = vadd.f32 %v3057, %v3196
        %v3198 = vpop.f32.mrb[0].mxu0
        %3199 = vmatprep.mubr.bf16.mxu0 0
        %3200 = vmatmul.mubr.bf16.gmra.mrb[0].mxu0 %v3089
        %v3201 = vpop.f32.mrb[0].mxu0
        %v3202 = vadd.f32 %v3057, %v3201
        %v3203 = vpop.f32.mrb[0].mxu0
        %v3204 = vpop.f32.mrb[0].mxu0
        %v3205 = vadd.f32 %v3057, %v3204
        %v3206 = vpop.f32.mrb[0].mxu0
        %3207 = vmatprep.mubr.bf16.mxu0 0
        %3208 = vmatmul.mubr.bf16.gmra.mrb[0].mxu0 %v3091
        %v3209 = vpop.f32.mrb[0].mxu0
        %v3210 = vadd.f32 %v3057, %v3209
        %v3211 = vpop.f32.mrb[0].mxu0
        %v3212 = vpop.f32.mrb[0].mxu0
        %v3213 = vadd.f32 %v3057, %v3212
        %v3214 = vpop.f32.mrb[0].mxu0
        %3215 = vmatprep.mubr.bf16.mxu0 0
        %3216 = vmatmul.mubr.bf16.gmra.mrb[0].mxu0 %v3093
        %v3217 = vpop.f32.mrb[0].mxu0
        %v3218 = vadd.f32 %v3057, %v3217
        %v3219 = vpop.f32.mrb[0].mxu0
        %v3220 = vpop.f32.mrb[0].mxu0
        %v3221 = vadd.f32 %v3057, %v3220
        %v3222 = vpop.f32.mrb[0].mxu0
        %3223 = vmatprep.mubr.bf16.mxu0 0
        %3224 = vmatmul.mubr.bf16.gmra.mrb[0].mxu0 %v3095
        %v3225 = vpop.f32.mrb[0].mxu0
        %v3226 = vadd.f32 %v3057, %v3225
        %v3227 = vpop.f32.mrb[0].mxu0
        %v3228 = vpop.f32.mrb[0].mxu0
        %v3229 = vadd.f32 %v3057, %v3228
        %v3230 = vpop.f32.mrb[0].mxu0
        %3231 = vmatprep.mubr.bf16.mxu0 0
        %3232 = vmatmul.mubr.bf16.gmra.mrb[0].mxu0 %v3097
        %v3233 = vpop.f32.mrb[0].mxu0
        %v3234 = vadd.f32 %v3057, %v3233
        %v3235 = vpop.f32.mrb[0].mxu0
        %v3236 = vpop.f32.mrb[0].mxu0
        %v3237 = vadd.f32 %v3057, %v3236
        %v3238 = vpop.f32.mrb[0].mxu0
        %3239 = vmatprep.mubr.bf16.mxu0 0
        %3240 = vmatmul.mubr.bf16.gmra.mrb[0].mxu0 %v3099
        %v3241 = vpop.f32.mrb[0].mxu0
        %v3242 = vadd.f32 %v3057, %v3241
        %v3243 = vpop.f32.mrb[0].mxu0
        %v3244 = vpop.f32.mrb[0].mxu0
        %v3245 = vadd.f32 %v3057, %v3244
        %v3246 = vpop.f32.mrb[0].mxu0
        %3247 = vmatprep.mubr.bf16.mxu0 0
        %3248 = vmatmul.mubr.bf16.gmra.mrb[0].mxu0 %v3101
        %v3249 = vpop.f32.mrb[0].mxu0
        %v3250 = vadd.f32 %v3057, %v3249
        %v3251 = vpop.f32.mrb[0].mxu0
        %v3252 = vpop.f32.mrb[0].mxu0
        %v3253 = vadd.f32 %v3057, %v3252
        %v3254 = vpop.f32.mrb[0].mxu0
        %3255 = vmatprep.mubr.bf16.mxu0 0
        %3256 = vmatmul.mubr.bf16.gmra.mrb[0].mxu0 %v3103
        %v3257 = vpop.f32.mrb[0].mxu0
        %v3258 = vadd.f32 %v3057, %v3257
        %v3259 = vpop.f32.mrb[0].mxu0
        %v3260 = vpop.f32.mrb[0].mxu0
        %v3261 = vadd.f32 %v3057, %v3260
        %v3262 = vpop.f32.mrb[0].mxu0
        %3263 = vmatprep.mubr.bf16.mxu0 0
        %3264 = vmatmul.mubr.bf16.gmra.mrb[0].mxu0 %v3105
        %v3265 = vpop.f32.mrb[0].mxu0
        %v3266 = vadd.f32 %v3057, %v3265
        %v3267 = vpop.f32.mrb[0].mxu0
        %v3268 = vpop.f32.mrb[0].mxu0
        %v3269 = vadd.f32 %v3057, %v3268
        %v3270 = vpop.f32.mrb[0].mxu0
        %3271 = vdwg.mxu0
        %3272 = vxpose.xlu0.b32.start [1/16] %v3146, 128
        %3273 = vxpose.xlu0.b32.cont [2/16] %v3149, 128
        %3274 = vxpose.xlu0.b32.cont [3/16] %v3154, 128
        %3275 = vxpose.xlu0.b32.cont [4/16] %v3157, 128
        %3276 = vxpose.xlu0.b32.cont [5/16] %v3162, 128
        %3277 = vxpose.xlu0.b32.cont [6/16] %v3165, 128
        %3278 = vxpose.xlu0.b32.cont [7/16] %v3170, 128
        %3279 = vxpose.xlu0.b32.cont [8/16] %v3173, 128
        %3280 = vxpose.xlu0.b32.cont [9/16] %v3178, 128
        %3281 = vxpose.xlu0.b32.cont [10/16] %v3181, 128
        %3282 = vxpose.xlu0.b32.cont [11/16] %v3186, 128
        %3283 = vxpose.xlu0.b32.cont [12/16] %v3189, 128
        %3284 = vxpose.xlu0.b32.cont [13/16] %v3194, 128
        %3285 = vxpose.xlu0.b32.cont [14/16] %v3197, 128
        %3286 = vxpose.xlu0.b32.cont [15/16] %v3202, 128
        %3287 = vxpose.xlu0.b32.end [16/16] %v3205, 128
        %v3288 = vpop.trf.xlu0
        %v3289 = vpop.trf.xlu0
        %v3290 = vpop.trf.xlu0
        %v3291 = vpop.trf.xlu0
        %v3292 = vpop.trf.xlu0
        %v3293 = vpop.trf.xlu0
        %v3294 = vpop.trf.xlu0
        %v3295 = vpop.trf.xlu0
        %v3296 = vpop.trf.xlu0
        %v3297 = vpop.trf.xlu0
        %v3298 = vpop.trf.xlu0
        %v3299 = vpop.trf.xlu0
        %v3300 = vpop.trf.xlu0
        %v3301 = vpop.trf.xlu0
        %v3302 = vpop.trf.xlu0
        %v3303 = vpop.trf.xlu0
        %3304 = vxpose.xlu0.b32.start [1/16] %v3210, 128
        %3305 = vxpose.xlu0.b32.cont [2/16] %v3213, 128
        %3306 = vxpose.xlu0.b32.cont [3/16] %v3218, 128
        %3307 = vxpose.xlu0.b32.cont [4/16] %v3221, 128
        %3308 = vxpose.xlu0.b32.cont [5/16] %v3226, 128
        %3309 = vxpose.xlu0.b32.cont [6/16] %v3229, 128
        %3310 = vxpose.xlu0.b32.cont [7/16] %v3234, 128
        %3311 = vxpose.xlu0.b32.cont [8/16] %v3237, 128
        %3312 = vxpose.xlu0.b32.cont [9/16] %v3242, 128
        %3313 = vxpose.xlu0.b32.cont [10/16] %v3245, 128
        %3314 = vxpose.xlu0.b32.cont [11/16] %v3250, 128
        %3315 = vxpose.xlu0.b32.cont [12/16] %v3253, 128
        %3316 = vxpose.xlu0.b32.cont [13/16] %v3258, 128
        %3317 = vxpose.xlu0.b32.cont [14/16] %v3261, 128
        %3318 = vxpose.xlu0.b32.cont [15/16] %v3266, 128
        %3319 = vxpose.xlu0.b32.end [16/16] %v3269, 128
        %v3320 = vpop.trf.xlu0
        %v3321 = vpop.trf.xlu0
        %v3322 = vpop.trf.xlu0
        %v3323 = vpop.trf.xlu0
        %v3324 = vpop.trf.xlu0
        %v3325 = vpop.trf.xlu0
        %v3326 = vpop.trf.xlu0
        %v3327 = vpop.trf.xlu0
        %v3328 = vpop.trf.xlu0
        %v3329 = vpop.trf.xlu0
        %v3330 = vpop.trf.xlu0
        %v3331 = vpop.trf.xlu0
        %v3332 = vpop.trf.xlu0
        %v3333 = vpop.trf.xlu0
        %v3334 = vpop.trf.xlu0
        %v3335 = vpop.trf.xlu0
        %3336 = vst [vmem:[%s187] sm:$0xff] %v3288
        %3337 = vst [vmem:[%s187 + $0x8] sm:$0xff] %v3320
        %s3338 = sand.u32 %s109, 1
        %s3339 = scalar_lea.sflag [#allocation3], %s3338
        %s3340 = sand.u32 %s109, 1
        %s3341 = smul.addr %s3340, 16
        %s3342 = scalar_lea.vmem [#allocation2], %s3341
        // Predicated region
        $region33: #{tpu_custom_call.1} parent=31 // pred_check
          %p3343 = pneg %p119
        $region34: #{tpu_custom_call.1} parent=31 // pred_check_branch
          %3345 = sbr.rel (%p3343) target = $region36
        $region35: #{tpu_custom_call.1} parent=31 // pred_region
          %s3346 = smul.u32 2, %s22
          %s3348 = ssub.s32 256, 256
          %3349 = vsyncadd %s3339, %s3348
          %s3350 = smul.addr %s21, 2
          %s3351 = sadd.s32 %s3346, %s3350
          %s3352 = smul.addr %s3351, 128
          %s3353 = scalar_lea.hbm %s3, %s3352
          %s3355 = sshll.u32 %s3342, 4
          %s3356 = int_to_ptr.vmem [resolvable:$true] %s3355
          %3358 = dma.vmem_to_hbm [thread:$0]  %s3356, 256, %s3353, %s3339
        $region36: #{tpu_custom_call.1} parent=31 // pred_fallthru
          _
      $region32: #{tpu_custom_call.1} parent=5 // pred_fallthru
        _
      %p3359 = scmp.le.s32.totalorder 2, %s12
      // Predicated region
      $region37: #{tpu_custom_call.1} parent=5 // pred_check
        %p3360 = pneg %p3359
      $region38: #{tpu_custom_call.1} parent=5 // pred_check_branch
        %3362 = sbr.rel (%p3360) target = $region40
      $region39: #{tpu_custom_call.1} parent=5 // pred_region
        %s3363 = ssub.s32 %s12, 2
        // Predicated region
        $region41: #{tpu_custom_call.1} parent=39 // pred_check
          %p3364 = pneg %p125
        $region42: #{tpu_custom_call.1} parent=39 // pred_check_branch
          %3366 = sbr.rel (%p3364) target = $region44
        $region43: #{tpu_custom_call.1} parent=39 // pred_region
          %s3367 = sand.u32 %s110, 1
          %s3368 = scalar_lea.sflag [#allocation3], %s3367
          %s3369 = sand.u32 %s110, 1
          %s3370 = smul.addr %s3369, 16
          %s3371 = scalar_lea.vmem [#allocation2], %s3370
          %3372 = dma.done %s3368, 256
        $region44: #{tpu_custom_call.1} parent=39 // pred_fallthru
          _
      $region40: #{tpu_custom_call.1} parent=5 // pred_fallthru
        _
    $region6: #{tpu_custom_call.1} parent=1 // loop_footer
      %s16 = sadd.s32 1, %s12
    $region7: #{tpu_custom_call.1} parent=1 // loop_footer_branch
      %11 = sbr.rel target = $region3
    $region8: #{tpu_custom_call.1} parent=1 // loop_exit
      _
    %3373 = vsyncpa [#allocation3], 1
    %s3374 = scalar_lea.sflag [#allocation3], 1
    %3375 = vsyncpa %s3374, 1

</llo_original>
